<compile_context>
chip_gen: v7x
topology: tpu7x:2x2x1
jax: 0.10.0
libtpu: 0.0.40
codegen_flags: <defaults>
</compile_context>

<pallas_src>
import functools
import math

import jax
import jax.numpy as jnp
from jax.experimental import pallas as pl
from jax.experimental.pallas import tpu as pltpu

F32 = jnp.float32
BF16 = jnp.bfloat16

GLOBAL_PARAMS = ["w_stem_s", "w_stem_a", "ln1_g", "ln1_b", "w_stem1",
                 "ln2_g", "ln2_b", "pos", "lnf_g", "lnf_b"]
LAYER_PARAMS = ["wqkv", "wo", "lna_g", "lna_b",
                "wf1", "bf1", "wf2", "bf2", "lnff_g", "lnff_b"]
_MATMUL_WEIGHTS = {"w_stem_s", "w_stem_a", "w_stem1", "wqkv", "wo", "wf1", "wf2"}


def _layer_norm(x, gamma, beta, eps):
    mean = jnp.mean(x, axis=-1, keepdims=True)
    var = jnp.mean(jnp.square(x - mean), axis=-1, keepdims=True)
    return (x - mean) * jax.lax.rsqrt(var + eps) * gamma + beta


def _mask_bias(mask):
    """(L, L) additive attention bias: 0 where attend, -1e9 where masked."""
    mask2d = mask if mask.ndim == 2 else mask[0]   # batch-shared (causal) mask
    return jnp.where(mask2d > 0, 0.0, -1e9).astype(F32)


def prepare_params(raw_params, stoch_dim, num_heads):
    """Split stem weight, fuse Q/K/V (scale folded into wq), cast to bf16."""
    p = dict(raw_params)
    w0 = jnp.asarray(p.pop("w_stem0"), F32)
    p["w_stem_s"] = w0[:stoch_dim]
    p["w_stem_a"] = w0[stoch_dim:]
    wq = jnp.asarray(p.pop("wq"), F32)
    wk = jnp.asarray(p.pop("wk"), F32)
    wv = jnp.asarray(p.pop("wv"), F32)
    dk = wq.shape[-1] // num_heads
    # fold 1/sqrt(dk) into wq, fuse q/k/v into one (nl, F, 3F) weight
    p["wqkv"] = jnp.concatenate([wq / math.sqrt(dk), wk, wv], axis=-1)
    out = {}
    for name in GLOBAL_PARAMS + LAYER_PARAMS:
        a = jnp.asarray(p[name])
        out[name] = a.astype(BF16) if name in _MATMUL_WEIGHTS else a.astype(F32)
    return out


def _kernel(samples_ref, action_ref, bias_ref, *rest, num_heads, bb, seq_len):
    ng, nlp = len(GLOBAL_PARAMS), len(LAYER_PARAMS)
    g = dict(zip(GLOBAL_PARAMS, rest[:ng]))
    w = dict(zip(LAYER_PARAMS, rest[ng:ng + nlp]))
    out_ref, h_ref, attn_buf = rest[ng + nlp:]

    L = seq_len
    N = bb * L
    F_ = h_ref.shape[-1]
    H = num_heads
    dk = F_ // H
    layer = pl.program_id(1)

    # ---- stem + positional encoding + pre-stack LN (layer 0 only) ----------
    @pl.when(layer == 0)
    def _stem():
        xs = samples_ref[...].reshape(N, -1).astype(BF16)
        xa = action_ref[...].reshape(N, -1).astype(BF16)
        # TODO(synk): for large S/A fuse these two dots into one K=S+A matmul.
        h = jnp.dot(xs, g["w_stem_s"][...], preferred_element_type=F32)
        h = h + jnp.dot(xa, g["w_stem_a"][...], preferred_element_type=F32)
        h = _layer_norm(h, g["ln1_g"][...], g["ln1_b"][...], 1e-5)
        h = jnp.maximum(h, 0.0)
        h = jnp.dot(h.astype(BF16), g["w_stem1"][...], preferred_element_type=F32)
        h = _layer_norm(h, g["ln2_g"][...], g["ln2_b"][...], 1e-5)
        h = (h.reshape(bb, L, F_) + g["pos"][...]).reshape(N, F_)
        h_ref[...] = _layer_norm(h, g["lnf_g"][...], g["lnf_b"][...], 1e-6)

    # ---- one transformer layer (weights streamed via the layer grid axis) --
    h = h_ref[...]
    hb = h.astype(BF16)
    qkv = jnp.dot(hb, w["wqkv"][...], preferred_element_type=F32)   # (N, 3F)
    qkv = qkv.reshape(bb, L, 3 * F_)

    def gather_heads(base):
        # lane slices -> heads stacked on the (major) batch axis: (H*bb, L, dk)
        parts = [qkv[:, :, base + hh * dk: base + (hh + 1) * dk]
                 for hh in range(H)]
        return jnp.concatenate(parts, axis=0).astype(BF16)

    q = gather_heads(0)
    k = gather_heads(F_)
    v = gather_heads(2 * F_)

    # scores; the 1/sqrt(dk) scale is already folded into wq
    s = jnp.einsum("bld,bmd->blm", q, k, preferred_element_type=F32)
    s = s + bias_ref[...][None, :, :]
    s = s - jnp.max(s, axis=-1, keepdims=True)
    pr = jnp.exp(s)
    pr = pr * pl.reciprocal(jnp.sum(pr, axis=-1, keepdims=True), approx=True)
    o = jnp.einsum("blm,bmd->bld", pr.astype(BF16), v,
                   preferred_element_type=F32)                       # (H*bb,L,dk)

    # scatter heads back to a lane-contiguous bf16 slab (static lane slices)
    for hh in range(H):
        attn_buf[:, hh * dk:(hh + 1) * dk] = (
            o[hh * bb:(hh + 1) * bb].reshape(N, dk).astype(BF16))

    attn = jnp.dot(attn_buf[...], w["wo"][...], preferred_element_type=F32)
    h = _layer_norm(attn + h, w["lna_g"][...], w["lna_b"][...], 1e-6)

    f = jnp.dot(h.astype(BF16), w["wf1"][...],
                preferred_element_type=F32) + w["bf1"][...]
    f = jnp.maximum(f, 0.0)
    f = jnp.dot(f.astype(BF16), w["wf2"][...],
                preferred_element_type=F32) + w["bf2"][...]
    h = _layer_norm(f + h, w["lnff_g"][...], w["lnff_b"][...], 1e-6)
    h_ref[...] = h

    @pl.when(layer == pl.num_programs(1) - 1)
    def _write():
        out_ref[...] = h.reshape(bb, L, F_)


def stochastic_transformer_forward(samples, action, mask, params, num_heads):
    B, L, S = samples.shape
    A = action.shape[-1]
    F_ = params["w_stem1"].shape[-1]
    nl = params["wqkv"].shape[0]
    hidden = params["wf1"].shape[-1]

    bias = _mask_bias(mask)
    pos_l = params["pos"][:L]                      # slice pos table at call time

    # fold batch into the token dim: up to ~256 rows per grid step
    cap = max(1, 256 // L)
    bb = min(B, cap)
    nb = pl.cdiv(B, bb)
    b_pad = nb * bb
    if b_pad != B:                                 # pad tail block (rows discarded)
        samples = jnp.pad(samples, ((0, b_pad - B), (0, 0), (0, 0)))
        action = jnp.pad(action, ((0, b_pad - B), (0, 0), (0, 0)))

    global_arrays = [pos_l if n == "pos" else params[n] for n in GLOBAL_PARAMS]
    layer_arrays = [params[n] for n in LAYER_PARAMS]

    in_specs = [
        pl.BlockSpec((bb, L, S), lambda b, l: (b, 0, 0)),
        pl.BlockSpec((bb, L, A), lambda b, l: (b, 0, 0)),
        pl.BlockSpec((L, L), lambda b, l: (0, 0), pipeline_mode=pl.Buffered(1)),
    ]
    for a in global_arrays:                        # constant blocks: single buffer
        in_specs.append(pl.BlockSpec(
            a.shape, (lambda b, l, n=a.ndim: (0,) * n),
            pipeline_mode=pl.Buffered(1)))
    for a in layer_arrays:                         # streamed per layer grid step
        in_specs.append(pl.BlockSpec(
            (None,) + a.shape[1:],
            (lambda b, l, n=a.ndim: (l,) + (0,) * (n - 1))))
    out_spec = pl.BlockSpec((bb, L, F_), lambda b, l: (b, 0, 0))

    def nbytes(a):
        return int(math.prod(a.shape)) * a.dtype.itemsize

    # VMEM budget: activations/out double-buffered, globals single, layer x2
    footprint = (2 * bb * L * (S + A) * 4
                 + nbytes(bias) + sum(nbytes(a) for a in global_arrays)
                 + 2 * sum(nbytes(a) // a.shape[0] for a in layer_arrays)
                 + 2 * bb * L * F_ * 4
                 + bb * L * F_ * (4 + 2))
    vmem_limit = int(min(100 * 2 ** 20, max(32 * 2 ** 20, 2 * footprint)))

    # advisory cost estimate
    tokens = b_pad * L
    dk = F_ // num_heads
    flops = 2 * tokens * ((S + A) * F_ + F_ * F_)
    flops += nl * 2 * tokens * (4 * F_ * F_ + 2 * F_ * hidden)
    flops += nl * 4 * b_pad * num_heads * L * L * dk
    transcendentals = nl * b_pad * num_heads * L * L
    bytes_accessed = (sum(nbytes(a) for a in global_arrays)
                      + nb * sum(nbytes(a) for a in layer_arrays)
                      + tokens * (S + A + F_) * 4 + L * L * 4)
    cost = pl.CostEstimate(flops=int(flops),
                           transcendentals=int(transcendentals),
                           bytes_accessed=int(bytes_accessed))

    kern = functools.partial(_kernel, num_heads=num_heads, bb=bb, seq_len=L)
    out = pl.pallas_call(
        kern,
        out_shape=jax.ShapeDtypeStruct((b_pad, L, F_), jnp.float32),
        grid_spec=pltpu.PrefetchScalarGridSpec(
            num_scalar_prefetch=0,
            grid=(nb, nl),
            in_specs=in_specs,
            out_specs=out_spec,
            scratch_shapes=[pltpu.VMEM((bb * L, F_), F32),    # residual stream
                            pltpu.VMEM((bb * L, F_), BF16)],  # head-output slab
        ),
        compiler_params=pltpu.CompilerParams(
            dimension_semantics=("parallel", "arbitrary"),
            vmem_limit_bytes=vmem_limit,
        ),
        cost_estimate=cost,
    )(samples.astype(F32), action.astype(F32), bias, *global_arrays,
      *layer_arrays)
    return out[:B]


def _reference_forward(samples, action, mask, params, num_heads):
    """Pure-JAX reference with the same math (exact softmax division)."""
    B, L, S = samples.shape
    N = B * L
    F_ = params["w_stem1"].shape[-1]
    H = num_heads
    dk = F_ // H
    bias = _mask_bias(mask)

    xs = samples.reshape(N, S).astype(BF16)
    xa = action.reshape(N, -1).astype(BF16)
    h = jnp.dot(xs, params["w_stem_s"], preferred_element_type=F32)
    h = h + jnp.dot(xa, params["w_stem_a"], preferred_element_type=F32)
    h = _layer_norm(h, params["ln1_g"], params["ln1_b"], 1e-5)
    h = jnp.maximum(h, 0.0)
    h = jnp.dot(h.astype(BF16), params["w_stem1"], preferred_element_type=F32)
    h = _layer_norm(h, params["ln2_g"], params["ln2_b"], 1e-5)
    h = (h.reshape(B, L, F_) + params["pos"][:L]).reshape(N, F_)
    h = _layer_norm(h, params["lnf_g"], params["lnf_b"], 1e-6)

    nl = params["wqkv"].shape[0]
    for l in range(nl):
        qkv = jnp.dot(h.astype(BF16), params["wqkv"][l],
                      preferred_element_type=F32).reshape(B, L, 3, H, dk)
        q = qkv[:, :, 0].transpose(0, 2, 1, 3).astype(BF16)
        k = qkv[:, :, 1].transpose(0, 2, 1, 3).astype(BF16)
        v = qkv[:, :, 2].transpose(0, 2, 1, 3).astype(BF16)
        s = jnp.einsum("bhld,bhmd->bhlm", q, k, preferred_element_type=F32)
        s = s + bias[None, None]
        s = s - jnp.max(s, axis=-1, keepdims=True)
        pr = jnp.exp(s)
        pr = pr / jnp.sum(pr, axis=-1, keepdims=True)
        o = jnp.einsum("bhlm,bhmd->bhld", pr.astype(BF16), v,
                       preferred_element_type=F32)
        o = o.transpose(0, 2, 1, 3).reshape(N, F_).astype(BF16)
        attn = jnp.dot(o, params["wo"][l], preferred_element_type=F32)
        h = _layer_norm(attn + h, params["lna_g"][l], params["lna_b"][l], 1e-6)
        f = jnp.dot(h.astype(BF16), params["wf1"][l],
                    preferred_element_type=F32) + params["bf1"][l]
        f = jnp.maximum(f, 0.0)
        f = jnp.dot(f.astype(BF16), params["wf2"][l],
                    preferred_element_type=F32) + params["bf2"][l]
        h = _layer_norm(f + h, params["lnff_g"][l], params["lnff_b"][l], 1e-6)
    return h.reshape(B, L, F_)


if __name__ == "__main__":
    # small shapes consistent with the module's __init__ / forward
    B, L = 2, 8
    stoch_dim, action_dim, feat_dim = 32, 16, 64
    num_layers, num_heads, max_length = 2, 2, 16
    hidden_dim = feat_dim * 2  # AttentionBlockKVCache hidden_dim = feat_dim * 2

    key = jax.random.PRNGKey(0)
    ks = iter(jax.random.split(key, 32))

    def nrm(k, shape, scale=0.05):
        return (scale * jax.random.normal(k, shape)).astype(jnp.float32)

    raw_params = {
        # Linear weights stored as (in_dim, out_dim), i.e. y = x @ W
        "w_stem0": nrm(next(ks), (stoch_dim + action_dim, feat_dim)),
        "ln1_g": jnp.ones((1, feat_dim), jnp.float32),
        "ln1_b": jnp.zeros((1, feat_dim), jnp.float32),
        "w_stem1": nrm(next(ks), (feat_dim, feat_dim)),
        "ln2_g": jnp.ones((1, feat_dim), jnp.float32),
        "ln2_b": jnp.zeros((1, feat_dim), jnp.float32),
        # learned positional embedding table, kept full and sliced at call time
        "pos": nrm(next(ks), (max_length, feat_dim)),
        "lnf_g": jnp.ones((1, feat_dim), jnp.float32),
        "lnf_b": jnp.zeros((1, feat_dim), jnp.float32),
        # per-layer attention weights (stacked over layers)
        "wq": nrm(next(ks), (num_layers, feat_dim, feat_dim)),
        "wk": nrm(next(ks), (num_layers, feat_dim, feat_dim)),
        "wv": nrm(next(ks), (num_layers, feat_dim, feat_dim)),
        "wo": nrm(next(ks), (num_layers, feat_dim, feat_dim)),
        "lna_g": jnp.ones((num_layers, 1, feat_dim), jnp.float32),
        "lna_b": jnp.zeros((num_layers, 1, feat_dim), jnp.float32),
        # per-layer feed-forward weights
        "wf1": nrm(next(ks), (num_layers, feat_dim, hidden_dim)),
        "bf1": nrm(next(ks), (num_layers, 1, hidden_dim)),
        "wf2": nrm(next(ks), (num_layers, hidden_dim, feat_dim)),
        "bf2": nrm(next(ks), (num_layers, 1, feat_dim)),
        "lnff_g": jnp.ones((num_layers, 1, feat_dim), jnp.float32),
        "lnff_b": jnp.zeros((num_layers, 1, feat_dim), jnp.float32),
    }
    params = prepare_params(raw_params, stoch_dim, num_heads)

    samples = jax.random.normal(next(ks), (B, L, stoch_dim), dtype=jnp.float32)
    action = jax.random.normal(next(ks), (B, L, action_dim), dtype=jnp.float32)
    # causal attention mask (1 = attend, 0 = masked -> -1e9), shared over batch
    mask = jnp.tril(jnp.ones((L, L), jnp.float32))

    out = jax.block_until_ready(
        stochastic_transformer_forward(samples, action, mask, params, num_heads)
    )

    ref = _reference_forward(samples, action, mask, params, num_heads)

    assert out.shape == (B, L, feat_dim)
    assert bool(jnp.allclose(out, ref, atol=2e-2, rtol=2e-2)), "mismatch vs reference"
    print("KERNEL_OK")
</pallas_src>

<mosaic_0001>
module attributes {stable_mosaic.version = 11 : i64} {
  func.func @_kernel(%arg0: i32, %arg1: i32, %arg2: memref<2x8x32xf32, #tpu.memory_space<vmem>>, %arg3: memref<2x8x16xf32, #tpu.memory_space<vmem>>, %arg4: memref<8x8xf32, #tpu.memory_space<vmem>>, %arg5: memref<32x64xbf16, #tpu.memory_space<vmem>>, %arg6: memref<16x64xbf16, #tpu.memory_space<vmem>>, %arg7: memref<1x64xf32, #tpu.memory_space<vmem>>, %arg8: memref<1x64xf32, #tpu.memory_space<vmem>>, %arg9: memref<64x64xbf16, #tpu.memory_space<vmem>>, %arg10: memref<1x64xf32, #tpu.memory_space<vmem>>, %arg11: memref<1x64xf32, #tpu.memory_space<vmem>>, %arg12: memref<8x64xf32, #tpu.memory_space<vmem>>, %arg13: memref<1x64xf32, #tpu.memory_space<vmem>>, %arg14: memref<1x64xf32, #tpu.memory_space<vmem>>, %arg15: memref<1x64x192xbf16, #tpu.memory_space<vmem>>, %arg16: memref<1x64x64xbf16, #tpu.memory_space<vmem>>, %arg17: memref<1x1x64xf32, #tpu.memory_space<vmem>>, %arg18: memref<1x1x64xf32, #tpu.memory_space<vmem>>, %arg19: memref<1x64x128xbf16, #tpu.memory_space<vmem>>, %arg20: memref<1x1x128xf32, #tpu.memory_space<vmem>>, %arg21: memref<1x128x64xbf16, #tpu.memory_space<vmem>>, %arg22: memref<1x1x64xf32, #tpu.memory_space<vmem>>, %arg23: memref<1x1x64xf32, #tpu.memory_space<vmem>>, %arg24: memref<1x1x64xf32, #tpu.memory_space<vmem>>, %arg25: memref<2x8x64xf32, #tpu.memory_space<vmem>>, %arg26: memref<16x64xf32, #tpu.memory_space<vmem>>, %arg27: memref<16x64xbf16, #tpu.memory_space<vmem>>) attributes {dimension_semantics = [#tpu.dimension_semantics<parallel>, #tpu.dimension_semantics<arbitrary>], iteration_bounds = array<i64: 1, 2>, scalar_prefetch = 0 : i64, scratch_operands = 2 : i64, tpu.core_type = #tpu.core_type<tc>, window_params = [{transform_indices = @transform_0, window_bounds = array<i64: 2, 8, 32>}, {transform_indices = @transform_1, window_bounds = array<i64: 2, 8, 16>}, {pipeline_mode = #tpu.pipeline_mode<synchronous>, transform_indices = @transform_2, window_bounds = array<i64: 8, 8>}, {pipeline_mode = #tpu.pipeline_mode<synchronous>, transform_indices = @transform_3, window_bounds = array<i64: 32, 64>}, {pipeline_mode = #tpu.pipeline_mode<synchronous>, transform_indices = @transform_4, window_bounds = array<i64: 16, 64>}, {pipeline_mode = #tpu.pipeline_mode<synchronous>, transform_indices = @transform_5, window_bounds = array<i64: 1, 64>}, {pipeline_mode = #tpu.pipeline_mode<synchronous>, transform_indices = @transform_6, window_bounds = array<i64: 1, 64>}, {pipeline_mode = #tpu.pipeline_mode<synchronous>, transform_indices = @transform_7, window_bounds = array<i64: 64, 64>}, {pipeline_mode = #tpu.pipeline_mode<synchronous>, transform_indices = @transform_8, window_bounds = array<i64: 1, 64>}, {pipeline_mode = #tpu.pipeline_mode<synchronous>, transform_indices = @transform_9, window_bounds = array<i64: 1, 64>}, {pipeline_mode = #tpu.pipeline_mode<synchronous>, transform_indices = @transform_10, window_bounds = array<i64: 8, 64>}, {pipeline_mode = #tpu.pipeline_mode<synchronous>, transform_indices = @transform_11, window_bounds = array<i64: 1, 64>}, {pipeline_mode = #tpu.pipeline_mode<synchronous>, transform_indices = @transform_12, window_bounds = array<i64: 1, 64>}, {transform_indices = @transform_13, window_bounds = array<i64: 1, 64, 192>}, {transform_indices = @transform_14, window_bounds = array<i64: 1, 64, 64>}, {transform_indices = @transform_15, window_bounds = array<i64: 1, 1, 64>}, {transform_indices = @transform_16, window_bounds = array<i64: 1, 1, 64>}, {transform_indices = @transform_17, window_bounds = array<i64: 1, 64, 128>}, {transform_indices = @transform_18, window_bounds = array<i64: 1, 1, 128>}, {transform_indices = @transform_19, window_bounds = array<i64: 1, 128, 64>}, {transform_indices = @transform_20, window_bounds = array<i64: 1, 1, 64>}, {transform_indices = @transform_21, window_bounds = array<i64: 1, 1, 64>}, {transform_indices = @transform_22, window_bounds = array<i64: 1, 1, 64>}, {transform_indices = @transform_23, window_bounds = array<i64: 2, 8, 64>}]} {
    %c0_i32 = arith.constant 0 : i32
    %0 = arith.cmpi eq, %arg1, %c0_i32 : i32
    %1 = arith.extui %0 : i1 to i32
    %c0_i32_0 = arith.constant 0 : i32
    %2 = arith.cmpi ne, %1, %c0_i32_0 : i32
    scf.if %2 {
      %c0_60 = arith.constant 0 : index
      %c0_61 = arith.constant 0 : index
      %c0_62 = arith.constant 0 : index
      %126 = vector.load %arg2[%c0_60, %c0_61, %c0_62] : memref<2x8x32xf32, #tpu.memory_space<vmem>>, vector<2x8x32xf32>
      %127 = vector.shape_cast %126 : vector<2x8x32xf32> to vector<16x32xf32>
      %128 = arith.truncf %127 : vector<16x32xf32> to vector<16x32xbf16>
      %c0_63 = arith.constant 0 : index
      %c0_64 = arith.constant 0 : index
      %c0_65 = arith.constant 0 : index
      %129 = vector.load %arg3[%c0_63, %c0_64, %c0_65] : memref<2x8x16xf32, #tpu.memory_space<vmem>>, vector<2x8x16xf32>
      %130 = vector.shape_cast %129 : vector<2x8x16xf32> to vector<16x16xf32>
      %131 = arith.truncf %130 : vector<16x16xf32> to vector<16x16xbf16>
      %c0_66 = arith.constant 0 : index
      %c0_67 = arith.constant 0 : index
      %132 = vector.load %arg5[%c0_66, %c0_67] : memref<32x64xbf16, #tpu.memory_space<vmem>>, vector<32x64xbf16>
      %cst_68 = arith.constant dense<0.000000e+00> : vector<16x64xf32>
      %133 = tpu.matmul %128, %132, %cst_68 {dimension_numbers = #tpu.dot_dimension_numbers<[1], [0], [0], [1], [0, 0, 1, 1], [], []>} : vector<16x32xbf16>, vector<32x64xbf16>, vector<16x64xf32> -> vector<16x64xf32>
      %c0_69 = arith.constant 0 : index
      %c0_70 = arith.constant 0 : index
      %134 = vector.load %arg6[%c0_69, %c0_70] : memref<16x64xbf16, #tpu.memory_space<vmem>>, vector<16x64xbf16>
      %cst_71 = arith.constant dense<0.000000e+00> : vector<16x64xf32>
      %135 = tpu.matmul %131, %134, %cst_71 {dimension_numbers = #tpu.dot_dimension_numbers<[1], [0], [0], [1], [0, 0, 1, 1], [], []>} : vector<16x16xbf16>, vector<16x64xbf16>, vector<16x64xf32> -> vector<16x64xf32>
      %136 = arith.addf %133, %135 : vector<16x64xf32>
      %c0_72 = arith.constant 0 : index
      %c0_73 = arith.constant 0 : index
      %137 = vector.load %arg7[%c0_72, %c0_73] : memref<1x64xf32, #tpu.memory_space<vmem>>, vector<1x64xf32>
      %c0_74 = arith.constant 0 : index
      %c0_75 = arith.constant 0 : index
      %138 = vector.load %arg8[%c0_74, %c0_75] : memref<1x64xf32, #tpu.memory_space<vmem>>, vector<1x64xf32>
      %cst_76 = arith.constant dense<0.000000e+00> : vector<16xf32>
      %139 = vector.multi_reduction <add>, %136, %cst_76 [1] : vector<16x64xf32> to vector<16xf32>
      %140 = vector.shape_cast %139 : vector<16xf32> to vector<16x1xf32>
      %cst_77 = arith.constant 6.400000e+01 : f32
      %141 = vector.broadcast %cst_77 : f32 to vector<16x1xf32>
      %142 = arith.divf %140, %141 : vector<16x1xf32>
      %143 = vector.broadcast %142 : vector<16x1xf32> to vector<16x64xf32>
      %144 = arith.subf %136, %143 : vector<16x64xf32>
      %145 = arith.mulf %144, %144 : vector<16x64xf32>
      %cst_78 = arith.constant dense<0.000000e+00> : vector<16xf32>
      %146 = vector.multi_reduction <add>, %145, %cst_78 [1] : vector<16x64xf32> to vector<16xf32>
      %147 = vector.shape_cast %146 : vector<16xf32> to vector<16x1xf32>
      %cst_79 = arith.constant 6.400000e+01 : f32
      %148 = vector.broadcast %cst_79 : f32 to vector<16x1xf32>
      %149 = arith.divf %147, %148 : vector<16x1xf32>
      %150 = vector.broadcast %142 : vector<16x1xf32> to vector<16x64xf32>
      %151 = arith.subf %136, %150 : vector<16x64xf32>
      %cst_80 = arith.constant 9.99999974E-6 : f32
      %152 = vector.broadcast %cst_80 : f32 to vector<16x1xf32>
      %153 = arith.addf %149, %152 : vector<16x1xf32>
      %154 = math.rsqrt %153 : vector<16x1xf32>
      %155 = vector.broadcast %154 : vector<16x1xf32> to vector<16x64xf32>
      %156 = arith.mulf %151, %155 : vector<16x64xf32>
      %157 = vector.broadcast %137 : vector<1x64xf32> to vector<16x64xf32>
      %158 = arith.mulf %156, %157 : vector<16x64xf32>
      %159 = vector.broadcast %138 : vector<1x64xf32> to vector<16x64xf32>
      %160 = arith.addf %158, %159 : vector<16x64xf32>
      %cst_81 = arith.constant 0.000000e+00 : f32
      %161 = vector.broadcast %cst_81 : f32 to vector<16x64xf32>
      %162 = arith.maximumf %160, %161 : vector<16x64xf32>
      %163 = arith.truncf %162 : vector<16x64xf32> to vector<16x64xbf16>
      %c0_82 = arith.constant 0 : index
      %c0_83 = arith.constant 0 : index
      %164 = vector.load %arg9[%c0_82, %c0_83] : memref<64x64xbf16, #tpu.memory_space<vmem>>, vector<64x64xbf16>
      %cst_84 = arith.constant dense<0.000000e+00> : vector<16x64xf32>
      %165 = tpu.matmul %163, %164, %cst_84 {dimension_numbers = #tpu.dot_dimension_numbers<[1], [0], [0], [1], [0, 0, 1, 1], [], []>} : vector<16x64xbf16>, vector<64x64xbf16>, vector<16x64xf32> -> vector<16x64xf32>
      %c0_85 = arith.constant 0 : index
      %c0_86 = arith.constant 0 : index
      %166 = vector.load %arg10[%c0_85, %c0_86] : memref<1x64xf32, #tpu.memory_space<vmem>>, vector<1x64xf32>
      %c0_87 = arith.constant 0 : index
      %c0_88 = arith.constant 0 : index
      %167 = vector.load %arg11[%c0_87, %c0_88] : memref<1x64xf32, #tpu.memory_space<vmem>>, vector<1x64xf32>
      %cst_89 = arith.constant dense<0.000000e+00> : vector<16xf32>
      %168 = vector.multi_reduction <add>, %165, %cst_89 [1] : vector<16x64xf32> to vector<16xf32>
      %169 = vector.shape_cast %168 : vector<16xf32> to vector<16x1xf32>
      %cst_90 = arith.constant 6.400000e+01 : f32
      %170 = vector.broadcast %cst_90 : f32 to vector<16x1xf32>
      %171 = arith.divf %169, %170 : vector<16x1xf32>
      %172 = vector.broadcast %171 : vector<16x1xf32> to vector<16x64xf32>
      %173 = arith.subf %165, %172 : vector<16x64xf32>
      %174 = arith.mulf %173, %173 : vector<16x64xf32>
      %cst_91 = arith.constant dense<0.000000e+00> : vector<16xf32>
      %175 = vector.multi_reduction <add>, %174, %cst_91 [1] : vector<16x64xf32> to vector<16xf32>
      %176 = vector.shape_cast %175 : vector<16xf32> to vector<16x1xf32>
      %cst_92 = arith.constant 6.400000e+01 : f32
      %177 = vector.broadcast %cst_92 : f32 to vector<16x1xf32>
      %178 = arith.divf %176, %177 : vector<16x1xf32>
      %179 = vector.broadcast %171 : vector<16x1xf32> to vector<16x64xf32>
      %180 = arith.subf %165, %179 : vector<16x64xf32>
      %cst_93 = arith.constant 9.99999974E-6 : f32
      %181 = vector.broadcast %cst_93 : f32 to vector<16x1xf32>
      %182 = arith.addf %178, %181 : vector<16x1xf32>
      %183 = math.rsqrt %182 : vector<16x1xf32>
      %184 = vector.broadcast %183 : vector<16x1xf32> to vector<16x64xf32>
      %185 = arith.mulf %180, %184 : vector<16x64xf32>
      %186 = vector.broadcast %166 : vector<1x64xf32> to vector<16x64xf32>
      %187 = arith.mulf %185, %186 : vector<16x64xf32>
      %188 = vector.broadcast %167 : vector<1x64xf32> to vector<16x64xf32>
      %189 = arith.addf %187, %188 : vector<16x64xf32>
      %190 = vector.shape_cast %189 : vector<16x64xf32> to vector<2x8x64xf32>
      %c0_94 = arith.constant 0 : index
      %c0_95 = arith.constant 0 : index
      %191 = vector.load %arg12[%c0_94, %c0_95] : memref<8x64xf32, #tpu.memory_space<vmem>>, vector<8x64xf32>
      %192 = vector.shape_cast %191 : vector<8x64xf32> to vector<1x8x64xf32>
      %193 = vector.broadcast %192 : vector<1x8x64xf32> to vector<2x8x64xf32>
      %194 = arith.addf %190, %193 : vector<2x8x64xf32>
      %195 = vector.shape_cast %194 : vector<2x8x64xf32> to vector<16x64xf32>
      %c0_96 = arith.constant 0 : index
      %c0_97 = arith.constant 0 : index
      %196 = vector.load %arg13[%c0_96, %c0_97] : memref<1x64xf32, #tpu.memory_space<vmem>>, vector<1x64xf32>
      %c0_98 = arith.constant 0 : index
      %c0_99 = arith.constant 0 : index
      %197 = vector.load %arg14[%c0_98, %c0_99] : memref<1x64xf32, #tpu.memory_space<vmem>>, vector<1x64xf32>
      %cst_100 = arith.constant dense<0.000000e+00> : vector<16xf32>
      %198 = vector.multi_reduction <add>, %195, %cst_100 [1] : vector<16x64xf32> to vector<16xf32>
      %199 = vector.shape_cast %198 : vector<16xf32> to vector<16x1xf32>
      %cst_101 = arith.constant 6.400000e+01 : f32
      %200 = vector.broadcast %cst_101 : f32 to vector<16x1xf32>
      %201 = arith.divf %199, %200 : vector<16x1xf32>
      %202 = vector.broadcast %201 : vector<16x1xf32> to vector<16x64xf32>
      %203 = arith.subf %195, %202 : vector<16x64xf32>
      %204 = arith.mulf %203, %203 : vector<16x64xf32>
      %cst_102 = arith.constant dense<0.000000e+00> : vector<16xf32>
      %205 = vector.multi_reduction <add>, %204, %cst_102 [1] : vector<16x64xf32> to vector<16xf32>
      %206 = vector.shape_cast %205 : vector<16xf32> to vector<16x1xf32>
      %cst_103 = arith.constant 6.400000e+01 : f32
      %207 = vector.broadcast %cst_103 : f32 to vector<16x1xf32>
      %208 = arith.divf %206, %207 : vector<16x1xf32>
      %209 = vector.broadcast %201 : vector<16x1xf32> to vector<16x64xf32>
      %210 = arith.subf %195, %209 : vector<16x64xf32>
      %cst_104 = arith.constant 9.99999997E-7 : f32
      %211 = vector.broadcast %cst_104 : f32 to vector<16x1xf32>
      %212 = arith.addf %208, %211 : vector<16x1xf32>
      %213 = math.rsqrt %212 : vector<16x1xf32>
      %214 = vector.broadcast %213 : vector<16x1xf32> to vector<16x64xf32>
      %215 = arith.mulf %210, %214 : vector<16x64xf32>
      %216 = vector.broadcast %196 : vector<1x64xf32> to vector<16x64xf32>
      %217 = arith.mulf %215, %216 : vector<16x64xf32>
      %218 = vector.broadcast %197 : vector<1x64xf32> to vector<16x64xf32>
      %219 = arith.addf %217, %218 : vector<16x64xf32>
      %c0_105 = arith.constant 0 : index
      %c0_106 = arith.constant 0 : index
      %220 = vector.load %arg26[%c0_105, %c0_106] : memref<16x64xf32, #tpu.memory_space<vmem>>, vector<16x64xf32>
      tpu.vector_store %arg26[%c0_105, %c0_106], %219 {strides = array<i32>} : memref<16x64xf32, #tpu.memory_space<vmem>>, vector<16x64xf32>,
    } else {
    }
    %c0 = arith.constant 0 : index
    %c0_1 = arith.constant 0 : index
    %3 = vector.load %arg26[%c0, %c0_1] : memref<16x64xf32, #tpu.memory_space<vmem>>, vector<16x64xf32>
    %4 = arith.truncf %3 : vector<16x64xf32> to vector<16x64xbf16>
    %c0_2 = arith.constant 0 : index
    %c0_3 = arith.constant 0 : index
    %c0_4 = arith.constant 0 : index
    %5 = vector.load %arg15[%c0_2, %c0_3, %c0_4] : memref<1x64x192xbf16, #tpu.memory_space<vmem>>, vector<1x64x192xbf16>
    %6 = vector.shape_cast %5 : vector<1x64x192xbf16> to vector<64x192xbf16>
    %cst = arith.constant dense<0.000000e+00> : vector<16x192xf32>
    %7 = tpu.matmul %4, %6, %cst {dimension_numbers = #tpu.dot_dimension_numbers<[1], [0], [0], [1], [0, 0, 1, 1], [], []>} : vector<16x64xbf16>, vector<64x192xbf16>, vector<16x192xf32> -> vector<16x192xf32>
    %8 = vector.shape_cast %7 : vector<16x192xf32> to vector<2x8x192xf32>
    %9 = vector.extract_strided_slice %8 {offsets = [0, 0, 0], sizes = [2, 8, 32], strides = [1, 1, 1]} : vector<2x8x192xf32> to vector<2x8x32xf32>
    %10 = vector.extract_strided_slice %8 {offsets = [0, 0, 32], sizes = [2, 8, 32], strides = [1, 1, 1]} : vector<2x8x192xf32> to vector<2x8x32xf32>
    %11 = tpu.concatenate %9, %10 in 0 : vector<2x8x32xf32>, vector<2x8x32xf32> -> vector<4x8x32xf32>
    %12 = arith.truncf %11 : vector<4x8x32xf32> to vector<4x8x32xbf16>
    %13 = vector.extract_strided_slice %8 {offsets = [0, 0, 64], sizes = [2, 8, 32], strides = [1, 1, 1]} : vector<2x8x192xf32> to vector<2x8x32xf32>
    %14 = vector.extract_strided_slice %8 {offsets = [0, 0, 96], sizes = [2, 8, 32], strides = [1, 1, 1]} : vector<2x8x192xf32> to vector<2x8x32xf32>
    %15 = tpu.concatenate %13, %14 in 0 : vector<2x8x32xf32>, vector<2x8x32xf32> -> vector<4x8x32xf32>
    %16 = arith.truncf %15 : vector<4x8x32xf32> to vector<4x8x32xbf16>
    %17 = vector.extract_strided_slice %8 {offsets = [0, 0, 128], sizes = [2, 8, 32], strides = [1, 1, 1]} : vector<2x8x192xf32> to vector<2x8x32xf32>
    %18 = vector.extract_strided_slice %8 {offsets = [0, 0, 160], sizes = [2, 8, 32], strides = [1, 1, 1]} : vector<2x8x192xf32> to vector<2x8x32xf32>
    %19 = tpu.concatenate %17, %18 in 0 : vector<2x8x32xf32>, vector<2x8x32xf32> -> vector<4x8x32xf32>
    %20 = arith.truncf %19 : vector<4x8x32xf32> to vector<4x8x32xbf16>
    "tpu.trace_start"() <{level = 10 : i32, message = "bld,bmd->blm"}> : () -> ()
    %cst_5 = arith.constant dense<0.000000e+00> : vector<4x8x8xf32>
    %21 = tpu.matmul %12, %16, %cst_5 {dimension_numbers = #tpu.dot_dimension_numbers<[2], [2], [1], [1], [0, 0, 0, 1, 1, 1], [0], [0]>} : vector<4x8x32xbf16>, vector<4x8x32xbf16>, vector<4x8x8xf32> -> vector<4x8x8xf32>
    "tpu.trace_stop"() : () -> ()
    %c0_6 = arith.constant 0 : index
    %c0_7 = arith.constant 0 : index
    %22 = vector.load %arg4[%c0_6, %c0_7] : memref<8x8xf32, #tpu.memory_space<vmem>>, vector<8x8xf32>
    %23 = vector.shape_cast %22 : vector<8x8xf32> to vector<1x8x8xf32>
    %24 = vector.broadcast %23 : vector<1x8x8xf32> to vector<4x8x8xf32>
    %25 = arith.addf %21, %24 : vector<4x8x8xf32>
    %cst_8 = arith.constant dense<0xFF800000> : vector<4x8xf32>
    %26 = vector.multi_reduction <maximumf>, %25, %cst_8 [2] : vector<4x8x8xf32> to vector<4x8xf32>
    %27 = vector.shape_cast %26 : vector<4x8xf32> to vector<4x8x1xf32>
    %28 = vector.broadcast %27 : vector<4x8x1xf32> to vector<4x8x8xf32>
    %29 = arith.subf %25, %28 : vector<4x8x8xf32>
    %30 = math.exp %29 : vector<4x8x8xf32>
    %cst_9 = arith.constant dense<0.000000e+00> : vector<4x8xf32>
    %31 = vector.multi_reduction <add>, %30, %cst_9 [2] : vector<4x8x8xf32> to vector<4x8xf32>
    %32 = vector.shape_cast %31 : vector<4x8xf32> to vector<4x8x1xf32>
    %33 = tpu.reciprocal %32 {approx = true} : vector<4x8x1xf32> -> vector<4x8x1xf32>
    %34 = vector.broadcast %33 : vector<4x8x1xf32> to vector<4x8x8xf32>
    %35 = arith.mulf %30, %34 : vector<4x8x8xf32>
    %36 = arith.truncf %35 : vector<4x8x8xf32> to vector<4x8x8xbf16>
    "tpu.trace_start"() <{level = 10 : i32, message = "blm,bmd->bld"}> : () -> ()
    %cst_10 = arith.constant dense<0.000000e+00> : vector<4x8x32xf32>
    %37 = tpu.matmul %36, %20, %cst_10 {dimension_numbers = #tpu.dot_dimension_numbers<[2], [1], [1], [2], [0, 0, 0, 1, 1, 2], [0], [0]>} : vector<4x8x8xbf16>, vector<4x8x32xbf16>, vector<4x8x32xf32> -> vector<4x8x32xf32>
    "tpu.trace_stop"() : () -> ()
    %38 = vector.extract_strided_slice %37 {offsets = [0, 0, 0], sizes = [2, 8, 32], strides = [1, 1, 1]} : vector<4x8x32xf32> to vector<2x8x32xf32>
    %39 = vector.shape_cast %38 : vector<2x8x32xf32> to vector<16x32xf32>
    %40 = arith.truncf %39 : vector<16x32xf32> to vector<16x32xbf16>
    %c0_11 = arith.constant 0 : index
    %c0_12 = arith.constant 0 : index
    %41 = vector.load %arg27[%c0_11, %c0_12] : memref<16x64xbf16, #tpu.memory_space<vmem>>, vector<16x32xbf16>
    tpu.vector_store %arg27[%c0_11, %c0_12], %40 {strides = array<i32>} : memref<16x64xbf16, #tpu.memory_space<vmem>>, vector<16x32xbf16>,
    %42 = vector.extract_strided_slice %37 {offsets = [2, 0, 0], sizes = [2, 8, 32], strides = [1, 1, 1]} : vector<4x8x32xf32> to vector<2x8x32xf32>
    %43 = vector.shape_cast %42 : vector<2x8x32xf32> to vector<16x32xf32>
    %44 = arith.truncf %43 : vector<16x32xf32> to vector<16x32xbf16>
    %c0_13 = arith.constant 0 : index
    %c32 = arith.constant 32 : index
    %45 = vector.load %arg27[%c0_13, %c32] : memref<16x64xbf16, #tpu.memory_space<vmem>>, vector<16x32xbf16>
    tpu.vector_store %arg27[%c0_13, %c32], %44 {strides = array<i32>} : memref<16x64xbf16, #tpu.memory_space<vmem>>, vector<16x32xbf16>,
    %c0_14 = arith.constant 0 : index
    %c0_15 = arith.constant 0 : index
    %46 = vector.load %arg27[%c0_14, %c0_15] : memref<16x64xbf16, #tpu.memory_space<vmem>>, vector<16x64xbf16>
    %c0_16 = arith.constant 0 : index
    %c0_17 = arith.constant 0 : index
    %c0_18 = arith.constant 0 : index
    %47 = vector.load %arg16[%c0_16, %c0_17, %c0_18] : memref<1x64x64xbf16, #tpu.memory_space<vmem>>, vector<1x64x64xbf16>
    %48 = vector.shape_cast %47 : vector<1x64x64xbf16> to vector<64x64xbf16>
    %cst_19 = arith.constant dense<0.000000e+00> : vector<16x64xf32>
    %49 = tpu.matmul %46, %48, %cst_19 {dimension_numbers = #tpu.dot_dimension_numbers<[1], [0], [0], [1], [0, 0, 1, 1], [], []>} : vector<16x64xbf16>, vector<64x64xbf16>, vector<16x64xf32> -> vector<16x64xf32>
    %50 = arith.addf %49, %3 : vector<16x64xf32>
    %c0_20 = arith.constant 0 : index
    %c0_21 = arith.constant 0 : index
    %c0_22 = arith.constant 0 : index
    %51 = vector.load %arg17[%c0_20, %c0_21, %c0_22] : memref<1x1x64xf32, #tpu.memory_space<vmem>>, vector<1x1x64xf32>
    %52 = vector.shape_cast %51 : vector<1x1x64xf32> to vector<1x64xf32>
    %c0_23 = arith.constant 0 : index
    %c0_24 = arith.constant 0 : index
    %c0_25 = arith.constant 0 : index
    %53 = vector.load %arg18[%c0_23, %c0_24, %c0_25] : memref<1x1x64xf32, #tpu.memory_space<vmem>>, vector<1x1x64xf32>
    %54 = vector.shape_cast %53 : vector<1x1x64xf32> to vector<1x64xf32>
    %cst_26 = arith.constant dense<0.000000e+00> : vector<16xf32>
    %55 = vector.multi_reduction <add>, %50, %cst_26 [1] : vector<16x64xf32> to vector<16xf32>
    %56 = vector.shape_cast %55 : vector<16xf32> to vector<16x1xf32>
    %cst_27 = arith.constant 6.400000e+01 : f32
    %57 = vector.broadcast %cst_27 : f32 to vector<16x1xf32>
    %58 = arith.divf %56, %57 : vector<16x1xf32>
    %59 = vector.broadcast %58 : vector<16x1xf32> to vector<16x64xf32>
    %60 = arith.subf %50, %59 : vector<16x64xf32>
    %61 = arith.mulf %60, %60 : vector<16x64xf32>
    %cst_28 = arith.constant dense<0.000000e+00> : vector<16xf32>
    %62 = vector.multi_reduction <add>, %61, %cst_28 [1] : vector<16x64xf32> to vector<16xf32>
    %63 = vector.shape_cast %62 : vector<16xf32> to vector<16x1xf32>
    %cst_29 = arith.constant 6.400000e+01 : f32
    %64 = vector.broadcast %cst_29 : f32 to vector<16x1xf32>
    %65 = arith.divf %63, %64 : vector<16x1xf32>
    %66 = vector.broadcast %58 : vector<16x1xf32> to vector<16x64xf32>
    %67 = arith.subf %50, %66 : vector<16x64xf32>
    %cst_30 = arith.constant 9.99999997E-7 : f32
    %68 = vector.broadcast %cst_30 : f32 to vector<16x1xf32>
    %69 = arith.addf %65, %68 : vector<16x1xf32>
    %70 = math.rsqrt %69 : vector<16x1xf32>
    %71 = vector.broadcast %70 : vector<16x1xf32> to vector<16x64xf32>
    %72 = arith.mulf %67, %71 : vector<16x64xf32>
    %73 = vector.broadcast %52 : vector<1x64xf32> to vector<16x64xf32>
    %74 = arith.mulf %72, %73 : vector<16x64xf32>
    %75 = vector.broadcast %54 : vector<1x64xf32> to vector<16x64xf32>
    %76 = arith.addf %74, %75 : vector<16x64xf32>
    %77 = arith.truncf %76 : vector<16x64xf32> to vector<16x64xbf16>
    %c0_31 = arith.constant 0 : index
    %c0_32 = arith.constant 0 : index
    %c0_33 = arith.constant 0 : index
    %78 = vector.load %arg19[%c0_31, %c0_32, %c0_33] : memref<1x64x128xbf16, #tpu.memory_space<vmem>>, vector<1x64x128xbf16>
    %79 = vector.shape_cast %78 : vector<1x64x128xbf16> to vector<64x128xbf16>
    %cst_34 = arith.constant dense<0.000000e+00> : vector<16x128xf32>
    %80 = tpu.matmul %77, %79, %cst_34 {dimension_numbers = #tpu.dot_dimension_numbers<[1], [0], [0], [1], [0, 0, 1, 1], [], []>} : vector<16x64xbf16>, vector<64x128xbf16>, vector<16x128xf32> -> vector<16x128xf32>
    %c0_35 = arith.constant 0 : index
    %c0_36 = arith.constant 0 : index
    %c0_37 = arith.constant 0 : index
    %81 = vector.load %arg20[%c0_35, %c0_36, %c0_37] : memref<1x1x128xf32, #tpu.memory_space<vmem>>, vector<1x1x128xf32>
    %82 = vector.shape_cast %81 : vector<1x1x128xf32> to vector<1x128xf32>
    %83 = vector.broadcast %82 : vector<1x128xf32> to vector<16x128xf32>
    %84 = arith.addf %80, %83 : vector<16x128xf32>
    %cst_38 = arith.constant 0.000000e+00 : f32
    %85 = vector.broadcast %cst_38 : f32 to vector<16x128xf32>
    %86 = arith.maximumf %84, %85 : vector<16x128xf32>
    %87 = arith.truncf %86 : vector<16x128xf32> to vector<16x128xbf16>
    %c0_39 = arith.constant 0 : index
    %c0_40 = arith.constant 0 : index
    %c0_41 = arith.constant 0 : index
    %88 = vector.load %arg21[%c0_39, %c0_40, %c0_41] : memref<1x128x64xbf16, #tpu.memory_space<vmem>>, vector<1x128x64xbf16>
    %89 = vector.shape_cast %88 : vector<1x128x64xbf16> to vector<128x64xbf16>
    %cst_42 = arith.constant dense<0.000000e+00> : vector<16x64xf32>
    %90 = tpu.matmul %87, %89, %cst_42 {dimension_numbers = #tpu.dot_dimension_numbers<[1], [0], [0], [1], [0, 0, 1, 1], [], []>} : vector<16x128xbf16>, vector<128x64xbf16>, vector<16x64xf32> -> vector<16x64xf32>
    %c0_43 = arith.constant 0 : index
    %c0_44 = arith.constant 0 : index
    %c0_45 = arith.constant 0 : index
    %91 = vector.load %arg22[%c0_43, %c0_44, %c0_45] : memref<1x1x64xf32, #tpu.memory_space<vmem>>, vector<1x1x64xf32>
    %92 = vector.shape_cast %91 : vector<1x1x64xf32> to vector<1x64xf32>
    %93 = vector.broadcast %92 : vector<1x64xf32> to vector<16x64xf32>
    %94 = arith.addf %90, %93 : vector<16x64xf32>
    %95 = arith.addf %94, %76 : vector<16x64xf32>
    %c0_46 = arith.constant 0 : index
    %c0_47 = arith.constant 0 : index
    %c0_48 = arith.constant 0 : index
    %96 = vector.load %arg23[%c0_46, %c0_47, %c0_48] : memref<1x1x64xf32, #tpu.memory_space<vmem>>, vector<1x1x64xf32>
    %97 = vector.shape_cast %96 : vector<1x1x64xf32> to vector<1x64xf32>
    %c0_49 = arith.constant 0 : index
    %c0_50 = arith.constant 0 : index
    %c0_51 = arith.constant 0 : index
    %98 = vector.load %arg24[%c0_49, %c0_50, %c0_51] : memref<1x1x64xf32, #tpu.memory_space<vmem>>, vector<1x1x64xf32>
    %99 = vector.shape_cast %98 : vector<1x1x64xf32> to vector<1x64xf32>
    %cst_52 = arith.constant dense<0.000000e+00> : vector<16xf32>
    %100 = vector.multi_reduction <add>, %95, %cst_52 [1] : vector<16x64xf32> to vector<16xf32>
    %101 = vector.shape_cast %100 : vector<16xf32> to vector<16x1xf32>
    %cst_53 = arith.constant 6.400000e+01 : f32
    %102 = vector.broadcast %cst_53 : f32 to vector<16x1xf32>
    %103 = arith.divf %101, %102 : vector<16x1xf32>
    %104 = vector.broadcast %103 : vector<16x1xf32> to vector<16x64xf32>
    %105 = arith.subf %95, %104 : vector<16x64xf32>
    %106 = arith.mulf %105, %105 : vector<16x64xf32>
    %cst_54 = arith.constant dense<0.000000e+00> : vector<16xf32>
    %107 = vector.multi_reduction <add>, %106, %cst_54 [1] : vector<16x64xf32> to vector<16xf32>
    %108 = vector.shape_cast %107 : vector<16xf32> to vector<16x1xf32>
    %cst_55 = arith.constant 6.400000e+01 : f32
    %109 = vector.broadcast %cst_55 : f32 to vector<16x1xf32>
    %110 = arith.divf %108, %109 : vector<16x1xf32>
    %111 = vector.broadcast %103 : vector<16x1xf32> to vector<16x64xf32>
    %112 = arith.subf %95, %111 : vector<16x64xf32>
    %cst_56 = arith.constant 9.99999997E-7 : f32
    %113 = vector.broadcast %cst_56 : f32 to vector<16x1xf32>
    %114 = arith.addf %110, %113 : vector<16x1xf32>
    %115 = math.rsqrt %114 : vector<16x1xf32>
    %116 = vector.broadcast %115 : vector<16x1xf32> to vector<16x64xf32>
    %117 = arith.mulf %112, %116 : vector<16x64xf32>
    %118 = vector.broadcast %97 : vector<1x64xf32> to vector<16x64xf32>
    %119 = arith.mulf %117, %118 : vector<16x64xf32>
    %120 = vector.broadcast %99 : vector<1x64xf32> to vector<16x64xf32>
    %121 = arith.addf %119, %120 : vector<16x64xf32>
    %c0_57 = arith.constant 0 : index
    %c0_58 = arith.constant 0 : index
    %122 = vector.load %arg26[%c0_57, %c0_58] : memref<16x64xf32, #tpu.memory_space<vmem>>, vector<16x64xf32>
    tpu.vector_store %arg26[%c0_57, %c0_58], %121 {strides = array<i32>} : memref<16x64xf32, #tpu.memory_space<vmem>>, vector<16x64xf32>,
    %c1_i32 = arith.constant 1 : i32
    %123 = arith.cmpi eq, %arg1, %c1_i32 : i32
    %124 = arith.extui %123 : i1 to i32
    %c0_i32_59 = arith.constant 0 : i32
    %125 = arith.cmpi ne, %124, %c0_i32_59 : i32
    scf.if %125 {
      %126 = vector.shape_cast %121 : vector<16x64xf32> to vector<2x8x64xf32>
      %c0_60 = arith.constant 0 : index
      %c0_61 = arith.constant 0 : index
      %c0_62 = arith.constant 0 : index
      %127 = vector.load %arg25[%c0_60, %c0_61, %c0_62] : memref<2x8x64xf32, #tpu.memory_space<vmem>>, vector<2x8x64xf32>
      tpu.vector_store %arg25[%c0_60, %c0_61, %c0_62], %126 {strides = array<i32>} : memref<2x8x64xf32, #tpu.memory_space<vmem>>, vector<2x8x64xf32>,
    } else {
    }
    return
  }
  func.func @transform_0(%arg0: i32, %arg1: i32) -> (i32, i32, i32) {
    %c0_i32 = arith.constant 0 : i32
    %c0_i32_0 = arith.constant 0 : i32
    %c0_i32_1 = arith.constant 0 : i32
    return %arg0, %c0_i32, %c0_i32_0 : i32, i32, i32
  }
  func.func @transform_1(%arg0: i32, %arg1: i32) -> (i32, i32, i32) {
    %c0_i32 = arith.constant 0 : i32
    %c0_i32_0 = arith.constant 0 : i32
    %c0_i32_1 = arith.constant 0 : i32
    return %arg0, %c0_i32, %c0_i32_0 : i32, i32, i32
  }
  func.func @transform_2(%arg0: i32, %arg1: i32) -> (i32, i32) {
    %c0_i32 = arith.constant 0 : i32
    %c0_i32_0 = arith.constant 0 : i32
    %c0_i32_1 = arith.constant 0 : i32
    return %c0_i32, %c0_i32_0 : i32, i32
  }
  func.func @transform_3(%arg0: i32, %arg1: i32) -> (i32, i32) {
    %c0_i32 = arith.constant 0 : i32
    %c0_i32_0 = arith.constant 0 : i32
    %c0_i32_1 = arith.constant 0 : i32
    return %c0_i32, %c0_i32_0 : i32, i32
  }
  func.func @transform_4(%arg0: i32, %arg1: i32) -> (i32, i32) {
    %c0_i32 = arith.constant 0 : i32
    %c0_i32_0 = arith.constant 0 : i32
    %c0_i32_1 = arith.constant 0 : i32
    return %c0_i32, %c0_i32_0 : i32, i32
  }
  func.func @transform_5(%arg0: i32, %arg1: i32) -> (i32, i32) {
    %c0_i32 = arith.constant 0 : i32
    %c0_i32_0 = arith.constant 0 : i32
    %c0_i32_1 = arith.constant 0 : i32
    return %c0_i32, %c0_i32_0 : i32, i32
  }
  func.func @transform_6(%arg0: i32, %arg1: i32) -> (i32, i32) {
    %c0_i32 = arith.constant 0 : i32
    %c0_i32_0 = arith.constant 0 : i32
    %c0_i32_1 = arith.constant 0 : i32
    return %c0_i32, %c0_i32_0 : i32, i32
  }
  func.func @transform_7(%arg0: i32, %arg1: i32) -> (i32, i32) {
    %c0_i32 = arith.constant 0 : i32
    %c0_i32_0 = arith.constant 0 : i32
    %c0_i32_1 = arith.constant 0 : i32
    return %c0_i32, %c0_i32_0 : i32, i32
  }
  func.func @transform_8(%arg0: i32, %arg1: i32) -> (i32, i32) {
    %c0_i32 = arith.constant 0 : i32
    %c0_i32_0 = arith.constant 0 : i32
    %c0_i32_1 = arith.constant 0 : i32
    return %c0_i32, %c0_i32_0 : i32, i32
  }
  func.func @transform_9(%arg0: i32, %arg1: i32) -> (i32, i32) {
    %c0_i32 = arith.constant 0 : i32
    %c0_i32_0 = arith.constant 0 : i32
    %c0_i32_1 = arith.constant 0 : i32
    return %c0_i32, %c0_i32_0 : i32, i32
  }
  func.func @transform_10(%arg0: i32, %arg1: i32) -> (i32, i32) {
    %c0_i32 = arith.constant 0 : i32
    %c0_i32_0 = arith.constant 0 : i32
    %c0_i32_1 = arith.constant 0 : i32
    return %c0_i32, %c0_i32_0 : i32, i32
  }
  func.func @transform_11(%arg0: i32, %arg1: i32) -> (i32, i32) {
    %c0_i32 = arith.constant 0 : i32
    %c0_i32_0 = arith.constant 0 : i32
    %c0_i32_1 = arith.constant 0 : i32
    return %c0_i32, %c0_i32_0 : i32, i32
  }
  func.func @transform_12(%arg0: i32, %arg1: i32) -> (i32, i32) {
    %c0_i32 = arith.constant 0 : i32
    %c0_i32_0 = arith.constant 0 : i32
    %c0_i32_1 = arith.constant 0 : i32
    return %c0_i32, %c0_i32_0 : i32, i32
  }
  func.func @transform_13(%arg0: i32, %arg1: i32) -> (i32, i32, i32) {
    %c0_i32 = arith.constant 0 : i32
    %c0_i32_0 = arith.constant 0 : i32
    %c0_i32_1 = arith.constant 0 : i32
    return %arg1, %c0_i32, %c0_i32_0 : i32, i32, i32
  }
  func.func @transform_14(%arg0: i32, %arg1: i32) -> (i32, i32, i32) {
    %c0_i32 = arith.constant 0 : i32
    %c0_i32_0 = arith.constant 0 : i32
    %c0_i32_1 = arith.constant 0 : i32
    return %arg1, %c0_i32, %c0_i32_0 : i32, i32, i32
  }
  func.func @transform_15(%arg0: i32, %arg1: i32) -> (i32, i32, i32) {
    %c0_i32 = arith.constant 0 : i32
    %c0_i32_0 = arith.constant 0 : i32
    %c0_i32_1 = arith.constant 0 : i32
    return %arg1, %c0_i32, %c0_i32_0 : i32, i32, i32
  }
  func.func @transform_16(%arg0: i32, %arg1: i32) -> (i32, i32, i32) {
    %c0_i32 = arith.constant 0 : i32
    %c0_i32_0 = arith.constant 0 : i32
    %c0_i32_1 = arith.constant 0 : i32
    return %arg1, %c0_i32, %c0_i32_0 : i32, i32, i32
  }
  func.func @transform_17(%arg0: i32, %arg1: i32) -> (i32, i32, i32) {
    %c0_i32 = arith.constant 0 : i32
    %c0_i32_0 = arith.constant 0 : i32
    %c0_i32_1 = arith.constant 0 : i32
    return %arg1, %c0_i32, %c0_i32_0 : i32, i32, i32
  }
  func.func @transform_18(%arg0: i32, %arg1: i32) -> (i32, i32, i32) {
    %c0_i32 = arith.constant 0 : i32
    %c0_i32_0 = arith.constant 0 : i32
    %c0_i32_1 = arith.constant 0 : i32
    return %arg1, %c0_i32, %c0_i32_0 : i32, i32, i32
  }
  func.func @transform_19(%arg0: i32, %arg1: i32) -> (i32, i32, i32) {
    %c0_i32 = arith.constant 0 : i32
    %c0_i32_0 = arith.constant 0 : i32
    %c0_i32_1 = arith.constant 0 : i32
    return %arg1, %c0_i32, %c0_i32_0 : i32, i32, i32
  }
  func.func @transform_20(%arg0: i32, %arg1: i32) -> (i32, i32, i32) {
    %c0_i32 = arith.constant 0 : i32
    %c0_i32_0 = arith.constant 0 : i32
    %c0_i32_1 = arith.constant 0 : i32
    return %arg1, %c0_i32, %c0_i32_0 : i32, i32, i32
  }
  func.func @transform_21(%arg0: i32, %arg1: i32) -> (i32, i32, i32) {
    %c0_i32 = arith.constant 0 : i32
    %c0_i32_0 = arith.constant 0 : i32
    %c0_i32_1 = arith.constant 0 : i32
    return %arg1, %c0_i32, %c0_i32_0 : i32, i32, i32
  }
  func.func @transform_22(%arg0: i32, %arg1: i32) -> (i32, i32, i32) {
    %c0_i32 = arith.constant 0 : i32
    %c0_i32_0 = arith.constant 0 : i32
    %c0_i32_1 = arith.constant 0 : i32
    return %arg1, %c0_i32, %c0_i32_0 : i32, i32, i32
  }
  func.func @transform_23(%arg0: i32, %arg1: i32) -> (i32, i32, i32) {
    %c0_i32 = arith.constant 0 : i32
    %c0_i32_0 = arith.constant 0 : i32
    %c0_i32_1 = arith.constant 0 : i32
    return %arg0, %c0_i32, %c0_i32_0 : i32, i32, i32
  }
}

</mosaic_0001>

<llo_original>
// kernel: tpu_custom_call.1
$region0: #{tpu_custom_call.1}
  #allocation0 [shape = 'u32[]', space=smem, size = 0x4, offset = 0x4, fixed_abs, tag = 'smem constant byte address 0x4 - core index']
  #allocation1 [shape = 'u32[144,128]{1,0:T(1,128)}', space=vmem, size = 0x12000, scoped, tag = 'internal scratch']
  #allocation2 [shape = 'f32[16,64]{1,0:T(8,128)}', space=vmem, size = 0x2000, scoped, tag = 'scratch operand']
  #allocation3 [shape = 'bf16[16,64]{1,0:T(16,128)(2,1)}', space=vmem, size = 0x1000, scoped, tag = 'scratch operand']
  %s0 = inlined_call_operand.hbm [shape: f32[2,8,32], index: 0, kind: input, shape index: {}]
  %s1 = inlined_call_operand.hbm [shape: f32[2,8,16], index: 1, kind: input, shape index: {}]
  %s2 = inlined_call_operand.hbm [shape: f32[8,8], index: 2, kind: input, shape index: {}]
  %s3 = inlined_call_operand.hbm [shape: bf16[32,64], index: 3, kind: input, shape index: {}]
  %s4 = inlined_call_operand.hbm [shape: bf16[16,64], index: 4, kind: input, shape index: {}]
  %s5 = inlined_call_operand.vmem [shape: f32[1,64], index: 5, kind: input, shape index: {}]
  %s6 = inlined_call_operand.hbm [shape: f32[1,64], index: 6, kind: input, shape index: {}]
  %s7 = inlined_call_operand.hbm [shape: bf16[64,64], index: 7, kind: input, shape index: {}]
  %s8 = inlined_call_operand.hbm [shape: f32[1,64], index: 8, kind: input, shape index: {}]
  %s9 = inlined_call_operand.hbm [shape: f32[1,64], index: 9, kind: input, shape index: {}]
  %s10 = inlined_call_operand.hbm [shape: f32[8,64], index: 10, kind: input, shape index: {}]
  %s11 = inlined_call_operand.hbm [shape: f32[1,64], index: 11, kind: input, shape index: {}]
  %s12 = inlined_call_operand.hbm [shape: f32[1,64], index: 12, kind: input, shape index: {}]
  %s13 = inlined_call_operand.vmem [shape: bf16[2,64,192], index: 13, kind: input, shape index: {}]
  %s14 = inlined_call_operand.vmem [shape: bf16[2,64,64], index: 14, kind: input, shape index: {}]
  %s15 = inlined_call_operand.vmem [shape: f32[2,1,64], index: 15, kind: input, shape index: {}]
  %s16 = inlined_call_operand.vmem [shape: f32[2,1,64], index: 16, kind: input, shape index: {}]
  %s17 = inlined_call_operand.hbm [shape: bf16[2,64,128], index: 17, kind: input, shape index: {}]
  %s18 = inlined_call_operand.vmem [shape: f32[2,1,128], index: 18, kind: input, shape index: {}]
  %s19 = inlined_call_operand.vmem [shape: bf16[2,128,64], index: 19, kind: input, shape index: {}]
  %s20 = inlined_call_operand.vmem [shape: f32[2,1,64], index: 20, kind: input, shape index: {}]
  %s21 = inlined_call_operand.vmem [shape: f32[2,1,64], index: 21, kind: input, shape index: {}]
  %s22 = inlined_call_operand.vmem [shape: f32[2,1,64], index: 22, kind: input, shape index: {}]
  %s23 = inlined_call_operand.hbm [shape: f32[2,8,64], index: 23, kind: output, shape index: {}]
  %s24 = sld [smem:[#allocation0]]
  $region185: #{tpu_custom_call.1} parent=0
    _
  %s26 = ssub.s32 1, %s24
  %s27 = scalar_select 0, %s26, %s24
  $region1: #{tpu_custom_call.1} parent=0
    #allocation4 [shape = 'u8[8192]{0}', space=vmem, size = 0x2000, scoped, tag = 'input window, operand 0, single buffered']
    #allocation5 [shape = 's32[2]{0}', space=sflag, size = 0x8, scoped, tag = 'scoped memory for tpu_custom_call.1']
    #allocation6 [shape = 's32[2]{0}', space=sflag, size = 0x8, scoped, tag = 'scoped memory for tpu_custom_call.1']
    #allocation7 [shape = 'u8[8192]{0}', space=vmem, size = 0x2000, scoped, tag = 'input window, operand 1, single buffered']
    #allocation8 [shape = 's32[1]{0}', space=sflag, size = 0x4, scoped, tag = 'scoped memory for tpu_custom_call.1']
    #allocation9 [shape = 'u8[4096]{0}', space=vmem, size = 0x1000, scoped, tag = 'input window, operand 2, single buffered']
    #allocation10 [shape = 'u8[8192]{0}', space=vmem, size = 0x2000, scoped, tag = 'input window, operand 3, single buffered']
    #allocation11 [shape = 's32[1]{0}', space=sflag, size = 0x4, scoped, tag = 'scoped memory for tpu_custom_call.1']
    #allocation12 [shape = 'u8[4096]{0}', space=vmem, size = 0x1000, scoped, tag = 'input window, operand 4, single buffered']
    #allocation13 [shape = 'u8[512]{0}', space=vmem, size = 0x400, scoped, tag = 'input window, operand 6, single buffered']
    #allocation14 [shape = 's32[1]{0}', space=sflag, size = 0x4, scoped, tag = 'scoped memory for tpu_custom_call.1']
    #allocation15 [shape = 'u8[16384]{0}', space=vmem, size = 0x4000, scoped, tag = 'input window, operand 7, single buffered']
    #allocation16 [shape = 'u8[512]{0}', space=vmem, size = 0x400, scoped, tag = 'input window, operand 8, single buffered']
    #allocation17 [shape = 's32[1]{0}', space=sflag, size = 0x4, scoped, tag = 'scoped memory for tpu_custom_call.1']
    #allocation18 [shape = 'u8[512]{0}', space=vmem, size = 0x400, scoped, tag = 'input window, operand 9, single buffered']
    #allocation19 [shape = 'u8[4096]{0}', space=vmem, size = 0x1000, scoped, tag = 'input window, operand 10, single buffered']
    #allocation20 [shape = 's32[1]{0}', space=sflag, size = 0x4, scoped, tag = 'scoped memory for tpu_custom_call.1']
    #allocation21 [shape = 'u8[512]{0}', space=vmem, size = 0x400, scoped, tag = 'input window, operand 11, single buffered']
    #allocation22 [shape = 'u8[512]{0}', space=vmem, size = 0x400, scoped, tag = 'input window, operand 12, single buffered']
    #allocation23 [shape = 's32[1]{0}', space=sflag, size = 0x4, scoped, tag = 'scoped memory for tpu_custom_call.1']
    #allocation24 [shape = 'u8[32768]{0}', space=vmem, size = 0x8000, scoped, tag = 'input window, operand 17']
    #allocation25 [shape = 'u8[8192]{0}', space=vmem, size = 0x2000, scoped, tag = 'output window, operand 0, single buffered']
    %28 = vsyncpa [#allocation5], 0
    %29 = vsyncpa [#allocation8], 0
    %30 = vsyncpa [#allocation11], 0
    %31 = vsyncpa [#allocation14], 0
    %32 = vsyncpa [#allocation17], 0
    %33 = vsyncpa [#allocation20], 0
    %34 = vsyncpa [#allocation23], 0
    %35 = vsyncpa [#allocation6], 0
    loop: start=0, step=1, limit=4
    $region2: #{tpu_custom_call.1} parent=1 // loop_pre_header
      _
    $region3: #{tpu_custom_call.1} parent=1 // loop_header
      %s37 = sphi 0, %s41
      %p38 = scmp.ge.s32.totalorder %s37, 4
      %s44 = sphi 0, %s56
      %s45 = sphi 0, %s52
      %s46 = sphi 0, %s44
      %s47 = sphi 0, %s45
      %s48 = sphi 0, %s46
      %s49 = sphi 0, %s47
      %s59 = sphi 0, %s61
      %s62 = sphi 0, %s59
      %s63 = sphi 0, %s62
      %s79 = sphi 0, %s63
      %s85 = sphi 0, %s87
      %s88 = sphi 0, %s85
      %s89 = sphi 0, %s88
      %s105 = sphi 0, %s89
      %s109 = sphi 0, %s109
      %s111 = sphi 0, %s109
      %s112 = sphi 0, %s111
      %s126 = sphi 0, %s112
      %s130 = sphi 0, %s130
      %s132 = sphi 0, %s130
      %s133 = sphi 0, %s132
      %s147 = sphi 0, %s133
      %s151 = sphi 0, %s151
      %s153 = sphi 0, %s151
      %s154 = sphi 0, %s153
      %s168 = sphi 0, %s154
      %s172 = sphi 0, %s172
      %s174 = sphi 0, %s172
      %s175 = sphi 0, %s174
      %s189 = sphi 0, %s175
      %s193 = sphi 0, %s193
      %s195 = sphi 0, %s193
      %s196 = sphi 0, %s195
      %s210 = sphi 0, %s196
      %s214 = sphi 0, %s214
      %s216 = sphi 0, %s214
      %s217 = sphi 0, %s216
      %s231 = sphi 0, %s217
      %s235 = sphi 0, %s235
      %s237 = sphi 0, %s235
      %s238 = sphi 0, %s237
      %s252 = sphi 0, %s238
      %s256 = sphi 0, %s256
      %s258 = sphi 0, %s256
      %s259 = sphi 0, %s258
      %s273 = sphi 0, %s259
      %s277 = sphi 0, %s277
      %s279 = sphi 0, %s277
      %s280 = sphi 0, %s279
      %s294 = sphi 0, %s280
      %s298 = sphi 0, %s298
      %s300 = sphi 0, %s298
      %s301 = sphi 0, %s300
      %s315 = sphi 0, %s301
      %s319 = sphi 0, %s319
      %s321 = sphi 0, %s319
      %s322 = sphi 0, %s321
      %s336 = sphi 0, %s322
      %s342 = sphi 0, %s344
      %s345 = sphi 0, %s342
      %s346 = sphi 0, %s345
      %s362 = sphi 0, %s346
      %s368 = sphi 0, %s370
      %s371 = sphi 0, %s368
      %s372 = sphi 0, %s371
      %s388 = sphi 0, %s372
      %s394 = sphi 0, %s396
      %s397 = sphi 0, %s394
      %s398 = sphi 0, %s397
      %s414 = sphi 0, %s398
      %s420 = sphi 0, %s422
      %s423 = sphi 0, %s420
      %s424 = sphi 0, %s423
      %s440 = sphi 0, %s424
      %s446 = sphi 0, %s448
      %s449 = sphi 0, %s446
      %s450 = sphi 0, %s449
      %s466 = sphi 0, %s450
      %s472 = sphi 0, %s474
      %s475 = sphi 0, %s472
      %s476 = sphi 0, %s475
      %s492 = sphi 0, %s476
      %s498 = sphi 0, %s500
      %s501 = sphi 0, %s498
      %s502 = sphi 0, %s501
      %s518 = sphi 0, %s502
      %s524 = sphi 0, %s526
      %s527 = sphi 0, %s524
      %s528 = sphi 0, %s527
      %s544 = sphi 0, %s528
      %s550 = sphi 0, %s552
      %s553 = sphi 0, %s550
      %s554 = sphi 0, %s553
      %s570 = sphi 0, %s554
      %s576 = sphi 0, %s578
      %s579 = sphi 0, %s576
      %s580 = sphi 0, %s579
      %s596 = sphi 0, %s580
      %s602 = sphi 0, %s604
      %s605 = sphi 0, %s602
      %s606 = sphi 0, %s605
      %s622 = sphi 0, %s606
    $region4: #{tpu_custom_call.1} parent=1 // loop_header_branch
      %40 = sbr.rel (%p38) target = $region8
    $region5: #{tpu_custom_call.1} parent=1 // loop_body
      %s42 = ssub.s32 %s37, 1
      %s43 = ssub.s32 %s37, 2
      %s50 = sadd.s32 1, %s45
      %p51 = scmp.ge.s32.totalorder %s50, 2
      %s52 = scalar_select %p51, 0, %s50
      %s53 = sadd.s32 1, %s44
      %s54 = scalar_select %p51, %s53, %s44
      %p55 = scmp.ge.s32.totalorder %s54, 1
      %s56 = scalar_select %p55, 0, %s54
      %s57 = ssub.s32 %s44, %s56
      %p58 = scmp.eq.s32.totalorder %s57, 0
      %s60 = sadd.s32 %s59, 1
      %s61 = scalar_select %p58, %s59, %s60
      %p64 = pneg %p58
      %p65 = scmp.eq.s32.totalorder %s37, 1
      %p66 = por %p64, %p65
      %p67 = scmp.ne.s32.totalorder %s59, %s62
      %p68 = scmp.eq.s32.totalorder %s37, 0
      %p69 = por %p67, %p68
      %p70 = scmp.ne.s32.totalorder %s59, %s62
      %p71 = scmp.eq.s32.totalorder %s42, 1
      %p72 = por %p70, %p71
      %p73 = scmp.ne.s32.totalorder %s62, %s63
      %p74 = scmp.eq.s32.totalorder %s42, 0
      %p75 = por %p73, %p74
      %p76 = scmp.ne.s32.totalorder %s62, %s63
      %p77 = scmp.eq.s32.totalorder %s43, 1
      %p78 = por %p76, %p77
      %p80 = scmp.ne.s32.totalorder %s63, %s79
      %p81 = scmp.eq.s32.totalorder %s43, 0
      %p82 = por %p80, %p81
      %s83 = ssub.s32 %s44, %s56
      %p84 = scmp.eq.s32.totalorder %s83, 0
      %s86 = sadd.s32 %s85, 1
      %s87 = scalar_select %p84, %s85, %s86
      %p90 = pneg %p84
      %p91 = scmp.eq.s32.totalorder %s37, 1
      %p92 = por %p90, %p91
      %p93 = scmp.ne.s32.totalorder %s85, %s88
      %p94 = scmp.eq.s32.totalorder %s37, 0
      %p95 = por %p93, %p94
      %p96 = scmp.ne.s32.totalorder %s85, %s88
      %p97 = scmp.eq.s32.totalorder %s42, 1
      %p98 = por %p96, %p97
      %p99 = scmp.ne.s32.totalorder %s88, %s89
      %p100 = scmp.eq.s32.totalorder %s42, 0
      %p101 = por %p99, %p100
      %p102 = scmp.ne.s32.totalorder %s88, %s89
      %p103 = scmp.eq.s32.totalorder %s43, 1
      %p104 = por %p102, %p103
      %p106 = scmp.ne.s32.totalorder %s89, %s105
      %p107 = scmp.eq.s32.totalorder %s43, 0
      %p108 = por %p106, %p107
      %s110 = sadd.s32 %s109, 1
      %p113 = scmp.eq.s32.totalorder %s37, 1
      %p114 = scmp.ne.s32.totalorder %s109, %s111
      %p115 = scmp.eq.s32.totalorder %s37, 0
      %p116 = por %p114, %p115
      %p117 = scmp.ne.s32.totalorder %s109, %s111
      %p118 = scmp.eq.s32.totalorder %s42, 1
      %p119 = por %p117, %p118
      %p120 = scmp.ne.s32.totalorder %s111, %s112
      %p121 = scmp.eq.s32.totalorder %s42, 0
      %p122 = por %p120, %p121
      %p123 = scmp.ne.s32.totalorder %s111, %s112
      %p124 = scmp.eq.s32.totalorder %s43, 1
      %p125 = por %p123, %p124
      %p127 = scmp.ne.s32.totalorder %s112, %s126
      %p128 = scmp.eq.s32.totalorder %s43, 0
      %p129 = por %p127, %p128
      %s131 = sadd.s32 %s130, 1
      %p134 = scmp.eq.s32.totalorder %s37, 1
      %p135 = scmp.ne.s32.totalorder %s130, %s132
      %p136 = scmp.eq.s32.totalorder %s37, 0
      %p137 = por %p135, %p136
      %p138 = scmp.ne.s32.totalorder %s130, %s132
      %p139 = scmp.eq.s32.totalorder %s42, 1
      %p140 = por %p138, %p139
      %p141 = scmp.ne.s32.totalorder %s132, %s133
      %p142 = scmp.eq.s32.totalorder %s42, 0
      %p143 = por %p141, %p142
      %p144 = scmp.ne.s32.totalorder %s132, %s133
      %p145 = scmp.eq.s32.totalorder %s43, 1
      %p146 = por %p144, %p145
      %p148 = scmp.ne.s32.totalorder %s133, %s147
      %p149 = scmp.eq.s32.totalorder %s43, 0
      %p150 = por %p148, %p149
      %s152 = sadd.s32 %s151, 1
      %p155 = scmp.eq.s32.totalorder %s37, 1
      %p156 = scmp.ne.s32.totalorder %s151, %s153
      %p157 = scmp.eq.s32.totalorder %s37, 0
      %p158 = por %p156, %p157
      %p159 = scmp.ne.s32.totalorder %s151, %s153
      %p160 = scmp.eq.s32.totalorder %s42, 1
      %p161 = por %p159, %p160
      %p162 = scmp.ne.s32.totalorder %s153, %s154
      %p163 = scmp.eq.s32.totalorder %s42, 0
      %p164 = por %p162, %p163
      %p165 = scmp.ne.s32.totalorder %s153, %s154
      %p166 = scmp.eq.s32.totalorder %s43, 1
      %p167 = por %p165, %p166
      %p169 = scmp.ne.s32.totalorder %s154, %s168
      %p170 = scmp.eq.s32.totalorder %s43, 0
      %p171 = por %p169, %p170
      %s173 = sadd.s32 %s172, 1
      %p176 = scmp.eq.s32.totalorder %s37, 1
      %p177 = scmp.ne.s32.totalorder %s172, %s174
      %p178 = scmp.eq.s32.totalorder %s37, 0
      %p179 = por %p177, %p178
      %p180 = scmp.ne.s32.totalorder %s172, %s174
      %p181 = scmp.eq.s32.totalorder %s42, 1
      %p182 = por %p180, %p181
      %p183 = scmp.ne.s32.totalorder %s174, %s175
      %p184 = scmp.eq.s32.totalorder %s42, 0
      %p185 = por %p183, %p184
      %p186 = scmp.ne.s32.totalorder %s174, %s175
      %p187 = scmp.eq.s32.totalorder %s43, 1
      %p188 = por %p186, %p187
      %p190 = scmp.ne.s32.totalorder %s175, %s189
      %p191 = scmp.eq.s32.totalorder %s43, 0
      %p192 = por %p190, %p191
      %s194 = sadd.s32 %s193, 1
      %p197 = scmp.eq.s32.totalorder %s37, 1
      %p198 = scmp.ne.s32.totalorder %s193, %s195
      %p199 = scmp.eq.s32.totalorder %s37, 0
      %p200 = por %p198, %p199
      %p201 = scmp.ne.s32.totalorder %s193, %s195
      %p202 = scmp.eq.s32.totalorder %s42, 1
      %p203 = por %p201, %p202
      %p204 = scmp.ne.s32.totalorder %s195, %s196
      %p205 = scmp.eq.s32.totalorder %s42, 0
      %p206 = por %p204, %p205
      %p207 = scmp.ne.s32.totalorder %s195, %s196
      %p208 = scmp.eq.s32.totalorder %s43, 1
      %p209 = por %p207, %p208
      %p211 = scmp.ne.s32.totalorder %s196, %s210
      %p212 = scmp.eq.s32.totalorder %s43, 0
      %p213 = por %p211, %p212
      %s215 = sadd.s32 %s214, 1
      %p218 = scmp.eq.s32.totalorder %s37, 1
      %p219 = scmp.ne.s32.totalorder %s214, %s216
      %p220 = scmp.eq.s32.totalorder %s37, 0
      %p221 = por %p219, %p220
      %p222 = scmp.ne.s32.totalorder %s214, %s216
      %p223 = scmp.eq.s32.totalorder %s42, 1
      %p224 = por %p222, %p223
      %p225 = scmp.ne.s32.totalorder %s216, %s217
      %p226 = scmp.eq.s32.totalorder %s42, 0
      %p227 = por %p225, %p226
      %p228 = scmp.ne.s32.totalorder %s216, %s217
      %p229 = scmp.eq.s32.totalorder %s43, 1
      %p230 = por %p228, %p229
      %p232 = scmp.ne.s32.totalorder %s217, %s231
      %p233 = scmp.eq.s32.totalorder %s43, 0
      %p234 = por %p232, %p233
      %s236 = sadd.s32 %s235, 1
      %p239 = scmp.eq.s32.totalorder %s37, 1
      %p240 = scmp.ne.s32.totalorder %s235, %s237
      %p241 = scmp.eq.s32.totalorder %s37, 0
      %p242 = por %p240, %p241
      %p243 = scmp.ne.s32.totalorder %s235, %s237
      %p244 = scmp.eq.s32.totalorder %s42, 1
      %p245 = por %p243, %p244
      %p246 = scmp.ne.s32.totalorder %s237, %s238
      %p247 = scmp.eq.s32.totalorder %s42, 0
      %p248 = por %p246, %p247
      %p249 = scmp.ne.s32.totalorder %s237, %s238
      %p250 = scmp.eq.s32.totalorder %s43, 1
      %p251 = por %p249, %p250
      %p253 = scmp.ne.s32.totalorder %s238, %s252
      %p254 = scmp.eq.s32.totalorder %s43, 0
      %p255 = por %p253, %p254
      %s257 = sadd.s32 %s256, 1
      %p260 = scmp.eq.s32.totalorder %s37, 1
      %p261 = scmp.ne.s32.totalorder %s256, %s258
      %p262 = scmp.eq.s32.totalorder %s37, 0
      %p263 = por %p261, %p262
      %p264 = scmp.ne.s32.totalorder %s256, %s258
      %p265 = scmp.eq.s32.totalorder %s42, 1
      %p266 = por %p264, %p265
      %p267 = scmp.ne.s32.totalorder %s258, %s259
      %p268 = scmp.eq.s32.totalorder %s42, 0
      %p269 = por %p267, %p268
      %p270 = scmp.ne.s32.totalorder %s258, %s259
      %p271 = scmp.eq.s32.totalorder %s43, 1
      %p272 = por %p270, %p271
      %p274 = scmp.ne.s32.totalorder %s259, %s273
      %p275 = scmp.eq.s32.totalorder %s43, 0
      %p276 = por %p274, %p275
      %s278 = sadd.s32 %s277, 1
      %p281 = scmp.eq.s32.totalorder %s37, 1
      %p282 = scmp.ne.s32.totalorder %s277, %s279
      %p283 = scmp.eq.s32.totalorder %s37, 0
      %p284 = por %p282, %p283
      %p285 = scmp.ne.s32.totalorder %s277, %s279
      %p286 = scmp.eq.s32.totalorder %s42, 1
      %p287 = por %p285, %p286
      %p288 = scmp.ne.s32.totalorder %s279, %s280
      %p289 = scmp.eq.s32.totalorder %s42, 0
      %p290 = por %p288, %p289
      %p291 = scmp.ne.s32.totalorder %s279, %s280
      %p292 = scmp.eq.s32.totalorder %s43, 1
      %p293 = por %p291, %p292
      %p295 = scmp.ne.s32.totalorder %s280, %s294
      %p296 = scmp.eq.s32.totalorder %s43, 0
      %p297 = por %p295, %p296
      %s299 = sadd.s32 %s298, 1
      %p302 = scmp.eq.s32.totalorder %s37, 1
      %p303 = scmp.ne.s32.totalorder %s298, %s300
      %p304 = scmp.eq.s32.totalorder %s37, 0
      %p305 = por %p303, %p304
      %p306 = scmp.ne.s32.totalorder %s298, %s300
      %p307 = scmp.eq.s32.totalorder %s42, 1
      %p308 = por %p306, %p307
      %p309 = scmp.ne.s32.totalorder %s300, %s301
      %p310 = scmp.eq.s32.totalorder %s42, 0
      %p311 = por %p309, %p310
      %p312 = scmp.ne.s32.totalorder %s300, %s301
      %p313 = scmp.eq.s32.totalorder %s43, 1
      %p314 = por %p312, %p313
      %p316 = scmp.ne.s32.totalorder %s301, %s315
      %p317 = scmp.eq.s32.totalorder %s43, 0
      %p318 = por %p316, %p317
      %s320 = sadd.s32 %s319, 1
      %p323 = scmp.eq.s32.totalorder %s37, 1
      %p324 = scmp.ne.s32.totalorder %s319, %s321
      %p325 = scmp.eq.s32.totalorder %s37, 0
      %p326 = por %p324, %p325
      %p327 = scmp.ne.s32.totalorder %s319, %s321
      %p328 = scmp.eq.s32.totalorder %s42, 1
      %p329 = por %p327, %p328
      %p330 = scmp.ne.s32.totalorder %s321, %s322
      %p331 = scmp.eq.s32.totalorder %s42, 0
      %p332 = por %p330, %p331
      %p333 = scmp.ne.s32.totalorder %s321, %s322
      %p334 = scmp.eq.s32.totalorder %s43, 1
      %p335 = por %p333, %p334
      %p337 = scmp.ne.s32.totalorder %s322, %s336
      %p338 = scmp.eq.s32.totalorder %s43, 0
      %p339 = por %p337, %p338
      %s340 = ssub.s32 %s45, %s52
      %p341 = scmp.eq.s32.totalorder %s340, 0
      %s343 = sadd.s32 %s342, 1
      %s344 = scalar_select %p341, %s342, %s343
      %p347 = pneg %p341
      %p348 = scmp.eq.s32.totalorder %s37, 1
      %p349 = por %p347, %p348
      %p350 = scmp.ne.s32.totalorder %s342, %s345
      %p351 = scmp.eq.s32.totalorder %s37, 0
      %p352 = por %p350, %p351
      %p353 = scmp.ne.s32.totalorder %s342, %s345
      %p354 = scmp.eq.s32.totalorder %s42, 1
      %p355 = por %p353, %p354
      %p356 = scmp.ne.s32.totalorder %s345, %s346
      %p357 = scmp.eq.s32.totalorder %s42, 0
      %p358 = por %p356, %p357
      %p359 = scmp.ne.s32.totalorder %s345, %s346
      %p360 = scmp.eq.s32.totalorder %s43, 1
      %p361 = por %p359, %p360
      %p363 = scmp.ne.s32.totalorder %s346, %s362
      %p364 = scmp.eq.s32.totalorder %s43, 0
      %p365 = por %p363, %p364
      %s366 = ssub.s32 %s45, %s52
      %p367 = scmp.eq.s32.totalorder %s366, 0
      %s369 = sadd.s32 %s368, 1
      %s370 = scalar_select %p367, %s368, %s369
      %p373 = pneg %p367
      %p374 = scmp.eq.s32.totalorder %s37, 1
      %p375 = por %p373, %p374
      %p376 = scmp.ne.s32.totalorder %s368, %s371
      %p377 = scmp.eq.s32.totalorder %s37, 0
      %p378 = por %p376, %p377
      %p379 = scmp.ne.s32.totalorder %s368, %s371
      %p380 = scmp.eq.s32.totalorder %s42, 1
      %p381 = por %p379, %p380
      %p382 = scmp.ne.s32.totalorder %s371, %s372
      %p383 = scmp.eq.s32.totalorder %s42, 0
      %p384 = por %p382, %p383
      %p385 = scmp.ne.s32.totalorder %s371, %s372
      %p386 = scmp.eq.s32.totalorder %s43, 1
      %p387 = por %p385, %p386
      %p389 = scmp.ne.s32.totalorder %s372, %s388
      %p390 = scmp.eq.s32.totalorder %s43, 0
      %p391 = por %p389, %p390
      %s392 = ssub.s32 %s45, %s52
      %p393 = scmp.eq.s32.totalorder %s392, 0
      %s395 = sadd.s32 %s394, 1
      %s396 = scalar_select %p393, %s394, %s395
      %p399 = pneg %p393
      %p400 = scmp.eq.s32.totalorder %s37, 1
      %p401 = por %p399, %p400
      %p402 = scmp.ne.s32.totalorder %s394, %s397
      %p403 = scmp.eq.s32.totalorder %s37, 0
      %p404 = por %p402, %p403
      %p405 = scmp.ne.s32.totalorder %s394, %s397
      %p406 = scmp.eq.s32.totalorder %s42, 1
      %p407 = por %p405, %p406
      %p408 = scmp.ne.s32.totalorder %s397, %s398
      %p409 = scmp.eq.s32.totalorder %s42, 0
      %p410 = por %p408, %p409
      %p411 = scmp.ne.s32.totalorder %s397, %s398
      %p412 = scmp.eq.s32.totalorder %s43, 1
      %p413 = por %p411, %p412
      %p415 = scmp.ne.s32.totalorder %s398, %s414
      %p416 = scmp.eq.s32.totalorder %s43, 0
      %p417 = por %p415, %p416
      %s418 = ssub.s32 %s45, %s52
      %p419 = scmp.eq.s32.totalorder %s418, 0
      %s421 = sadd.s32 %s420, 1
      %s422 = scalar_select %p419, %s420, %s421
      %p425 = pneg %p419
      %p426 = scmp.eq.s32.totalorder %s37, 1
      %p427 = por %p425, %p426
      %p428 = scmp.ne.s32.totalorder %s420, %s423
      %p429 = scmp.eq.s32.totalorder %s37, 0
      %p430 = por %p428, %p429
      %p431 = scmp.ne.s32.totalorder %s420, %s423
      %p432 = scmp.eq.s32.totalorder %s42, 1
      %p433 = por %p431, %p432
      %p434 = scmp.ne.s32.totalorder %s423, %s424
      %p435 = scmp.eq.s32.totalorder %s42, 0
      %p436 = por %p434, %p435
      %p437 = scmp.ne.s32.totalorder %s423, %s424
      %p438 = scmp.eq.s32.totalorder %s43, 1
      %p439 = por %p437, %p438
      %p441 = scmp.ne.s32.totalorder %s424, %s440
      %p442 = scmp.eq.s32.totalorder %s43, 0
      %p443 = por %p441, %p442
      %s444 = ssub.s32 %s45, %s52
      %p445 = scmp.eq.s32.totalorder %s444, 0
      %s447 = sadd.s32 %s446, 1
      %s448 = scalar_select %p445, %s446, %s447
      %p451 = pneg %p445
      %p452 = scmp.eq.s32.totalorder %s37, 1
      %p453 = por %p451, %p452
      %p454 = scmp.ne.s32.totalorder %s446, %s449
      %p455 = scmp.eq.s32.totalorder %s37, 0
      %p456 = por %p454, %p455
      %p457 = scmp.ne.s32.totalorder %s446, %s449
      %p458 = scmp.eq.s32.totalorder %s42, 1
      %p459 = por %p457, %p458
      %p460 = scmp.ne.s32.totalorder %s449, %s450
      %p461 = scmp.eq.s32.totalorder %s42, 0
      %p462 = por %p460, %p461
      %p463 = scmp.ne.s32.totalorder %s449, %s450
      %p464 = scmp.eq.s32.totalorder %s43, 1
      %p465 = por %p463, %p464
      %p467 = scmp.ne.s32.totalorder %s450, %s466
      %p468 = scmp.eq.s32.totalorder %s43, 0
      %p469 = por %p467, %p468
      %s470 = ssub.s32 %s45, %s52
      %p471 = scmp.eq.s32.totalorder %s470, 0
      %s473 = sadd.s32 %s472, 1
      %s474 = scalar_select %p471, %s472, %s473
      %p477 = pneg %p471
      %p478 = scmp.eq.s32.totalorder %s37, 1
      %p479 = por %p477, %p478
      %p480 = scmp.ne.s32.totalorder %s472, %s475
      %p481 = scmp.eq.s32.totalorder %s37, 0
      %p482 = por %p480, %p481
      %p483 = scmp.ne.s32.totalorder %s472, %s475
      %p484 = scmp.eq.s32.totalorder %s42, 1
      %p485 = por %p483, %p484
      %p486 = scmp.ne.s32.totalorder %s475, %s476
      %p487 = scmp.eq.s32.totalorder %s42, 0
      %p488 = por %p486, %p487
      %p489 = scmp.ne.s32.totalorder %s475, %s476
      %p490 = scmp.eq.s32.totalorder %s43, 1
      %p491 = por %p489, %p490
      %p493 = scmp.ne.s32.totalorder %s476, %s492
      %p494 = scmp.eq.s32.totalorder %s43, 0
      %p495 = por %p493, %p494
      %s496 = ssub.s32 %s45, %s52
      %p497 = scmp.eq.s32.totalorder %s496, 0
      %s499 = sadd.s32 %s498, 1
      %s500 = scalar_select %p497, %s498, %s499
      %p503 = pneg %p497
      %p504 = scmp.eq.s32.totalorder %s37, 1
      %p505 = por %p503, %p504
      %p506 = scmp.ne.s32.totalorder %s498, %s501
      %p507 = scmp.eq.s32.totalorder %s37, 0
      %p508 = por %p506, %p507
      %p509 = scmp.ne.s32.totalorder %s498, %s501
      %p510 = scmp.eq.s32.totalorder %s42, 1
      %p511 = por %p509, %p510
      %p512 = scmp.ne.s32.totalorder %s501, %s502
      %p513 = scmp.eq.s32.totalorder %s42, 0
      %p514 = por %p512, %p513
      %p515 = scmp.ne.s32.totalorder %s501, %s502
      %p516 = scmp.eq.s32.totalorder %s43, 1
      %p517 = por %p515, %p516
      %p519 = scmp.ne.s32.totalorder %s502, %s518
      %p520 = scmp.eq.s32.totalorder %s43, 0
      %p521 = por %p519, %p520
      %s522 = ssub.s32 %s45, %s52
      %p523 = scmp.eq.s32.totalorder %s522, 0
      %s525 = sadd.s32 %s524, 1
      %s526 = scalar_select %p523, %s524, %s525
      %p529 = pneg %p523
      %p530 = scmp.eq.s32.totalorder %s37, 1
      %p531 = por %p529, %p530
      %p532 = scmp.ne.s32.totalorder %s524, %s527
      %p533 = scmp.eq.s32.totalorder %s37, 0
      %p534 = por %p532, %p533
      %p535 = scmp.ne.s32.totalorder %s524, %s527
      %p536 = scmp.eq.s32.totalorder %s42, 1
      %p537 = por %p535, %p536
      %p538 = scmp.ne.s32.totalorder %s527, %s528
      %p539 = scmp.eq.s32.totalorder %s42, 0
      %p540 = por %p538, %p539
      %p541 = scmp.ne.s32.totalorder %s527, %s528
      %p542 = scmp.eq.s32.totalorder %s43, 1
      %p543 = por %p541, %p542
      %p545 = scmp.ne.s32.totalorder %s528, %s544
      %p546 = scmp.eq.s32.totalorder %s43, 0
      %p547 = por %p545, %p546
      %s548 = ssub.s32 %s45, %s52
      %p549 = scmp.eq.s32.totalorder %s548, 0
      %s551 = sadd.s32 %s550, 1
      %s552 = scalar_select %p549, %s550, %s551
      %p555 = pneg %p549
      %p556 = scmp.eq.s32.totalorder %s37, 1
      %p557 = por %p555, %p556
      %p558 = scmp.ne.s32.totalorder %s550, %s553
      %p559 = scmp.eq.s32.totalorder %s37, 0
      %p560 = por %p558, %p559
      %p561 = scmp.ne.s32.totalorder %s550, %s553
      %p562 = scmp.eq.s32.totalorder %s42, 1
      %p563 = por %p561, %p562
      %p564 = scmp.ne.s32.totalorder %s553, %s554
      %p565 = scmp.eq.s32.totalorder %s42, 0
      %p566 = por %p564, %p565
      %p567 = scmp.ne.s32.totalorder %s553, %s554
      %p568 = scmp.eq.s32.totalorder %s43, 1
      %p569 = por %p567, %p568
      %p571 = scmp.ne.s32.totalorder %s554, %s570
      %p572 = scmp.eq.s32.totalorder %s43, 0
      %p573 = por %p571, %p572
      %s574 = ssub.s32 %s45, %s52
      %p575 = scmp.eq.s32.totalorder %s574, 0
      %s577 = sadd.s32 %s576, 1
      %s578 = scalar_select %p575, %s576, %s577
      %p581 = pneg %p575
      %p582 = scmp.eq.s32.totalorder %s37, 1
      %p583 = por %p581, %p582
      %p584 = scmp.ne.s32.totalorder %s576, %s579
      %p585 = scmp.eq.s32.totalorder %s37, 0
      %p586 = por %p584, %p585
      %p587 = scmp.ne.s32.totalorder %s576, %s579
      %p588 = scmp.eq.s32.totalorder %s42, 1
      %p589 = por %p587, %p588
      %p590 = scmp.ne.s32.totalorder %s579, %s580
      %p591 = scmp.eq.s32.totalorder %s42, 0
      %p592 = por %p590, %p591
      %p593 = scmp.ne.s32.totalorder %s579, %s580
      %p594 = scmp.eq.s32.totalorder %s43, 1
      %p595 = por %p593, %p594
      %p597 = scmp.ne.s32.totalorder %s580, %s596
      %p598 = scmp.eq.s32.totalorder %s43, 0
      %p599 = por %p597, %p598
      %s600 = ssub.s32 %s44, %s56
      %p601 = scmp.eq.s32.totalorder %s600, 0
      %s603 = sadd.s32 %s602, 1
      %s604 = scalar_select %p601, %s602, %s603
      %p607 = pneg %p601
      %p608 = scmp.eq.s32.totalorder %s37, 1
      %p609 = por %p607, %p608
      %p610 = scmp.ne.s32.totalorder %s602, %s605
      %p611 = scmp.eq.s32.totalorder %s37, 0
      %p612 = por %p610, %p611
      %p613 = scmp.ne.s32.totalorder %s602, %s605
      %p614 = scmp.eq.s32.totalorder %s42, 1
      %p615 = por %p613, %p614
      %p616 = scmp.ne.s32.totalorder %s605, %s606
      %p617 = scmp.eq.s32.totalorder %s42, 0
      %p618 = por %p616, %p617
      %p619 = scmp.ne.s32.totalorder %s605, %s606
      %p620 = scmp.eq.s32.totalorder %s43, 1
      %p621 = por %p619, %p620
      %p623 = scmp.ne.s32.totalorder %s606, %s622
      %p624 = scmp.eq.s32.totalorder %s43, 0
      %p625 = por %p623, %p624
      %p626 = scmp.le.s32.totalorder 1, %s37
      %p627 = scmp.lt.s32.totalorder %s37, 3
      %p628 = pnand %p626, %p627
      %p629 = pneg %p628
      // Predicated region
      $region9: #{tpu_custom_call.1} parent=5 // pred_check
        _
      $region10: #{tpu_custom_call.1} parent=5 // pred_check_branch
        %631 = sbr.rel (%p628) target = $region12
      $region11: #{tpu_custom_call.1} parent=5 // pred_region
        %s632 = ssub.s32 %s37, 1
        // Predicated region
        $region13: #{tpu_custom_call.1} parent=11 // pred_check
          %p633 = pneg %p75
        $region14: #{tpu_custom_call.1} parent=11 // pred_check_branch
          %635 = sbr.rel (%p633) target = $region16
        $region15: #{tpu_custom_call.1} parent=11 // pred_region
          %s636 = smul.u32 2, %s46
          %s638 = ssub.s32 256, 256
          %639 = vsyncadd [#allocation5], %s638
          %s640 = smul.addr %s636, 128
          %s641 = scalar_lea.hbm %s0, %s640
          %s642 = sshll.u32 [#allocation4], 4
          %s643 = int_to_ptr.vmem [resolvable:$true] %s642
          %648 = dma.hbm_to_vmem [thread:$0]  %s641, 256, %s643, [#allocation5], 128, 128, 8
        $region16: #{tpu_custom_call.1} parent=11 // pred_fallthru
          _
        // Predicated region
        $region17: #{tpu_custom_call.1} parent=11 // pred_check
          %p649 = pneg %p101
        $region18: #{tpu_custom_call.1} parent=11 // pred_check_branch
          %651 = sbr.rel (%p649) target = $region20
        $region19: #{tpu_custom_call.1} parent=11 // pred_region
          %s652 = smul.u32 2, %s46
          %s654 = ssub.s32 256, 256
          %655 = vsyncadd [#allocation8], %s654
          %s656 = smul.addr %s652, 128
          %s657 = scalar_lea.hbm %s1, %s656
          %s658 = sshll.u32 [#allocation7], 4
          %s659 = int_to_ptr.vmem [resolvable:$true] %s658
          %664 = dma.hbm_to_vmem [thread:$0]  %s657, 256, %s659, [#allocation8], 128, 128, 8
        $region20: #{tpu_custom_call.1} parent=11 // pred_fallthru
          _
        // Predicated region
        $region21: #{tpu_custom_call.1} parent=11 // pred_check
          %p665 = pneg %p122
        $region22: #{tpu_custom_call.1} parent=11 // pred_check_branch
          %667 = sbr.rel (%p665) target = $region24
        $region23: #{tpu_custom_call.1} parent=11 // pred_region
          %s669 = ssub.s32 128, 128
          %670 = vsyncadd [#allocation8], %s669
          %s672 = sshll.u32 [#allocation9], 4
          %s673 = int_to_ptr.vmem [resolvable:$true] %s672
          %675 = dma.hbm_to_vmem [thread:$0]  %s2, 128, %s673, [#allocation8]
        $region24: #{tpu_custom_call.1} parent=11 // pred_fallthru
          _
        // Predicated region
        $region25: #{tpu_custom_call.1} parent=11 // pred_check
          %p676 = pneg %p143
        $region26: #{tpu_custom_call.1} parent=11 // pred_check_branch
          %678 = sbr.rel (%p676) target = $region28
        $region27: #{tpu_custom_call.1} parent=11 // pred_region
          %s680 = ssub.s32 256, 256
          %681 = vsyncadd [#allocation11], %s680
          %s682 = sshll.u32 [#allocation10], 4
          %s683 = int_to_ptr.vmem [resolvable:$true] %s682
          %688 = dma.hbm_to_vmem [thread:$0]  %s3, 256, %s683, [#allocation11], 64, 64, 4
        $region28: #{tpu_custom_call.1} parent=11 // pred_fallthru
          _
        // Predicated region
        $region29: #{tpu_custom_call.1} parent=11 // pred_check
          %p689 = pneg %p164
        $region30: #{tpu_custom_call.1} parent=11 // pred_check_branch
          %691 = sbr.rel (%p689) target = $region32
        $region31: #{tpu_custom_call.1} parent=11 // pred_region
          %s693 = ssub.s32 128, 128
          %694 = vsyncadd [#allocation11], %s693
          %s695 = sshll.u32 [#allocation12], 4
          %s696 = int_to_ptr.vmem [resolvable:$true] %s695
          %701 = dma.hbm_to_vmem [thread:$0]  %s4, 128, %s696, [#allocation11], 64, 64, 4
        $region32: #{tpu_custom_call.1} parent=11 // pred_fallthru
          _
        // Predicated region
        $region33: #{tpu_custom_call.1} parent=11 // pred_check
          %p702 = pneg %p185
        $region34: #{tpu_custom_call.1} parent=11 // pred_check_branch
          %704 = sbr.rel (%p702) target = $region36
        $region35: #{tpu_custom_call.1} parent=11 // pred_region
          _
        $region36: #{tpu_custom_call.1} parent=11 // pred_fallthru
          _
        // Predicated region
        $region37: #{tpu_custom_call.1} parent=11 // pred_check
          %p705 = pneg %p206
        $region38: #{tpu_custom_call.1} parent=11 // pred_check_branch
          %707 = sbr.rel (%p705) target = $region40
        $region39: #{tpu_custom_call.1} parent=11 // pred_region
          %s709 = ssub.s32 16, 16
          %710 = vsyncadd [#allocation14], %s709
          %s712 = sshll.u32 [#allocation13], 4
          %s713 = int_to_ptr.vmem [resolvable:$true] %s712
          %715 = dma.hbm_to_vmem [thread:$0]  %s6, 16, %s713, [#allocation14]
        $region40: #{tpu_custom_call.1} parent=11 // pred_fallthru
          _
        // Predicated region
        $region41: #{tpu_custom_call.1} parent=11 // pred_check
          %p716 = pneg %p227
        $region42: #{tpu_custom_call.1} parent=11 // pred_check_branch
          %718 = sbr.rel (%p716) target = $region44
        $region43: #{tpu_custom_call.1} parent=11 // pred_region
          %s720 = ssub.s32 512, 512
          %721 = vsyncadd [#allocation14], %s720
          %s722 = sshll.u32 [#allocation15], 4
          %s723 = int_to_ptr.vmem [resolvable:$true] %s722
          %728 = dma.hbm_to_vmem [thread:$0]  %s7, 512, %s723, [#allocation14], 64, 64, 4
        $region44: #{tpu_custom_call.1} parent=11 // pred_fallthru
          _
        // Predicated region
        $region45: #{tpu_custom_call.1} parent=11 // pred_check
          %p729 = pneg %p248
        $region46: #{tpu_custom_call.1} parent=11 // pred_check_branch
          %731 = sbr.rel (%p729) target = $region48
        $region47: #{tpu_custom_call.1} parent=11 // pred_region
          %s733 = ssub.s32 16, 16
          %734 = vsyncadd [#allocation17], %s733
          %s736 = sshll.u32 [#allocation16], 4
          %s737 = int_to_ptr.vmem [resolvable:$true] %s736
          %739 = dma.hbm_to_vmem [thread:$0]  %s8, 16, %s737, [#allocation17]
        $region48: #{tpu_custom_call.1} parent=11 // pred_fallthru
          _
        // Predicated region
        $region49: #{tpu_custom_call.1} parent=11 // pred_check
          %p740 = pneg %p269
        $region50: #{tpu_custom_call.1} parent=11 // pred_check_branch
          %742 = sbr.rel (%p740) target = $region52
        $region51: #{tpu_custom_call.1} parent=11 // pred_region
          %s744 = ssub.s32 16, 16
          %745 = vsyncadd [#allocation17], %s744
          %s747 = sshll.u32 [#allocation18], 4
          %s748 = int_to_ptr.vmem [resolvable:$true] %s747
          %750 = dma.hbm_to_vmem [thread:$0]  %s9, 16, %s748, [#allocation17]
        $region52: #{tpu_custom_call.1} parent=11 // pred_fallthru
          _
        // Predicated region
        $region53: #{tpu_custom_call.1} parent=11 // pred_check
          %p751 = pneg %p290
        $region54: #{tpu_custom_call.1} parent=11 // pred_check_branch
          %753 = sbr.rel (%p751) target = $region56
        $region55: #{tpu_custom_call.1} parent=11 // pred_region
          %s755 = ssub.s32 128, 128
          %756 = vsyncadd [#allocation20], %s755
          %s758 = sshll.u32 [#allocation19], 4
          %s759 = int_to_ptr.vmem [resolvable:$true] %s758
          %761 = dma.hbm_to_vmem [thread:$0]  %s10, 128, %s759, [#allocation20]
        $region56: #{tpu_custom_call.1} parent=11 // pred_fallthru
          _
        // Predicated region
        $region57: #{tpu_custom_call.1} parent=11 // pred_check
          %p762 = pneg %p311
        $region58: #{tpu_custom_call.1} parent=11 // pred_check_branch
          %764 = sbr.rel (%p762) target = $region60
        $region59: #{tpu_custom_call.1} parent=11 // pred_region
          %s766 = ssub.s32 16, 16
          %767 = vsyncadd [#allocation20], %s766
          %s769 = sshll.u32 [#allocation21], 4
          %s770 = int_to_ptr.vmem [resolvable:$true] %s769
          %772 = dma.hbm_to_vmem [thread:$0]  %s11, 16, %s770, [#allocation20]
        $region60: #{tpu_custom_call.1} parent=11 // pred_fallthru
          _
        // Predicated region
        $region61: #{tpu_custom_call.1} parent=11 // pred_check
          %p773 = pneg %p332
        $region62: #{tpu_custom_call.1} parent=11 // pred_check_branch
          %775 = sbr.rel (%p773) target = $region64
        $region63: #{tpu_custom_call.1} parent=11 // pred_region
          %s777 = ssub.s32 16, 16
          %778 = vsyncadd [#allocation23], %s777
          %s780 = sshll.u32 [#allocation22], 4
          %s781 = int_to_ptr.vmem [resolvable:$true] %s780
          %783 = dma.hbm_to_vmem [thread:$0]  %s12, 16, %s781, [#allocation23]
        $region64: #{tpu_custom_call.1} parent=11 // pred_fallthru
          _
      $region12: #{tpu_custom_call.1} parent=5 // pred_fallthru
        _
      %p784 = scmp.lt.s32.totalorder %s37, 2
      // Predicated region
      $region65: #{tpu_custom_call.1} parent=5 // pred_check
        %p785 = pneg %p784
      $region66: #{tpu_custom_call.1} parent=5 // pred_check_branch
        %787 = sbr.rel (%p785) target = $region68
      $region67: #{tpu_custom_call.1} parent=5 // pred_region
        // Predicated region
        $region69: #{tpu_custom_call.1} parent=67 // pred_check
          %p788 = pneg %p352
        $region70: #{tpu_custom_call.1} parent=67 // pred_check_branch
          %790 = sbr.rel (%p788) target = $region72
        $region71: #{tpu_custom_call.1} parent=67 // pred_region
          %p791 = scmp.lt.s32.totalorder %s45, 1
          %s792 = scalar_select %p791, %s45, 1
          %s793 = smul.addr %s792, 16
          %s794 = smul.addr %s793, 4
          %s795 = scalar_lea.vmem %s13, %s794
        $region72: #{tpu_custom_call.1} parent=67 // pred_fallthru
          _
        // Predicated region
        $region73: #{tpu_custom_call.1} parent=67 // pred_check
          %p796 = pneg %p378
        $region74: #{tpu_custom_call.1} parent=67 // pred_check_branch
          %798 = sbr.rel (%p796) target = $region76
        $region75: #{tpu_custom_call.1} parent=67 // pred_region
          %p799 = scmp.lt.s32.totalorder %s45, 1
          %s800 = scalar_select %p799, %s45, 1
          %s801 = smul.addr %s800, 8
          %s802 = smul.addr %s801, 4
          %s803 = scalar_lea.vmem %s14, %s802
        $region76: #{tpu_custom_call.1} parent=67 // pred_fallthru
          _
        // Predicated region
        $region77: #{tpu_custom_call.1} parent=67 // pred_check
          %p804 = pneg %p404
        $region78: #{tpu_custom_call.1} parent=67 // pred_check_branch
          %806 = sbr.rel (%p804) target = $region80
        $region79: #{tpu_custom_call.1} parent=67 // pred_region
          %p807 = scmp.lt.s32.totalorder %s45, 1
          %s808 = scalar_select %p807, %s45, 1
          %s809 = scalar_lea.vmem %s15, %s808
        $region80: #{tpu_custom_call.1} parent=67 // pred_fallthru
          _
        // Predicated region
        $region81: #{tpu_custom_call.1} parent=67 // pred_check
          %p810 = pneg %p430
        $region82: #{tpu_custom_call.1} parent=67 // pred_check_branch
          %812 = sbr.rel (%p810) target = $region84
        $region83: #{tpu_custom_call.1} parent=67 // pred_region
          %p813 = scmp.lt.s32.totalorder %s45, 1
          %s814 = scalar_select %p813, %s45, 1
          %s815 = scalar_lea.vmem %s16, %s814
        $region84: #{tpu_custom_call.1} parent=67 // pred_fallthru
          _
        // Predicated region
        $region85: #{tpu_custom_call.1} parent=67 // pred_check
          %p816 = pneg %p456
        $region86: #{tpu_custom_call.1} parent=67 // pred_check_branch
          %818 = sbr.rel (%p816) target = $region88
        $region87: #{tpu_custom_call.1} parent=67 // pred_region
          %s819 = sand.u32 %s37, 1
          %s820 = scalar_lea.sflag [#allocation5], %s819
          %s821 = sand.u32 %s446, 1
          %s822 = smul.addr %s821, 32
          %s823 = scalar_lea.vmem [#allocation24], %s822
          %s825 = ssub.s32 512, 512
          %826 = vsyncadd %s820, %s825
          %s827 = smul.addr %s45, 8
          %s828 = smul.addr %s827, 64
          %s829 = scalar_lea.hbm %s17, %s828
          %s830 = sshll.u32 %s823, 4
          %s831 = int_to_ptr.vmem [resolvable:$true] %s830
          %836 = dma.hbm_to_vmem [thread:$0]  %s829, 512, %s831, %s820, 64, 64, 4
        $region88: #{tpu_custom_call.1} parent=67 // pred_fallthru
          _
        // Predicated region
        $region89: #{tpu_custom_call.1} parent=67 // pred_check
          %p837 = pneg %p482
        $region90: #{tpu_custom_call.1} parent=67 // pred_check_branch
          %839 = sbr.rel (%p837) target = $region92
        $region91: #{tpu_custom_call.1} parent=67 // pred_region
          %p840 = scmp.lt.s32.totalorder %s45, 1
          %s841 = scalar_select %p840, %s45, 1
          %s842 = scalar_lea.vmem %s18, %s841
        $region92: #{tpu_custom_call.1} parent=67 // pred_fallthru
          _
        // Predicated region
        $region93: #{tpu_custom_call.1} parent=67 // pred_check
          %p843 = pneg %p508
        $region94: #{tpu_custom_call.1} parent=67 // pred_check_branch
          %845 = sbr.rel (%p843) target = $region96
        $region95: #{tpu_custom_call.1} parent=67 // pred_region
          %p846 = scmp.lt.s32.totalorder %s45, 1
          %s847 = scalar_select %p846, %s45, 1
          %s848 = smul.addr %s847, 16
          %s849 = smul.addr %s848, 4
          %s850 = scalar_lea.vmem %s19, %s849
        $region96: #{tpu_custom_call.1} parent=67 // pred_fallthru
          _
        // Predicated region
        $region97: #{tpu_custom_call.1} parent=67 // pred_check
          %p851 = pneg %p534
        $region98: #{tpu_custom_call.1} parent=67 // pred_check_branch
          %853 = sbr.rel (%p851) target = $region100
        $region99: #{tpu_custom_call.1} parent=67 // pred_region
          %p854 = scmp.lt.s32.totalorder %s45, 1
          %s855 = scalar_select %p854, %s45, 1
          %s856 = scalar_lea.vmem %s20, %s855
        $region100: #{tpu_custom_call.1} parent=67 // pred_fallthru
          _
        // Predicated region
        $region101: #{tpu_custom_call.1} parent=67 // pred_check
          %p857 = pneg %p560
        $region102: #{tpu_custom_call.1} parent=67 // pred_check_branch
          %859 = sbr.rel (%p857) target = $region104
        $region103: #{tpu_custom_call.1} parent=67 // pred_region
          %p860 = scmp.lt.s32.totalorder %s45, 1
          %s861 = scalar_select %p860, %s45, 1
          %s862 = scalar_lea.vmem %s21, %s861
        $region104: #{tpu_custom_call.1} parent=67 // pred_fallthru
          _
        // Predicated region
        $region105: #{tpu_custom_call.1} parent=67 // pred_check
          %p863 = pneg %p586
        $region106: #{tpu_custom_call.1} parent=67 // pred_check_branch
          %865 = sbr.rel (%p863) target = $region108
        $region107: #{tpu_custom_call.1} parent=67 // pred_region
          %p866 = scmp.lt.s32.totalorder %s45, 1
          %s867 = scalar_select %p866, %s45, 1
          %s868 = scalar_lea.vmem %s22, %s867
        $region108: #{tpu_custom_call.1} parent=67 // pred_fallthru
          _
      $region68: #{tpu_custom_call.1} parent=5 // pred_fallthru
        _
      %p869 = scmp.le.s32.totalorder 1, %s37
      %p870 = scmp.lt.s32.totalorder %s37, 3
      %p871 = pnand %p869, %p870
      %p872 = pneg %p871
      // Predicated region
      $region109: #{tpu_custom_call.1} parent=5 // pred_check
        _
      $region110: #{tpu_custom_call.1} parent=5 // pred_check_branch
        %874 = sbr.rel (%p871) target = $region112
      $region111: #{tpu_custom_call.1} parent=5 // pred_region
        %s875 = ssub.s32 %s37, 1
        // Predicated region
        $region113: #{tpu_custom_call.1} parent=111 // pred_check
          %p876 = pneg %p75
        $region114: #{tpu_custom_call.1} parent=111 // pred_check_branch
          %878 = sbr.rel (%p876) target = $region116
        $region115: #{tpu_custom_call.1} parent=111 // pred_region
          %879 = dma.done [#allocation5], 256
        $region116: #{tpu_custom_call.1} parent=111 // pred_fallthru
          _
        // Predicated region
        $region117: #{tpu_custom_call.1} parent=111 // pred_check
          %p880 = pneg %p101
        $region118: #{tpu_custom_call.1} parent=111 // pred_check_branch
          %882 = sbr.rel (%p880) target = $region120
        $region119: #{tpu_custom_call.1} parent=111 // pred_region
          %883 = dma.done [#allocation8], 256
        $region120: #{tpu_custom_call.1} parent=111 // pred_fallthru
          _
        // Predicated region
        $region121: #{tpu_custom_call.1} parent=111 // pred_check
          %p884 = pneg %p122
        $region122: #{tpu_custom_call.1} parent=111 // pred_check_branch
          %886 = sbr.rel (%p884) target = $region124
        $region123: #{tpu_custom_call.1} parent=111 // pred_region
          %887 = dma.done [#allocation8], 128
        $region124: #{tpu_custom_call.1} parent=111 // pred_fallthru
          _
        // Predicated region
        $region125: #{tpu_custom_call.1} parent=111 // pred_check
          %p888 = pneg %p143
        $region126: #{tpu_custom_call.1} parent=111 // pred_check_branch
          %890 = sbr.rel (%p888) target = $region128
        $region127: #{tpu_custom_call.1} parent=111 // pred_region
          %891 = dma.done [#allocation11], 256
        $region128: #{tpu_custom_call.1} parent=111 // pred_fallthru
          _
        // Predicated region
        $region129: #{tpu_custom_call.1} parent=111 // pred_check
          %p892 = pneg %p164
        $region130: #{tpu_custom_call.1} parent=111 // pred_check_branch
          %894 = sbr.rel (%p892) target = $region132
        $region131: #{tpu_custom_call.1} parent=111 // pred_region
          %895 = dma.done [#allocation11], 128
        $region132: #{tpu_custom_call.1} parent=111 // pred_fallthru
          _
        // Predicated region
        $region133: #{tpu_custom_call.1} parent=111 // pred_check
          %p896 = pneg %p206
        $region134: #{tpu_custom_call.1} parent=111 // pred_check_branch
          %898 = sbr.rel (%p896) target = $region136
        $region135: #{tpu_custom_call.1} parent=111 // pred_region
          %899 = dma.done [#allocation14], 16
        $region136: #{tpu_custom_call.1} parent=111 // pred_fallthru
          _
        // Predicated region
        $region137: #{tpu_custom_call.1} parent=111 // pred_check
          %p900 = pneg %p227
        $region138: #{tpu_custom_call.1} parent=111 // pred_check_branch
          %902 = sbr.rel (%p900) target = $region140
        $region139: #{tpu_custom_call.1} parent=111 // pred_region
          %903 = dma.done [#allocation14], 512
        $region140: #{tpu_custom_call.1} parent=111 // pred_fallthru
          _
        // Predicated region
        $region141: #{tpu_custom_call.1} parent=111 // pred_check
          %p904 = pneg %p248
        $region142: #{tpu_custom_call.1} parent=111 // pred_check_branch
          %906 = sbr.rel (%p904) target = $region144
        $region143: #{tpu_custom_call.1} parent=111 // pred_region
          %907 = dma.done [#allocation17], 16
        $region144: #{tpu_custom_call.1} parent=111 // pred_fallthru
          _
        // Predicated region
        $region145: #{tpu_custom_call.1} parent=111 // pred_check
          %p908 = pneg %p269
        $region146: #{tpu_custom_call.1} parent=111 // pred_check_branch
          %910 = sbr.rel (%p908) target = $region148
        $region147: #{tpu_custom_call.1} parent=111 // pred_region
          %911 = dma.done [#allocation17], 16
        $region148: #{tpu_custom_call.1} parent=111 // pred_fallthru
          _
        // Predicated region
        $region149: #{tpu_custom_call.1} parent=111 // pred_check
          %p912 = pneg %p290
        $region150: #{tpu_custom_call.1} parent=111 // pred_check_branch
          %914 = sbr.rel (%p912) target = $region152
        $region151: #{tpu_custom_call.1} parent=111 // pred_region
          %915 = dma.done [#allocation20], 128
        $region152: #{tpu_custom_call.1} parent=111 // pred_fallthru
          _
        // Predicated region
        $region153: #{tpu_custom_call.1} parent=111 // pred_check
          %p916 = pneg %p311
        $region154: #{tpu_custom_call.1} parent=111 // pred_check_branch
          %918 = sbr.rel (%p916) target = $region156
        $region155: #{tpu_custom_call.1} parent=111 // pred_region
          %919 = dma.done [#allocation20], 16
        $region156: #{tpu_custom_call.1} parent=111 // pred_fallthru
          _
        // Predicated region
        $region157: #{tpu_custom_call.1} parent=111 // pred_check
          %p920 = pneg %p332
        $region158: #{tpu_custom_call.1} parent=111 // pred_check_branch
          %922 = sbr.rel (%p920) target = $region160
        $region159: #{tpu_custom_call.1} parent=111 // pred_region
          %923 = dma.done [#allocation23], 16
        $region160: #{tpu_custom_call.1} parent=111 // pred_fallthru
          _
        %s924 = sand.u32 %s42, 1
        %s925 = scalar_lea.sflag [#allocation5], %s924
        %s926 = sand.u32 %s449, 1
        %s927 = smul.addr %s926, 32
        %s928 = scalar_lea.vmem [#allocation24], %s927
        // Predicated region
        $region161: #{tpu_custom_call.1} parent=111 // pred_check
          %p929 = pneg %p462
        $region162: #{tpu_custom_call.1} parent=111 // pred_check_branch
          %931 = sbr.rel (%p929) target = $region164
        $region163: #{tpu_custom_call.1} parent=111 // pred_region
          %932 = dma.done %s925, 512
        $region164: #{tpu_custom_call.1} parent=111 // pred_fallthru
          _
        %p933 = pneg %p75
        %p934 = pneg %p72
        %p935 = pneg %p101
        %p936 = pneg %p98
        %p937 = pneg %p122
        %p938 = pneg %p119
        %p939 = pneg %p143
        %p940 = pneg %p140
        %p941 = pneg %p164
        %p942 = pneg %p161
        %p943 = pneg %p185
        %p944 = pneg %p182
        %p945 = pneg %p206
        %p946 = pneg %p203
        %p947 = pneg %p227
        %p948 = pneg %p224
        %p949 = pneg %p248
        %p950 = pneg %p245
        %p951 = pneg %p269
        %p952 = pneg %p266
        %p953 = pneg %p290
        %p954 = pneg %p287
        %p955 = pneg %p311
        %p956 = pneg %p308
        %p957 = pneg %p332
        %p958 = pneg %p329
        %p959 = scmp.lt.s32.totalorder %s47, 1
        %s960 = scalar_select %p959, %s47, 1
        %s961 = smul.addr %s960, 16
        %s962 = smul.addr %s961, 4
        %s963 = scalar_lea.vmem %s13, %s962
        %p964 = pneg %p358
        %p965 = pneg %p355
        %p966 = scmp.lt.s32.totalorder %s47, 1
        %s967 = scalar_select %p966, %s47, 1
        %s968 = smul.addr %s967, 8
        %s969 = smul.addr %s968, 4
        %s970 = scalar_lea.vmem %s14, %s969
        %p971 = pneg %p384
        %p972 = pneg %p381
        %p973 = scmp.lt.s32.totalorder %s47, 1
        %s974 = scalar_select %p973, %s47, 1
        %s975 = scalar_lea.vmem %s15, %s974
        %p976 = pneg %p410
        %p977 = pneg %p407
        %p978 = scmp.lt.s32.totalorder %s47, 1
        %s979 = scalar_select %p978, %s47, 1
        %s980 = scalar_lea.vmem %s16, %s979
        %p981 = pneg %p436
        %p982 = pneg %p433
        %s983 = sand.u32 %s42, 1
        %s984 = scalar_lea.sflag [#allocation5], %s983
        %s985 = sand.u32 %s449, 1
        %s986 = smul.addr %s985, 32
        %s987 = scalar_lea.vmem [#allocation24], %s986
        %p988 = pneg %p462
        %p989 = pneg %p459
        %p990 = scmp.lt.s32.totalorder %s47, 1
        %s991 = scalar_select %p990, %s47, 1
        %s992 = scalar_lea.vmem %s18, %s991
        %p993 = pneg %p488
        %p994 = pneg %p485
        %p995 = scmp.lt.s32.totalorder %s47, 1
        %s996 = scalar_select %p995, %s47, 1
        %s997 = smul.addr %s996, 16
        %s998 = smul.addr %s997, 4
        %s999 = scalar_lea.vmem %s19, %s998
        %p1000 = pneg %p514
        %p1001 = pneg %p511
        %p1002 = scmp.lt.s32.totalorder %s47, 1
        %s1003 = scalar_select %p1002, %s47, 1
        %s1004 = scalar_lea.vmem %s20, %s1003
        %p1005 = pneg %p540
        %p1006 = pneg %p537
        %p1007 = scmp.lt.s32.totalorder %s47, 1
        %s1008 = scalar_select %p1007, %s47, 1
        %s1009 = scalar_lea.vmem %s21, %s1008
        %p1010 = pneg %p566
        %p1011 = pneg %p563
        %p1012 = scmp.lt.s32.totalorder %s47, 1
        %s1013 = scalar_select %p1012, %s47, 1
        %s1014 = scalar_lea.vmem %s22, %s1013
        %p1015 = pneg %p592
        %p1016 = pneg %p589
        %p1017 = pneg %p618
        %p1018 = pneg %p615
        %s1019 = smul.u32 2, %s46
        %s1020 = smul.u32 2, %s46
        %p1021 = scmp.lt.s32.totalorder %s47, 1
        %s1022 = scalar_select %p1021, %s47, 1
        %s1023 = smul.addr %s1022, 16
        %s1024 = smul.addr %s1023, 4
        %s1025 = scalar_lea.vmem %s13, %s1024
        %p1026 = scmp.lt.s32.totalorder %s47, 1
        %s1027 = scalar_select %p1026, %s47, 1
        %s1028 = smul.addr %s1027, 8
        %s1029 = smul.addr %s1028, 4
        %s1030 = scalar_lea.vmem %s14, %s1029
        %p1031 = scmp.lt.s32.totalorder %s47, 1
        %s1032 = scalar_select %p1031, %s47, 1
        %s1033 = scalar_lea.vmem %s15, %s1032
        %p1034 = scmp.lt.s32.totalorder %s47, 1
        %s1035 = scalar_select %p1034, %s47, 1
        %s1036 = scalar_lea.vmem %s16, %s1035
        %p1037 = scmp.lt.s32.totalorder %s47, 1
        %s1038 = scalar_select %p1037, %s47, 1
        %s1039 = scalar_lea.vmem %s18, %s1038
        %p1040 = scmp.lt.s32.totalorder %s47, 1
        %s1041 = scalar_select %p1040, %s47, 1
        %s1042 = smul.addr %s1041, 16
        %s1043 = smul.addr %s1042, 4
        %s1044 = scalar_lea.vmem %s19, %s1043
        %p1045 = scmp.lt.s32.totalorder %s47, 1
        %s1046 = scalar_select %p1045, %s47, 1
        %s1047 = scalar_lea.vmem %s20, %s1046
        %p1048 = scmp.lt.s32.totalorder %s47, 1
        %s1049 = scalar_select %p1048, %s47, 1
        %s1050 = scalar_lea.vmem %s21, %s1049
        %p1051 = scmp.lt.s32.totalorder %s47, 1
        %s1052 = scalar_select %p1051, %s47, 1
        %s1053 = scalar_lea.vmem %s22, %s1052
        %s1054 = smul.u32 2, %s46
        %p1056 = scmp.eq.s32.totalorder %s47, 0
        // Predicated region
        $region165: #{tpu_custom_call.1} parent=111 // pred_check
          %p1057 = pneg %p1056
        $region166: #{tpu_custom_call.1} parent=111 // pred_check_branch
          %1059 = sbr.rel (%p1057) target = $region168
        $region167: #{tpu_custom_call.1} parent=111 // pred_region
          %v1060 = vld [vmem:[#allocation4] sm:$0xff]
          %v1061 = vld [vmem:[#allocation4 + $0x8] sm:$0xff]
          %v1062 = vpack.c.bf16 %v1061, %v1060
          %v1063 = vld [vmem:[#allocation7] sm:$0xff]
          %v1064 = vld [vmem:[#allocation7 + $0x8] sm:$0xff]
          %v1065 = vpack.c.bf16 %v1064, %v1063
          %v1066 = vld [vmem:[#allocation10] sm:$0xf]
          %v1067 = vld [vmem:[#allocation10 + $0x4] sm:$0xf]
          %v1068 = vld [vmem:[#allocation10 + $0x8] sm:$0xf]
          %v1069 = vld [vmem:[#allocation10 + $0xc] sm:$0xf]
          %v1070 = vld [vmem:[#allocation12] sm:$0xf]
          %v1071 = vld [vmem:[#allocation12 + $0x4] sm:$0xf]
          %v1074 = vunpack.c.l.b16 %v1070
          %v1075 = vunpack.c.l.b16 %v1071
          %v1076 = vpack.c.b16 %v1075, %v1074
          %vm1078 = vcmask 130048
          %v1080 = vsel %vm1078, %v1065, 0
          %1082 = vmatprep.subr.bf16.mxu0 0
          %1083 = vmatpush1.bf16.msra.mxu0 %v1076
          %1084 = vmatprep.subr.bf16.mxu0 0
          %1085 = vmatpush1.bf16.msra.mxu0 0
          %1086 = vmatprep.subr.bf16.mxu0 0
          %1087 = vmatpush1.bf16.msra.mxu0 0
          %1088 = vmatprep.subr.bf16.mxu0 0
          %1089 = vmatpush1.bf16.msra.mxu0 0
          %1090 = vmatprep.subr.bf16.mxu0 0
          %1091 = vmatpush1.bf16.msra.mxu0 0
          %1092 = vmatprep.subr.bf16.mxu0 0
          %1093 = vmatpush1.bf16.msra.mxu0 0
          %1094 = vmatprep.subr.bf16.mxu0 0
          %1095 = vmatpush1.bf16.msra.mxu0 0
          %1096 = vmatprep.subr.bf16.mxu0 0
          %1097 = vmatpush1.bf16.msra.mxu0 0
          %1098 = vmatprep.subr.bf16.mxu0 0
          %1099 = vmatpush1.bf16.msra.mxu0 0
          %1100 = vmatprep.subr.bf16.mxu0 0
          %1101 = vmatpush1.bf16.msra.mxu0 0
          %1102 = vmatprep.subr.bf16.mxu0 0
          %1103 = vmatpush1.bf16.msra.mxu0 0
          %1104 = vmatprep.subr.bf16.mxu0 0
          %1105 = vmatpush1.bf16.msra.mxu0 0
          %1106 = vmatprep.subr.bf16.mxu0 0
          %1107 = vmatpush1.bf16.msra.mxu0 0
          %1108 = vmatprep.subr.bf16.mxu0 0
          %1109 = vmatpush1.bf16.msra.mxu0 0
          %1110 = vmatprep.subr.bf16.mxu0 0
          %1111 = vmatpush1.bf16.msra.mxu0 0
          %1112 = vmatprep.subr.bf16.mxu0 0
          %1113 = vmatpush1.bf16.msra.mxu0 0
          %1114 = vmatprep.mubr.bf16.mxu0 0
          %1115 = vmatmul.mubr.bf16.gmra.mrb[0].mxu0 %v1080
          %v1116 = vpop.f32.mrb[0].mxu0
          %v1117 = vadd.f32 0.0, %v1116
          %v1118 = vpop.f32.mrb[0].mxu0
          %v1119 = vpop.f32.mrb[0].mxu0
          %v1120 = vadd.f32 0.0, %v1119
          %v1121 = vpop.f32.mrb[0].mxu0
          %1122 = vdwg.mxu0
          %v1127 = vunpack.c.l.b16 %v1066
          %v1128 = vunpack.c.l.b16 %v1067
          %v1129 = vunpack.c.l.b16 %v1068
          %v1130 = vunpack.c.l.b16 %v1069
          %v1131 = vpack.c.b16 %v1128, %v1127
          %v1132 = vpack.c.b16 %v1130, %v1129
          %vm1135 = vcmask 261120
          %v1137 = vsel %vm1135, %v1062, 0
          %1139 = vmatprep.subr.bf16.mxu0 0
          %1140 = vmatpush1.bf16.msra.mxu0 %v1131
          %1141 = vmatprep.subr.bf16.mxu0 0
          %1142 = vmatpush1.bf16.msra.mxu0 %v1132
          %1143 = vmatprep.subr.bf16.mxu0 0
          %1144 = vmatpush1.bf16.msra.mxu0 0
          %1145 = vmatprep.subr.bf16.mxu0 0
          %1146 = vmatpush1.bf16.msra.mxu0 0
          %1147 = vmatprep.subr.bf16.mxu0 0
          %1148 = vmatpush1.bf16.msra.mxu0 0
          %1149 = vmatprep.subr.bf16.mxu0 0
          %1150 = vmatpush1.bf16.msra.mxu0 0
          %1151 = vmatprep.subr.bf16.mxu0 0
          %1152 = vmatpush1.bf16.msra.mxu0 0
          %1153 = vmatprep.subr.bf16.mxu0 0
          %1154 = vmatpush1.bf16.msra.mxu0 0
          %1155 = vmatprep.subr.bf16.mxu0 0
          %1156 = vmatpush1.bf16.msra.mxu0 0
          %1157 = vmatprep.subr.bf16.mxu0 0
          %1158 = vmatpush1.bf16.msra.mxu0 0
          %1159 = vmatprep.subr.bf16.mxu0 0
          %1160 = vmatpush1.bf16.msra.mxu0 0
          %1161 = vmatprep.subr.bf16.mxu0 0
          %1162 = vmatpush1.bf16.msra.mxu0 0
          %1163 = vmatprep.subr.bf16.mxu0 0
          %1164 = vmatpush1.bf16.msra.mxu0 0
          %1165 = vmatprep.subr.bf16.mxu0 0
          %1166 = vmatpush1.bf16.msra.mxu0 0
          %1167 = vmatprep.subr.bf16.mxu0 0
          %1168 = vmatpush1.bf16.msra.mxu0 0
          %1169 = vmatprep.subr.bf16.mxu0 0
          %1170 = vmatpush1.bf16.msra.mxu0 0
          %1171 = vmatprep.mubr.bf16.mxu0 0
          %1172 = vmatmul.mubr.bf16.gmra.mrb[0].mxu0 %v1137
          %v1173 = vpop.f32.mrb[0].mxu0
          %v1174 = vadd.f32 %v1117, %v1173
          %v1175 = vpop.f32.mrb[0].mxu0
          %v1176 = vpop.f32.mrb[0].mxu0
          %v1177 = vadd.f32 %v1120, %v1176
          %v1178 = vpop.f32.mrb[0].mxu0
          %1179 = vdwg.mxu0
          %v1180 = vld [vmem:[%s5] sm:$0x1]
          %v1181 = vld [vmem:[#allocation13] sm:$0x1]
          %vm1182 = vcmask 523264
          %v1183 = vsel %vm1182, %v1174, 0.0
          %1184 = vadd.xlane.f32.xlu0 %v1183
          %v1185 = vpop.xlane.xlu0 %1184
          %v1186 = vsel %vm1182, %v1177, 0.0
          %1187 = vadd.xlane.f32.xlu0 %v1186
          %v1188 = vpop.xlane.xlu0 %1187
          %v1189 = vrcp.pop 64.0
          %v1190 = vmul.f32 %v1185, %v1189
          %v1191 = vmul.f32 %v1188, %v1189
          %v1192 = vsub.f32 %v1174, %v1190
          %v1193 = vsub.f32 %v1177, %v1191
          %v1194 = vmul.f32 %v1192, %v1192
          %v1195 = vmul.f32 %v1193, %v1193
          %v1196 = vsel %vm1182, %v1194, 0.0
          %1197 = vadd.xlane.f32.xlu0 %v1196
          %v1198 = vpop.xlane.xlu0 %1197
          %v1199 = vsel %vm1182, %v1195, 0.0
          %1200 = vadd.xlane.f32.xlu0 %v1199
          %v1201 = vpop.xlane.xlu0 %1200
          %v1202 = vmul.f32 %v1198, %v1189
          %v1203 = vmul.f32 %v1201, %v1189
          %v1204 = vadd.f32 %v1202, 1e-05
          %v1205 = vadd.f32 %v1203, 1e-05
          %v1206 = vrsqrt.pop %v1204
          %v1207 = vrsqrt.pop %v1205
          %v1208 = vmul.f32 %v1192, %v1206
          %v1209 = vmul.f32 %v1193, %v1207
          %v1211 = vlaneseq
          %v1212 = vshrl.u32 %v1211, 7
          %v1213 = vsub.s32 0, %v1212
          %v1214 = vrot.slane %v1180, %v1213
          %v1216 = vmul.f32 %v1208, %v1214
          %v1217 = vmul.f32 %v1209, %v1214
          %v1219 = vlaneseq
          %v1220 = vshrl.u32 %v1219, 7
          %v1221 = vsub.s32 0, %v1220
          %v1222 = vrot.slane %v1181, %v1221
          %v1224 = vadd.f32 %v1216, %v1222
          %v1225 = vadd.f32 %v1217, %v1222
          %v1226 = vmax.f32 %v1224, 0.0
          %v1227 = vmax.f32 %v1225, 0.0
          %v1228 = vpack.c.bf16 %v1227, %v1226
          %v1229 = vld [vmem:[#allocation15] sm:$0xf]
          %v1230 = vld [vmem:[#allocation15 + $0x4] sm:$0xf]
          %v1231 = vld [vmem:[#allocation15 + $0x8] sm:$0xf]
          %v1232 = vld [vmem:[#allocation15 + $0xc] sm:$0xf]
          %v1233 = vld [vmem:[#allocation15 + $0x10] sm:$0xf]
          %v1234 = vld [vmem:[#allocation15 + $0x14] sm:$0xf]
          %v1235 = vld [vmem:[#allocation15 + $0x18] sm:$0xf]
          %v1236 = vld [vmem:[#allocation15 + $0x1c] sm:$0xf]
          %v1245 = vunpack.c.l.b16 %v1229
          %v1246 = vunpack.c.l.b16 %v1230
          %v1247 = vunpack.c.l.b16 %v1231
          %v1248 = vunpack.c.l.b16 %v1232
          %v1249 = vunpack.c.l.b16 %v1233
          %v1250 = vunpack.c.l.b16 %v1234
          %v1251 = vunpack.c.l.b16 %v1235
          %v1252 = vunpack.c.l.b16 %v1236
          %v1253 = vpack.c.b16 %v1246, %v1245
          %v1254 = vpack.c.b16 %v1248, %v1247
          %v1255 = vpack.c.b16 %v1250, %v1249
          %v1256 = vpack.c.b16 %v1252, %v1251
          %v1262 = vsel %vm1182, %v1228, 0
          %1264 = vmatprep.subr.bf16.mxu0 0
          %1265 = vmatpush1.bf16.msra.mxu0 %v1253
          %1266 = vmatprep.subr.bf16.mxu0 0
          %1267 = vmatpush1.bf16.msra.mxu0 %v1254
          %1268 = vmatprep.subr.bf16.mxu0 0
          %1269 = vmatpush1.bf16.msra.mxu0 %v1255
          %1270 = vmatprep.subr.bf16.mxu0 0
          %1271 = vmatpush1.bf16.msra.mxu0 %v1256
          %1272 = vmatprep.subr.bf16.mxu0 0
          %1273 = vmatpush1.bf16.msra.mxu0 0
          %1274 = vmatprep.subr.bf16.mxu0 0
          %1275 = vmatpush1.bf16.msra.mxu0 0
          %1276 = vmatprep.subr.bf16.mxu0 0
          %1277 = vmatpush1.bf16.msra.mxu0 0
          %1278 = vmatprep.subr.bf16.mxu0 0
          %1279 = vmatpush1.bf16.msra.mxu0 0
          %1280 = vmatprep.subr.bf16.mxu0 0
          %1281 = vmatpush1.bf16.msra.mxu0 0
          %1282 = vmatprep.subr.bf16.mxu0 0
          %1283 = vmatpush1.bf16.msra.mxu0 0
          %1284 = vmatprep.subr.bf16.mxu0 0
          %1285 = vmatpush1.bf16.msra.mxu0 0
          %1286 = vmatprep.subr.bf16.mxu0 0
          %1287 = vmatpush1.bf16.msra.mxu0 0
          %1288 = vmatprep.subr.bf16.mxu0 0
          %1289 = vmatpush1.bf16.msra.mxu0 0
          %1290 = vmatprep.subr.bf16.mxu0 0
          %1291 = vmatpush1.bf16.msra.mxu0 0
          %1292 = vmatprep.subr.bf16.mxu0 0
          %1293 = vmatpush1.bf16.msra.mxu0 0
          %1294 = vmatprep.subr.bf16.mxu0 0
          %1295 = vmatpush1.bf16.msra.mxu0 0
          %1296 = vmatprep.mubr.bf16.mxu0 0
          %1297 = vmatmul.mubr.bf16.gmra.mrb[0].mxu0 %v1262
          %v1298 = vpop.f32.mrb[0].mxu0
          %v1299 = vadd.f32 0.0, %v1298
          %v1300 = vpop.f32.mrb[0].mxu0
          %v1301 = vpop.f32.mrb[0].mxu0
          %v1302 = vadd.f32 0.0, %v1301
          %v1303 = vpop.f32.mrb[0].mxu0
          %1304 = vdwg.mxu0
          %v1305 = vld [vmem:[#allocation16] sm:$0x1]
          %v1306 = vld [vmem:[#allocation18] sm:$0x1]
          %v1307 = vsel %vm1182, %v1299, 0.0
          %1308 = vadd.xlane.f32.xlu0 %v1307
          %v1309 = vpop.xlane.xlu0 %1308
          %v1310 = vsel %vm1182, %v1302, 0.0
          %1311 = vadd.xlane.f32.xlu0 %v1310
          %v1312 = vpop.xlane.xlu0 %1311
          %v1313 = vmul.f32 %v1309, %v1189
          %v1314 = vmul.f32 %v1312, %v1189
          %v1315 = vsub.f32 %v1299, %v1313
          %v1316 = vsub.f32 %v1302, %v1314
          %v1317 = vmul.f32 %v1315, %v1315
          %v1318 = vmul.f32 %v1316, %v1316
          %v1319 = vsel %vm1182, %v1317, 0.0
          %1320 = vadd.xlane.f32.xlu0 %v1319
          %v1321 = vpop.xlane.xlu0 %1320
          %v1322 = vsel %vm1182, %v1318, 0.0
          %1323 = vadd.xlane.f32.xlu0 %v1322
          %v1324 = vpop.xlane.xlu0 %1323
          %v1325 = vmul.f32 %v1321, %v1189
          %v1326 = vmul.f32 %v1324, %v1189
          %v1327 = vadd.f32 %v1325, 1e-05
          %v1328 = vadd.f32 %v1326, 1e-05
          %v1329 = vrsqrt.pop %v1327
          %v1330 = vrsqrt.pop %v1328
          %v1331 = vmul.f32 %v1315, %v1329
          %v1332 = vmul.f32 %v1316, %v1330
          %v1334 = vlaneseq
          %v1335 = vshrl.u32 %v1334, 7
          %v1336 = vsub.s32 0, %v1335
          %v1337 = vrot.slane %v1305, %v1336
          %v1339 = vmul.f32 %v1331, %v1337
          %v1340 = vmul.f32 %v1332, %v1337
          %v1342 = vlaneseq
          %v1343 = vshrl.u32 %v1342, 7
          %v1344 = vsub.s32 0, %v1343
          %v1345 = vrot.slane %v1306, %v1344
          %v1347 = vadd.f32 %v1339, %v1345
          %v1348 = vadd.f32 %v1340, %v1345
          %v1349 = vld [vmem:[#allocation19] sm:$0xff]
          %v1350 = vadd.f32 %v1347, %v1349
          %v1351 = vadd.f32 %v1348, %v1349
          %v1352 = vld [vmem:[#allocation21] sm:$0x1]
          %v1353 = vld [vmem:[#allocation22] sm:$0x1]
          %v1354 = vsel %vm1182, %v1350, 0.0
          %1355 = vadd.xlane.f32.xlu0 %v1354
          %v1356 = vpop.xlane.xlu0 %1355
          %v1357 = vsel %vm1182, %v1351, 0.0
          %1358 = vadd.xlane.f32.xlu0 %v1357
          %v1359 = vpop.xlane.xlu0 %1358
          %v1360 = vmul.f32 %v1356, %v1189
          %v1361 = vmul.f32 %v1359, %v1189
          %v1362 = vsub.f32 %v1350, %v1360
          %v1363 = vsub.f32 %v1351, %v1361
          %v1364 = vmul.f32 %v1362, %v1362
          %v1365 = vmul.f32 %v1363, %v1363
          %v1366 = vsel %vm1182, %v1364, 0.0
          %1367 = vadd.xlane.f32.xlu0 %v1366
          %v1368 = vpop.xlane.xlu0 %1367
          %v1369 = vsel %vm1182, %v1365, 0.0
          %1370 = vadd.xlane.f32.xlu0 %v1369
          %v1371 = vpop.xlane.xlu0 %1370
          %v1372 = vmul.f32 %v1368, %v1189
          %v1373 = vmul.f32 %v1371, %v1189
          %v1374 = vadd.f32 %v1372, 1e-06
          %v1375 = vadd.f32 %v1373, 1e-06
          %v1376 = vrsqrt.pop %v1374
          %v1377 = vrsqrt.pop %v1375
          %v1378 = vmul.f32 %v1362, %v1376
          %v1379 = vmul.f32 %v1363, %v1377
          %v1381 = vlaneseq
          %v1382 = vshrl.u32 %v1381, 7
          %v1383 = vsub.s32 0, %v1382
          %v1384 = vrot.slane %v1352, %v1383
          %v1386 = vmul.f32 %v1378, %v1384
          %v1387 = vmul.f32 %v1379, %v1384
          %v1389 = vlaneseq
          %v1390 = vshrl.u32 %v1389, 7
          %v1391 = vsub.s32 0, %v1390
          %v1392 = vrot.slane %v1353, %v1391
          %v1394 = vadd.f32 %v1386, %v1392
          %v1395 = vadd.f32 %v1387, %v1392
          %1396 = vst.msk [vmem:[#allocation2] sm:$0xff] %vm1182, %v1394
          %1397 = vst.msk [vmem:[#allocation2 + $0x8] sm:$0xff] %vm1182, %v1395
        $region168: #{tpu_custom_call.1} parent=111 // pred_fallthru
          _
        %v1398 = vld [vmem:[#allocation2] sm:$0xff]
        %v1399 = vld [vmem:[#allocation2 + $0x8] sm:$0xff]
        %v1400 = vpack.c.bf16 %v1399, %v1398
        %v1401 = vld [vmem:[%s1025] sm:$0xff]
        %v1402 = vld [vmem:[%s1025 + $0x8] sm:$0xff]
        %v1403 = vld [vmem:[%s1025 + $0x10] sm:$0xff]
        %v1404 = vld [vmem:[%s1025 + $0x18] sm:$0xff]
        %v1405 = vld [vmem:[%s1025 + $0x20] sm:$0xff]
        %v1406 = vld [vmem:[%s1025 + $0x28] sm:$0xff]
        %v1407 = vld [vmem:[%s1025 + $0x30] sm:$0xff]
        %v1408 = vld [vmem:[%s1025 + $0x38] sm:$0xff]
        %v1417 = vunpack.c.l.b16 %v1401
        %v1418 = vunpack.c.h.b16 %v1401
        %v1419 = vunpack.c.l.b16 %v1402
        %v1420 = vunpack.c.h.b16 %v1402
        %v1421 = vunpack.c.l.b16 %v1403
        %v1422 = vunpack.c.h.b16 %v1403
        %v1423 = vunpack.c.l.b16 %v1404
        %v1424 = vunpack.c.h.b16 %v1404
        %v1425 = vunpack.c.l.b16 %v1405
        %v1426 = vunpack.c.h.b16 %v1405
        %v1427 = vunpack.c.l.b16 %v1406
        %v1428 = vunpack.c.h.b16 %v1406
        %v1429 = vunpack.c.l.b16 %v1407
        %v1430 = vunpack.c.h.b16 %v1407
        %v1431 = vunpack.c.l.b16 %v1408
        %v1432 = vunpack.c.h.b16 %v1408
        %v1433 = vpack.c.b16 %v1419, %v1417
        %v1434 = vpack.c.b16 %v1420, %v1418
        %v1435 = vpack.c.b16 %v1423, %v1421
        %v1436 = vpack.c.b16 %v1424, %v1422
        %v1437 = vpack.c.b16 %v1427, %v1425
        %v1438 = vpack.c.b16 %v1428, %v1426
        %v1439 = vpack.c.b16 %v1431, %v1429
        %v1440 = vpack.c.b16 %v1432, %v1430
        %vm1449 = vcmask 523264
        %v1451 = vsel %vm1449, %v1400, 0
        %1453 = vmatprep.subr.bf16.mxu0 %v1434
        %1454 = vmatpush1.bf16.msra.mxu0 %v1433
        %1455 = vmatprep.subr.bf16.mxu0 %v1436
        %1456 = vmatpush1.bf16.msra.mxu0 %v1435
        %1457 = vmatprep.subr.bf16.mxu0 %v1438
        %1458 = vmatpush1.bf16.msra.mxu0 %v1437
        %1459 = vmatprep.subr.bf16.mxu0 %v1440
        %1460 = vmatpush1.bf16.msra.mxu0 %v1439
        %1461 = vmatprep.subr.bf16.mxu0 0
        %1462 = vmatpush1.bf16.msra.mxu0 0
        %1463 = vmatprep.subr.bf16.mxu0 0
        %1464 = vmatpush1.bf16.msra.mxu0 0
        %1465 = vmatprep.subr.bf16.mxu0 0
        %1466 = vmatpush1.bf16.msra.mxu0 0
        %1467 = vmatprep.subr.bf16.mxu0 0
        %1468 = vmatpush1.bf16.msra.mxu0 0
        %1469 = vmatprep.subr.bf16.mxu0 0
        %1470 = vmatpush1.bf16.msra.mxu0 0
        %1471 = vmatprep.subr.bf16.mxu0 0
        %1472 = vmatpush1.bf16.msra.mxu0 0
        %1473 = vmatprep.subr.bf16.mxu0 0
        %1474 = vmatpush1.bf16.msra.mxu0 0
        %1475 = vmatprep.subr.bf16.mxu0 0
        %1476 = vmatpush1.bf16.msra.mxu0 0
        %1477 = vmatprep.subr.bf16.mxu0 0
        %1478 = vmatpush1.bf16.msra.mxu0 0
        %1479 = vmatprep.subr.bf16.mxu0 0
        %1480 = vmatpush1.bf16.msra.mxu0 0
        %1481 = vmatprep.subr.bf16.mxu0 0
        %1482 = vmatpush1.bf16.msra.mxu0 0
        %1483 = vmatprep.subr.bf16.mxu0 0
        %1484 = vmatpush1.bf16.msra.mxu0 0
        %1485 = vmatprep.mubr.bf16.mxu0 0
        %1486 = vmatmul.mubr.bf16.gmra.mrb[0].mxu0 %v1451
        %v1487 = vpop.f32.mrb[0].mxu0
        %v1488 = vadd.f32 0.0, %v1487
        %v1489 = vpop.f32.mrb[0].mxu0
        %v1490 = vadd.f32 0.0, %v1489
        %v1491 = vpop.f32.mrb[0].mxu0
        %v1492 = vadd.f32 0.0, %v1491
        %v1493 = vpop.f32.mrb[0].mxu0
        %v1494 = vadd.f32 0.0, %v1493
        %1495 = vdwg.mxu0
        %1498 = vrot.lane.b32.xlu0 %v1488, 96
        %v1499 = vpop.permute.xlu0 %1498
        %1500 = vrot.lane.b32.xlu0 %v1492, 96
        %v1501 = vpop.permute.xlu0 %1500
        %v1504 = vpack.c.bf16 %v1488, %v1488
        %v1505 = vpack.c.bf16 %v1492, %v1492
        %v1506 = vpack.c.bf16 %v1499, %v1499
        %v1507 = vpack.c.bf16 %v1501, %v1501
        %1510 = vrot.lane.b32.xlu0 %v1490, 96
        %v1511 = vpop.permute.xlu0 %1510
        %1512 = vrot.lane.b32.xlu0 %v1494, 96
        %v1513 = vpop.permute.xlu0 %1512
        %v1516 = vpack.c.bf16 %v1490, %v1490
        %v1517 = vpack.c.bf16 %v1494, %v1494
        %v1518 = vpack.c.bf16 %v1511, %v1511
        %v1519 = vpack.c.bf16 %v1513, %v1513
        %v1520 = vld [vmem:[#allocation9] sm:$0xff]
        %1522 = vrot.lane.b32.xlu0 %v1504, 64
        %v1523 = vpop.permute.xlu0 %1522
        %vm1524 = vcmask 261120
        %v1526 = vsel %vm1524, %v1504, 0
        %v1529 = vsel %vm1524, %v1523, 0
        %1531 = vmatprep.subr.bf16.mxu0 0
        %1532 = vmatpush1.bf16.xpose.msra.mxu0 %v1529
        %1533 = vmatprep.subr.bf16.mxu0 0
        %1534 = vmatpush1.bf16.xpose.msra.mxu0 0
        %1535 = vmatprep.subr.bf16.mxu0 0
        %1536 = vmatpush1.bf16.xpose.msra.mxu0 0
        %1537 = vmatprep.subr.bf16.mxu0 0
        %1538 = vmatpush1.bf16.xpose.msra.mxu0 0
        %1539 = vmatprep.subr.bf16.mxu0 0
        %1540 = vmatpush1.bf16.xpose.msra.mxu0 0
        %1541 = vmatprep.subr.bf16.mxu0 0
        %1542 = vmatpush1.bf16.xpose.msra.mxu0 0
        %1543 = vmatprep.subr.bf16.mxu0 0
        %1544 = vmatpush1.bf16.xpose.msra.mxu0 0
        %1545 = vmatprep.subr.bf16.mxu0 0
        %1546 = vmatpush1.bf16.xpose.msra.mxu0 0
        %1547 = vmatprep.subr.bf16.mxu0 0
        %1548 = vmatpush1.bf16.xpose.msra.mxu0 0
        %1549 = vmatprep.subr.bf16.mxu0 0
        %1550 = vmatpush1.bf16.xpose.msra.mxu0 0
        %1551 = vmatprep.subr.bf16.mxu0 0
        %1552 = vmatpush1.bf16.xpose.msra.mxu0 0
        %1553 = vmatprep.subr.bf16.mxu0 0
        %1554 = vmatpush1.bf16.xpose.msra.mxu0 0
        %1555 = vmatprep.subr.bf16.mxu0 0
        %1556 = vmatpush1.bf16.xpose.msra.mxu0 0
        %1557 = vmatprep.subr.bf16.mxu0 0
        %1558 = vmatpush1.bf16.xpose.msra.mxu0 0
        %1559 = vmatprep.subr.bf16.mxu0 0
        %1560 = vmatpush1.bf16.xpose.msra.mxu0 0
        %1561 = vmatprep.subr.bf16.mxu0 0
        %1562 = vmatpush1.bf16.xpose.msra.mxu0 0
        %1563 = vmatprep.mubr.bf16.mxu0 0
        %1564 = vmatmul.mubr.bf16.gmra.mrb[0].mxu0 %v1526
        %v1565 = vpop.f32.mrb[0].mxu0
        %v1566 = vadd.f32 %v1520, %v1565
        %v1567 = vpop.f32.mrb[0].mxu0
        %v1568 = vpop.f32.mrb[0].mxu0
        %v1569 = vpop.f32.mrb[0].mxu0
        %1570 = vdwg.mxu0
        %1572 = vrot.lane.b32.xlu0 %v1505, 64
        %v1573 = vpop.permute.xlu0 %1572
        %v1575 = vsel %vm1524, %v1505, 0
        %v1578 = vsel %vm1524, %v1573, 0
        %1580 = vmatprep.subr.bf16.mxu0 0
        %1581 = vmatpush1.bf16.xpose.msra.mxu0 %v1578
        %1582 = vmatprep.subr.bf16.mxu0 0
        %1583 = vmatpush1.bf16.xpose.msra.mxu0 0
        %1584 = vmatprep.subr.bf16.mxu0 0
        %1585 = vmatpush1.bf16.xpose.msra.mxu0 0
        %1586 = vmatprep.subr.bf16.mxu0 0
        %1587 = vmatpush1.bf16.xpose.msra.mxu0 0
        %1588 = vmatprep.subr.bf16.mxu0 0
        %1589 = vmatpush1.bf16.xpose.msra.mxu0 0
        %1590 = vmatprep.subr.bf16.mxu0 0
        %1591 = vmatpush1.bf16.xpose.msra.mxu0 0
        %1592 = vmatprep.subr.bf16.mxu0 0
        %1593 = vmatpush1.bf16.xpose.msra.mxu0 0
        %1594 = vmatprep.subr.bf16.mxu0 0
        %1595 = vmatpush1.bf16.xpose.msra.mxu0 0
        %1596 = vmatprep.subr.bf16.mxu0 0
        %1597 = vmatpush1.bf16.xpose.msra.mxu0 0
        %1598 = vmatprep.subr.bf16.mxu0 0
        %1599 = vmatpush1.bf16.xpose.msra.mxu0 0
        %1600 = vmatprep.subr.bf16.mxu0 0
        %1601 = vmatpush1.bf16.xpose.msra.mxu0 0
        %1602 = vmatprep.subr.bf16.mxu0 0
        %1603 = vmatpush1.bf16.xpose.msra.mxu0 0
        %1604 = vmatprep.subr.bf16.mxu0 0
        %1605 = vmatpush1.bf16.xpose.msra.mxu0 0
        %1606 = vmatprep.subr.bf16.mxu0 0
        %1607 = vmatpush1.bf16.xpose.msra.mxu0 0
        %1608 = vmatprep.subr.bf16.mxu0 0
        %1609 = vmatpush1.bf16.xpose.msra.mxu0 0
        %1610 = vmatprep.subr.bf16.mxu0 0
        %1611 = vmatpush1.bf16.xpose.msra.mxu0 0
        %1612 = vmatprep.mubr.bf16.mxu0 0
        %1613 = vmatmul.mubr.bf16.gmra.mrb[0].mxu0 %v1575
        %v1614 = vpop.f32.mrb[0].mxu0
        %v1615 = vadd.f32 %v1520, %v1614
        %v1616 = vpop.f32.mrb[0].mxu0
        %v1617 = vpop.f32.mrb[0].mxu0
        %v1618 = vpop.f32.mrb[0].mxu0
        %1619 = vdwg.mxu0
        %1621 = vrot.lane.b32.xlu0 %v1506, 64
        %v1622 = vpop.permute.xlu0 %1621
        %v1624 = vsel %vm1524, %v1506, 0
        %v1627 = vsel %vm1524, %v1622, 0
        %1629 = vmatprep.subr.bf16.mxu0 0
        %1630 = vmatpush1.bf16.xpose.msra.mxu0 %v1627
        %1631 = vmatprep.subr.bf16.mxu0 0
        %1632 = vmatpush1.bf16.xpose.msra.mxu0 0
        %1633 = vmatprep.subr.bf16.mxu0 0
        %1634 = vmatpush1.bf16.xpose.msra.mxu0 0
        %1635 = vmatprep.subr.bf16.mxu0 0
        %1636 = vmatpush1.bf16.xpose.msra.mxu0 0
        %1637 = vmatprep.subr.bf16.mxu0 0
        %1638 = vmatpush1.bf16.xpose.msra.mxu0 0
        %1639 = vmatprep.subr.bf16.mxu0 0
        %1640 = vmatpush1.bf16.xpose.msra.mxu0 0
        %1641 = vmatprep.subr.bf16.mxu0 0
        %1642 = vmatpush1.bf16.xpose.msra.mxu0 0
        %1643 = vmatprep.subr.bf16.mxu0 0
        %1644 = vmatpush1.bf16.xpose.msra.mxu0 0
        %1645 = vmatprep.subr.bf16.mxu0 0
        %1646 = vmatpush1.bf16.xpose.msra.mxu0 0
        %1647 = vmatprep.subr.bf16.mxu0 0
        %1648 = vmatpush1.bf16.xpose.msra.mxu0 0
        %1649 = vmatprep.subr.bf16.mxu0 0
        %1650 = vmatpush1.bf16.xpose.msra.mxu0 0
        %1651 = vmatprep.subr.bf16.mxu0 0
        %1652 = vmatpush1.bf16.xpose.msra.mxu0 0
        %1653 = vmatprep.subr.bf16.mxu0 0
        %1654 = vmatpush1.bf16.xpose.msra.mxu0 0
        %1655 = vmatprep.subr.bf16.mxu0 0
        %1656 = vmatpush1.bf16.xpose.msra.mxu0 0
        %1657 = vmatprep.subr.bf16.mxu0 0
        %1658 = vmatpush1.bf16.xpose.msra.mxu0 0
        %1659 = vmatprep.subr.bf16.mxu0 0
        %1660 = vmatpush1.bf16.xpose.msra.mxu0 0
        %1661 = vmatprep.mubr.bf16.mxu0 0
        %1662 = vmatmul.mubr.bf16.gmra.mrb[0].mxu0 %v1624
        %v1663 = vpop.f32.mrb[0].mxu0
        %v1664 = vadd.f32 %v1520, %v1663
        %v1665 = vpop.f32.mrb[0].mxu0
        %v1666 = vpop.f32.mrb[0].mxu0
        %v1667 = vpop.f32.mrb[0].mxu0
        %1668 = vdwg.mxu0
        %1670 = vrot.lane.b32.xlu0 %v1507, 64
        %v1671 = vpop.permute.xlu0 %1670
        %v1673 = vsel %vm1524, %v1507, 0
        %v1676 = vsel %vm1524, %v1671, 0
        %1678 = vmatprep.subr.bf16.mxu0 0
        %1679 = vmatpush1.bf16.xpose.msra.mxu0 %v1676
        %1680 = vmatprep.subr.bf16.mxu0 0
        %1681 = vmatpush1.bf16.xpose.msra.mxu0 0
        %1682 = vmatprep.subr.bf16.mxu0 0
        %1683 = vmatpush1.bf16.xpose.msra.mxu0 0
        %1684 = vmatprep.subr.bf16.mxu0 0
        %1685 = vmatpush1.bf16.xpose.msra.mxu0 0
        %1686 = vmatprep.subr.bf16.mxu0 0
        %1687 = vmatpush1.bf16.xpose.msra.mxu0 0
        %1688 = vmatprep.subr.bf16.mxu0 0
        %1689 = vmatpush1.bf16.xpose.msra.mxu0 0
        %1690 = vmatprep.subr.bf16.mxu0 0
        %1691 = vmatpush1.bf16.xpose.msra.mxu0 0
        %1692 = vmatprep.subr.bf16.mxu0 0
        %1693 = vmatpush1.bf16.xpose.msra.mxu0 0
        %1694 = vmatprep.subr.bf16.mxu0 0
        %1695 = vmatpush1.bf16.xpose.msra.mxu0 0
        %1696 = vmatprep.subr.bf16.mxu0 0
        %1697 = vmatpush1.bf16.xpose.msra.mxu0 0
        %1698 = vmatprep.subr.bf16.mxu0 0
        %1699 = vmatpush1.bf16.xpose.msra.mxu0 0
        %1700 = vmatprep.subr.bf16.mxu0 0
        %1701 = vmatpush1.bf16.xpose.msra.mxu0 0
        %1702 = vmatprep.subr.bf16.mxu0 0
        %1703 = vmatpush1.bf16.xpose.msra.mxu0 0
        %1704 = vmatprep.subr.bf16.mxu0 0
        %1705 = vmatpush1.bf16.xpose.msra.mxu0 0
        %1706 = vmatprep.subr.bf16.mxu0 0
        %1707 = vmatpush1.bf16.xpose.msra.mxu0 0
        %1708 = vmatprep.subr.bf16.mxu0 0
        %1709 = vmatpush1.bf16.xpose.msra.mxu0 0
        %1710 = vmatprep.mubr.bf16.mxu0 0
        %1711 = vmatmul.mubr.bf16.gmra.mrb[0].mxu0 %v1673
        %v1712 = vpop.f32.mrb[0].mxu0
        %v1713 = vadd.f32 %v1520, %v1712
        %v1714 = vpop.f32.mrb[0].mxu0
        %v1715 = vpop.f32.mrb[0].mxu0
        %v1716 = vpop.f32.mrb[0].mxu0
        %1717 = vdwg.mxu0
        %vm1718 = vcmask 64512
        %v1719 = vsel %vm1718, %v1566, -inf
        %1720 = vmax.xlane.f32.xlu0 %v1719
        %v1721 = vpop.xlane.xlu0 %1720
        %v1722 = vsel %vm1718, %v1615, -inf
        %1723 = vmax.xlane.f32.xlu0 %v1722
        %v1724 = vpop.xlane.xlu0 %1723
        %v1725 = vsel %vm1718, %v1664, -inf
        %1726 = vmax.xlane.f32.xlu0 %v1725
        %v1727 = vpop.xlane.xlu0 %1726
        %v1728 = vsel %vm1718, %v1713, -inf
        %1729 = vmax.xlane.f32.xlu0 %v1728
        %v1730 = vpop.xlane.xlu0 %1729
        %v1731 = vsub.f32 %v1566, %v1721
        %v1732 = vsub.f32 %v1615, %v1724
        %v1733 = vsub.f32 %v1664, %v1727
        %v1734 = vsub.f32 %v1713, %v1730
        %v1735 = vmul.f32 %v1731, 1.442695
        %v1736 = vpow.pop %v1735
        %v1737 = vmul.f32 %v1732, 1.442695
        %v1738 = vpow.pop %v1737
        %v1739 = vmul.f32 %v1733, 1.442695
        %v1740 = vpow.pop %v1739
        %v1741 = vmul.f32 %v1734, 1.442695
        %v1742 = vpow.pop %v1741
        %v1743 = vsel %vm1718, %v1736, 0.0
        %1744 = vadd.xlane.f32.xlu0 %v1743
        %v1745 = vpop.xlane.xlu0 %1744
        %v1746 = vsel %vm1718, %v1738, 0.0
        %1747 = vadd.xlane.f32.xlu0 %v1746
        %v1748 = vpop.xlane.xlu0 %1747
        %v1749 = vsel %vm1718, %v1740, 0.0
        %1750 = vadd.xlane.f32.xlu0 %v1749
        %v1751 = vpop.xlane.xlu0 %1750
        %v1752 = vsel %vm1718, %v1742, 0.0
        %1753 = vadd.xlane.f32.xlu0 %v1752
        %v1754 = vpop.xlane.xlu0 %1753
        %v1755 = vrcp.pop %v1745
        %v1756 = vrcp.pop %v1748
        %v1757 = vrcp.pop %v1751
        %v1758 = vrcp.pop %v1754
        %v1759 = vmul.f32 %v1736, %v1755
        %v1760 = vmul.f32 %v1738, %v1756
        %v1761 = vmul.f32 %v1740, %v1757
        %v1762 = vmul.f32 %v1742, %v1758
        %v1763 = vpack.c.bf16 %v1759, %v1759
        %v1764 = vpack.c.bf16 %v1760, %v1760
        %v1765 = vpack.c.bf16 %v1761, %v1761
        %v1766 = vpack.c.bf16 %v1762, %v1762
        %v1768 = vsel %vm1718, %v1763, 0
        %vm1770 = vcmask 1043456
        %v1772 = vsel %vm1770, %v1516, 0
        %1774 = vmatprep.subr.bf16.mxu0 0
        %1775 = vmatpush1.bf16.msra.mxu0 %v1772
        %1776 = vmatprep.subr.bf16.mxu0 0
        %1777 = vmatpush1.bf16.msra.mxu0 0
        %1778 = vmatprep.subr.bf16.mxu0 0
        %1779 = vmatpush1.bf16.msra.mxu0 0
        %1780 = vmatprep.subr.bf16.mxu0 0
        %1781 = vmatpush1.bf16.msra.mxu0 0
        %1782 = vmatprep.subr.bf16.mxu0 0
        %1783 = vmatpush1.bf16.msra.mxu0 0
        %1784 = vmatprep.subr.bf16.mxu0 0
        %1785 = vmatpush1.bf16.msra.mxu0 0
        %1786 = vmatprep.subr.bf16.mxu0 0
        %1787 = vmatpush1.bf16.msra.mxu0 0
        %1788 = vmatprep.subr.bf16.mxu0 0
        %1789 = vmatpush1.bf16.msra.mxu0 0
        %1790 = vmatprep.subr.bf16.mxu0 0
        %1791 = vmatpush1.bf16.msra.mxu0 0
        %1792 = vmatprep.subr.bf16.mxu0 0
        %1793 = vmatpush1.bf16.msra.mxu0 0
        %1794 = vmatprep.subr.bf16.mxu0 0
        %1795 = vmatpush1.bf16.msra.mxu0 0
        %1796 = vmatprep.subr.bf16.mxu0 0
        %1797 = vmatpush1.bf16.msra.mxu0 0
        %1798 = vmatprep.subr.bf16.mxu0 0
        %1799 = vmatpush1.bf16.msra.mxu0 0
        %1800 = vmatprep.subr.bf16.mxu0 0
        %1801 = vmatpush1.bf16.msra.mxu0 0
        %1802 = vmatprep.subr.bf16.mxu0 0
        %1803 = vmatpush1.bf16.msra.mxu0 0
        %1804 = vmatprep.subr.bf16.mxu0 0
        %1805 = vmatpush1.bf16.msra.mxu0 0
        %1806 = vmatprep.mubr.bf16.mxu0 0
        %1807 = vmatmul.mubr.bf16.gmra.mrb[0].mxu0 %v1768
        %v1808 = vpop.f32.mrb[0].mxu0
        %v1809 = vadd.f32 0.0, %v1808
        %v1810 = vpop.f32.mrb[0].mxu0
        %v1811 = vpop.f32.mrb[0].mxu0
        %v1812 = vpop.f32.mrb[0].mxu0
        %1813 = vdwg.mxu0
        %v1815 = vsel %vm1718, %v1764, 0
        %v1818 = vsel %vm1770, %v1517, 0
        %1820 = vmatprep.subr.bf16.mxu0 0
        %1821 = vmatpush1.bf16.msra.mxu0 %v1818
        %1822 = vmatprep.subr.bf16.mxu0 0
        %1823 = vmatpush1.bf16.msra.mxu0 0
        %1824 = vmatprep.subr.bf16.mxu0 0
        %1825 = vmatpush1.bf16.msra.mxu0 0
        %1826 = vmatprep.subr.bf16.mxu0 0
        %1827 = vmatpush1.bf16.msra.mxu0 0
        %1828 = vmatprep.subr.bf16.mxu0 0
        %1829 = vmatpush1.bf16.msra.mxu0 0
        %1830 = vmatprep.subr.bf16.mxu0 0
        %1831 = vmatpush1.bf16.msra.mxu0 0
        %1832 = vmatprep.subr.bf16.mxu0 0
        %1833 = vmatpush1.bf16.msra.mxu0 0
        %1834 = vmatprep.subr.bf16.mxu0 0
        %1835 = vmatpush1.bf16.msra.mxu0 0
        %1836 = vmatprep.subr.bf16.mxu0 0
        %1837 = vmatpush1.bf16.msra.mxu0 0
        %1838 = vmatprep.subr.bf16.mxu0 0
        %1839 = vmatpush1.bf16.msra.mxu0 0
        %1840 = vmatprep.subr.bf16.mxu0 0
        %1841 = vmatpush1.bf16.msra.mxu0 0
        %1842 = vmatprep.subr.bf16.mxu0 0
        %1843 = vmatpush1.bf16.msra.mxu0 0
        %1844 = vmatprep.subr.bf16.mxu0 0
        %1845 = vmatpush1.bf16.msra.mxu0 0
        %1846 = vmatprep.subr.bf16.mxu0 0
        %1847 = vmatpush1.bf16.msra.mxu0 0
        %1848 = vmatprep.subr.bf16.mxu0 0
        %1849 = vmatpush1.bf16.msra.mxu0 0
        %1850 = vmatprep.subr.bf16.mxu0 0
        %1851 = vmatpush1.bf16.msra.mxu0 0
        %1852 = vmatprep.mubr.bf16.mxu0 0
        %1853 = vmatmul.mubr.bf16.gmra.mrb[0].mxu0 %v1815
        %v1854 = vpop.f32.mrb[0].mxu0
        %v1855 = vadd.f32 0.0, %v1854
        %v1856 = vpop.f32.mrb[0].mxu0
        %v1857 = vpop.f32.mrb[0].mxu0
        %v1858 = vpop.f32.mrb[0].mxu0
        %1859 = vdwg.mxu0
        %v1861 = vsel %vm1718, %v1765, 0
        %v1864 = vsel %vm1770, %v1518, 0
        %1866 = vmatprep.subr.bf16.mxu0 0
        %1867 = vmatpush1.bf16.msra.mxu0 %v1864
        %1868 = vmatprep.subr.bf16.mxu0 0
        %1869 = vmatpush1.bf16.msra.mxu0 0
        %1870 = vmatprep.subr.bf16.mxu0 0
        %1871 = vmatpush1.bf16.msra.mxu0 0
        %1872 = vmatprep.subr.bf16.mxu0 0
        %1873 = vmatpush1.bf16.msra.mxu0 0
        %1874 = vmatprep.subr.bf16.mxu0 0
        %1875 = vmatpush1.bf16.msra.mxu0 0
        %1876 = vmatprep.subr.bf16.mxu0 0
        %1877 = vmatpush1.bf16.msra.mxu0 0
        %1878 = vmatprep.subr.bf16.mxu0 0
        %1879 = vmatpush1.bf16.msra.mxu0 0
        %1880 = vmatprep.subr.bf16.mxu0 0
        %1881 = vmatpush1.bf16.msra.mxu0 0
        %1882 = vmatprep.subr.bf16.mxu0 0
        %1883 = vmatpush1.bf16.msra.mxu0 0
        %1884 = vmatprep.subr.bf16.mxu0 0
        %1885 = vmatpush1.bf16.msra.mxu0 0
        %1886 = vmatprep.subr.bf16.mxu0 0
        %1887 = vmatpush1.bf16.msra.mxu0 0
        %1888 = vmatprep.subr.bf16.mxu0 0
        %1889 = vmatpush1.bf16.msra.mxu0 0
        %1890 = vmatprep.subr.bf16.mxu0 0
        %1891 = vmatpush1.bf16.msra.mxu0 0
        %1892 = vmatprep.subr.bf16.mxu0 0
        %1893 = vmatpush1.bf16.msra.mxu0 0
        %1894 = vmatprep.subr.bf16.mxu0 0
        %1895 = vmatpush1.bf16.msra.mxu0 0
        %1896 = vmatprep.subr.bf16.mxu0 0
        %1897 = vmatpush1.bf16.msra.mxu0 0
        %1898 = vmatprep.mubr.bf16.mxu0 0
        %1899 = vmatmul.mubr.bf16.gmra.mrb[0].mxu0 %v1861
        %v1900 = vpop.f32.mrb[0].mxu0
        %v1901 = vadd.f32 0.0, %v1900
        %v1902 = vpop.f32.mrb[0].mxu0
        %v1903 = vpop.f32.mrb[0].mxu0
        %v1904 = vpop.f32.mrb[0].mxu0
        %1905 = vdwg.mxu0
        %v1907 = vsel %vm1718, %v1766, 0
        %v1910 = vsel %vm1770, %v1519, 0
        %1912 = vmatprep.subr.bf16.mxu0 0
        %1913 = vmatpush1.bf16.msra.mxu0 %v1910
        %1914 = vmatprep.subr.bf16.mxu0 0
        %1915 = vmatpush1.bf16.msra.mxu0 0
        %1916 = vmatprep.subr.bf16.mxu0 0
        %1917 = vmatpush1.bf16.msra.mxu0 0
        %1918 = vmatprep.subr.bf16.mxu0 0
        %1919 = vmatpush1.bf16.msra.mxu0 0
        %1920 = vmatprep.subr.bf16.mxu0 0
        %1921 = vmatpush1.bf16.msra.mxu0 0
        %1922 = vmatprep.subr.bf16.mxu0 0
        %1923 = vmatpush1.bf16.msra.mxu0 0
        %1924 = vmatprep.subr.bf16.mxu0 0
        %1925 = vmatpush1.bf16.msra.mxu0 0
        %1926 = vmatprep.subr.bf16.mxu0 0
        %1927 = vmatpush1.bf16.msra.mxu0 0
        %1928 = vmatprep.subr.bf16.mxu0 0
        %1929 = vmatpush1.bf16.msra.mxu0 0
        %1930 = vmatprep.subr.bf16.mxu0 0
        %1931 = vmatpush1.bf16.msra.mxu0 0
        %1932 = vmatprep.subr.bf16.mxu0 0
        %1933 = vmatpush1.bf16.msra.mxu0 0
        %1934 = vmatprep.subr.bf16.mxu0 0
        %1935 = vmatpush1.bf16.msra.mxu0 0
        %1936 = vmatprep.subr.bf16.mxu0 0
        %1937 = vmatpush1.bf16.msra.mxu0 0
        %1938 = vmatprep.subr.bf16.mxu0 0
        %1939 = vmatpush1.bf16.msra.mxu0 0
        %1940 = vmatprep.subr.bf16.mxu0 0
        %1941 = vmatpush1.bf16.msra.mxu0 0
        %1942 = vmatprep.subr.bf16.mxu0 0
        %1943 = vmatpush1.bf16.msra.mxu0 0
        %1944 = vmatprep.mubr.bf16.mxu0 0
        %1945 = vmatmul.mubr.bf16.gmra.mrb[0].mxu0 %v1907
        %v1946 = vpop.f32.mrb[0].mxu0
        %v1947 = vadd.f32 0.0, %v1946
        %v1948 = vpop.f32.mrb[0].mxu0
        %v1949 = vpop.f32.mrb[0].mxu0
        %v1950 = vpop.f32.mrb[0].mxu0
        %1951 = vdwg.mxu0
        %v1952 = vpack.c.bf16 %v1855, %v1809
        %1953 = vst.msk [vmem:[#allocation3] sm:$0xff] %vm1524, %v1952
        %v1954 = vpack.c.bf16 %v1947, %v1901
        %1956 = vrot.lane.b32.xlu0 %v1954, 32
        %v1957 = vpop.permute.xlu0 %1956
        %vm1959 = vcmask 523520
        %1960 = vst.msk [vmem:[#allocation3] sm:$0xff] %vm1959, %v1957
        %v1961 = vld [vmem:[#allocation3] sm:$0xff]
        %v1962 = vld [vmem:[%s1030] sm:$0xf]
        %v1963 = vld [vmem:[%s1030 + $0x4] sm:$0xf]
        %v1964 = vld [vmem:[%s1030 + $0x8] sm:$0xf]
        %v1965 = vld [vmem:[%s1030 + $0xc] sm:$0xf]
        %v1966 = vld [vmem:[%s1030 + $0x10] sm:$0xf]
        %v1967 = vld [vmem:[%s1030 + $0x14] sm:$0xf]
        %v1968 = vld [vmem:[%s1030 + $0x18] sm:$0xf]
        %v1969 = vld [vmem:[%s1030 + $0x1c] sm:$0xf]
        %v1978 = vunpack.c.l.b16 %v1962
        %v1979 = vunpack.c.l.b16 %v1963
        %v1980 = vunpack.c.l.b16 %v1964
        %v1981 = vunpack.c.l.b16 %v1965
        %v1982 = vunpack.c.l.b16 %v1966
        %v1983 = vunpack.c.l.b16 %v1967
        %v1984 = vunpack.c.l.b16 %v1968
        %v1985 = vunpack.c.l.b16 %v1969
        %v1986 = vpack.c.b16 %v1979, %v1978
        %v1987 = vpack.c.b16 %v1981, %v1980
        %v1988 = vpack.c.b16 %v1983, %v1982
        %v1989 = vpack.c.b16 %v1985, %v1984
        %v1995 = vsel %vm1449, %v1961, 0
        %1997 = vmatprep.subr.bf16.mxu0 0
        %1998 = vmatpush1.bf16.msra.mxu0 %v1986
        %1999 = vmatprep.subr.bf16.mxu0 0
        %2000 = vmatpush1.bf16.msra.mxu0 %v1987
        %2001 = vmatprep.subr.bf16.mxu0 0
        %2002 = vmatpush1.bf16.msra.mxu0 %v1988
        %2003 = vmatprep.subr.bf16.mxu0 0
        %2004 = vmatpush1.bf16.msra.mxu0 %v1989
        %2005 = vmatprep.subr.bf16.mxu0 0
        %2006 = vmatpush1.bf16.msra.mxu0 0
        %2007 = vmatprep.subr.bf16.mxu0 0
        %2008 = vmatpush1.bf16.msra.mxu0 0
        %2009 = vmatprep.subr.bf16.mxu0 0
        %2010 = vmatpush1.bf16.msra.mxu0 0
        %2011 = vmatprep.subr.bf16.mxu0 0
        %2012 = vmatpush1.bf16.msra.mxu0 0
        %2013 = vmatprep.subr.bf16.mxu0 0
        %2014 = vmatpush1.bf16.msra.mxu0 0
        %2015 = vmatprep.subr.bf16.mxu0 0
        %2016 = vmatpush1.bf16.msra.mxu0 0
        %2017 = vmatprep.subr.bf16.mxu0 0
        %2018 = vmatpush1.bf16.msra.mxu0 0
        %2019 = vmatprep.subr.bf16.mxu0 0
        %2020 = vmatpush1.bf16.msra.mxu0 0
        %2021 = vmatprep.subr.bf16.mxu0 0
        %2022 = vmatpush1.bf16.msra.mxu0 0
        %2023 = vmatprep.subr.bf16.mxu0 0
        %2024 = vmatpush1.bf16.msra.mxu0 0
        %2025 = vmatprep.subr.bf16.mxu0 0
        %2026 = vmatpush1.bf16.msra.mxu0 0
        %2027 = vmatprep.subr.bf16.mxu0 0
        %2028 = vmatpush1.bf16.msra.mxu0 0
        %2029 = vmatprep.mubr.bf16.mxu0 0
        %2030 = vmatmul.mubr.bf16.gmra.mrb[0].mxu0 %v1995
        %v2031 = vpop.f32.mrb[0].mxu0
        %v2032 = vadd.f32 %v1398, %v2031
        %v2033 = vpop.f32.mrb[0].mxu0
        %v2034 = vpop.f32.mrb[0].mxu0
        %v2035 = vadd.f32 %v1399, %v2034
        %v2036 = vpop.f32.mrb[0].mxu0
        %2037 = vdwg.mxu0
        %v2038 = vld [vmem:[%s1033] sm:$0x1]
        %v2039 = vld [vmem:[%s1036] sm:$0x1]
        %v2040 = vsel %vm1449, %v2032, 0.0
        %2041 = vadd.xlane.f32.xlu0 %v2040
        %v2042 = vpop.xlane.xlu0 %2041
        %v2043 = vsel %vm1449, %v2035, 0.0
        %2044 = vadd.xlane.f32.xlu0 %v2043
        %v2045 = vpop.xlane.xlu0 %2044
        %v2046 = vrcp.pop 64.0
        %v2047 = vmul.f32 %v2042, %v2046
        %v2048 = vmul.f32 %v2045, %v2046
        %v2049 = vsub.f32 %v2032, %v2047
        %v2050 = vsub.f32 %v2035, %v2048
        %v2051 = vmul.f32 %v2049, %v2049
        %v2052 = vmul.f32 %v2050, %v2050
        %v2053 = vsel %vm1449, %v2051, 0.0
        %2054 = vadd.xlane.f32.xlu0 %v2053
        %v2055 = vpop.xlane.xlu0 %2054
        %v2056 = vsel %vm1449, %v2052, 0.0
        %2057 = vadd.xlane.f32.xlu0 %v2056
        %v2058 = vpop.xlane.xlu0 %2057
        %v2059 = vmul.f32 %v2055, %v2046
        %v2060 = vmul.f32 %v2058, %v2046
        %v2061 = vadd.f32 %v2059, 1e-06
        %v2062 = vadd.f32 %v2060, 1e-06
        %v2063 = vrsqrt.pop %v2061
        %v2064 = vrsqrt.pop %v2062
        %v2065 = vmul.f32 %v2049, %v2063
        %v2066 = vmul.f32 %v2050, %v2064
        %v2068 = vlaneseq
        %v2069 = vshrl.u32 %v2068, 7
        %v2070 = vsub.s32 0, %v2069
        %v2071 = vrot.slane %v2038, %v2070
        %v2073 = vmul.f32 %v2065, %v2071
        %v2074 = vmul.f32 %v2066, %v2071
        %v2076 = vlaneseq
        %v2077 = vshrl.u32 %v2076, 7
        %v2078 = vsub.s32 0, %v2077
        %v2079 = vrot.slane %v2039, %v2078
        %v2081 = vadd.f32 %v2073, %v2079
        %v2082 = vadd.f32 %v2074, %v2079
        %v2083 = vpack.c.bf16 %v2082, %v2081
        %v2084 = vld [vmem:[%s928] sm:$0xf]
        %v2085 = vld [vmem:[%s928 + $0x4] sm:$0xf]
        %v2086 = vld [vmem:[%s928 + $0x8] sm:$0xf]
        %v2087 = vld [vmem:[%s928 + $0xc] sm:$0xf]
        %v2088 = vld [vmem:[%s928 + $0x10] sm:$0xf]
        %v2089 = vld [vmem:[%s928 + $0x14] sm:$0xf]
        %v2090 = vld [vmem:[%s928 + $0x18] sm:$0xf]
        %v2091 = vld [vmem:[%s928 + $0x1c] sm:$0xf]
        %v2092 = vld [vmem:[%s1039] sm:$0x1]
        %v2094 = vlaneseq
        %v2095 = vshrl.u32 %v2094, 7
        %v2096 = vsub.s32 0, %v2095
        %v2097 = vrot.slane %v2092, %v2096
        %v2107 = vunpack.c.l.b16 %v2084
        %v2108 = vunpack.c.l.b16 %v2085
        %v2109 = vunpack.c.l.b16 %v2086
        %v2110 = vunpack.c.l.b16 %v2087
        %v2111 = vunpack.c.l.b16 %v2088
        %v2112 = vunpack.c.l.b16 %v2089
        %v2113 = vunpack.c.l.b16 %v2090
        %v2114 = vunpack.c.l.b16 %v2091
        %v2115 = vpack.c.b16 %v2108, %v2107
        %v2116 = vpack.c.b16 %v2110, %v2109
        %v2117 = vpack.c.b16 %v2112, %v2111
        %v2118 = vpack.c.b16 %v2114, %v2113
        %v2124 = vsel %vm1449, %v2083, 0
        %2126 = vmatprep.subr.bf16.mxu0 0
        %2127 = vmatpush1.bf16.msra.mxu0 %v2115
        %2128 = vmatprep.subr.bf16.mxu0 0
        %2129 = vmatpush1.bf16.msra.mxu0 %v2116
        %2130 = vmatprep.subr.bf16.mxu0 0
        %2131 = vmatpush1.bf16.msra.mxu0 %v2117
        %2132 = vmatprep.subr.bf16.mxu0 0
        %2133 = vmatpush1.bf16.msra.mxu0 %v2118
        %2134 = vmatprep.subr.bf16.mxu0 0
        %2135 = vmatpush1.bf16.msra.mxu0 0
        %2136 = vmatprep.subr.bf16.mxu0 0
        %2137 = vmatpush1.bf16.msra.mxu0 0
        %2138 = vmatprep.subr.bf16.mxu0 0
        %2139 = vmatpush1.bf16.msra.mxu0 0
        %2140 = vmatprep.subr.bf16.mxu0 0
        %2141 = vmatpush1.bf16.msra.mxu0 0
        %2142 = vmatprep.subr.bf16.mxu0 0
        %2143 = vmatpush1.bf16.msra.mxu0 0
        %2144 = vmatprep.subr.bf16.mxu0 0
        %2145 = vmatpush1.bf16.msra.mxu0 0
        %2146 = vmatprep.subr.bf16.mxu0 0
        %2147 = vmatpush1.bf16.msra.mxu0 0
        %2148 = vmatprep.subr.bf16.mxu0 0
        %2149 = vmatpush1.bf16.msra.mxu0 0
        %2150 = vmatprep.subr.bf16.mxu0 0
        %2151 = vmatpush1.bf16.msra.mxu0 0
        %2152 = vmatprep.subr.bf16.mxu0 0
        %2153 = vmatpush1.bf16.msra.mxu0 0
        %2154 = vmatprep.subr.bf16.mxu0 0
        %2155 = vmatpush1.bf16.msra.mxu0 0
        %2156 = vmatprep.subr.bf16.mxu0 0
        %2157 = vmatpush1.bf16.msra.mxu0 0
        %2158 = vmatprep.mubr.bf16.mxu0 0
        %2159 = vmatmul.mubr.bf16.gmra.mrb[0].mxu0 %v2124
        %v2160 = vpop.f32.mrb[0].mxu0
        %v2161 = vadd.f32 %v2097, %v2160
        %v2162 = vpop.f32.mrb[0].mxu0
        %v2163 = vpop.f32.mrb[0].mxu0
        %v2164 = vadd.f32 %v2097, %v2163
        %v2165 = vpop.f32.mrb[0].mxu0
        %2166 = vdwg.mxu0
        %v2167 = vmax.f32 %v2161, 0.0
        %v2168 = vmax.f32 %v2164, 0.0
        %v2169 = vpack.c.bf16 %v2168, %v2167
        %v2170 = vld [vmem:[%s1044] sm:$0xf]
        %v2171 = vld [vmem:[%s1044 + $0x4] sm:$0xf]
        %v2172 = vld [vmem:[%s1044 + $0x8] sm:$0xf]
        %v2173 = vld [vmem:[%s1044 + $0xc] sm:$0xf]
        %v2174 = vld [vmem:[%s1044 + $0x10] sm:$0xf]
        %v2175 = vld [vmem:[%s1044 + $0x14] sm:$0xf]
        %v2176 = vld [vmem:[%s1044 + $0x18] sm:$0xf]
        %v2177 = vld [vmem:[%s1044 + $0x1c] sm:$0xf]
        %v2178 = vld [vmem:[%s1044 + $0x20] sm:$0xf]
        %v2179 = vld [vmem:[%s1044 + $0x24] sm:$0xf]
        %v2180 = vld [vmem:[%s1044 + $0x28] sm:$0xf]
        %v2181 = vld [vmem:[%s1044 + $0x2c] sm:$0xf]
        %v2182 = vld [vmem:[%s1044 + $0x30] sm:$0xf]
        %v2183 = vld [vmem:[%s1044 + $0x34] sm:$0xf]
        %v2184 = vld [vmem:[%s1044 + $0x38] sm:$0xf]
        %v2185 = vld [vmem:[%s1044 + $0x3c] sm:$0xf]
        %v2186 = vld [vmem:[%s1047] sm:$0x1]
        %v2188 = vlaneseq
        %v2189 = vshrl.u32 %v2188, 7
        %v2190 = vsub.s32 0, %v2189
        %v2191 = vrot.slane %v2186, %v2190
        %v2209 = vunpack.c.l.b16 %v2170
        %v2210 = vunpack.c.l.b16 %v2171
        %v2211 = vunpack.c.l.b16 %v2172
        %v2212 = vunpack.c.l.b16 %v2173
        %v2213 = vunpack.c.l.b16 %v2174
        %v2214 = vunpack.c.l.b16 %v2175
        %v2215 = vunpack.c.l.b16 %v2176
        %v2216 = vunpack.c.l.b16 %v2177
        %v2217 = vunpack.c.l.b16 %v2178
        %v2218 = vunpack.c.l.b16 %v2179
        %v2219 = vunpack.c.l.b16 %v2180
        %v2220 = vunpack.c.l.b16 %v2181
        %v2221 = vunpack.c.l.b16 %v2182
        %v2222 = vunpack.c.l.b16 %v2183
        %v2223 = vunpack.c.l.b16 %v2184
        %v2224 = vunpack.c.l.b16 %v2185
        %v2225 = vpack.c.b16 %v2210, %v2209
        %v2226 = vpack.c.b16 %v2212, %v2211
        %v2227 = vpack.c.b16 %v2214, %v2213
        %v2228 = vpack.c.b16 %v2216, %v2215
        %v2229 = vpack.c.b16 %v2218, %v2217
        %v2230 = vpack.c.b16 %v2220, %v2219
        %v2231 = vpack.c.b16 %v2222, %v2221
        %v2232 = vpack.c.b16 %v2224, %v2223
        %2241 = vmatprep.subr.bf16.mxu0 0
        %2242 = vmatpush1.bf16.msra.mxu0 %v2225
        %2243 = vmatprep.subr.bf16.mxu0 0
        %2244 = vmatpush1.bf16.msra.mxu0 %v2226
        %2245 = vmatprep.subr.bf16.mxu0 0
        %2246 = vmatpush1.bf16.msra.mxu0 %v2227
        %2247 = vmatprep.subr.bf16.mxu0 0
        %2248 = vmatpush1.bf16.msra.mxu0 %v2228
        %2249 = vmatprep.subr.bf16.mxu0 0
        %2250 = vmatpush1.bf16.msra.mxu0 %v2229
        %2251 = vmatprep.subr.bf16.mxu0 0
        %2252 = vmatpush1.bf16.msra.mxu0 %v2230
        %2253 = vmatprep.subr.bf16.mxu0 0
        %2254 = vmatpush1.bf16.msra.mxu0 %v2231
        %2255 = vmatprep.subr.bf16.mxu0 0
        %2256 = vmatpush1.bf16.msra.mxu0 %v2232
        %2257 = vmatprep.subr.bf16.mxu0 0
        %2258 = vmatpush1.bf16.msra.mxu0 0
        %2259 = vmatprep.subr.bf16.mxu0 0
        %2260 = vmatpush1.bf16.msra.mxu0 0
        %2261 = vmatprep.subr.bf16.mxu0 0
        %2262 = vmatpush1.bf16.msra.mxu0 0
        %2263 = vmatprep.subr.bf16.mxu0 0
        %2264 = vmatpush1.bf16.msra.mxu0 0
        %2265 = vmatprep.subr.bf16.mxu0 0
        %2266 = vmatpush1.bf16.msra.mxu0 0
        %2267 = vmatprep.subr.bf16.mxu0 0
        %2268 = vmatpush1.bf16.msra.mxu0 0
        %2269 = vmatprep.subr.bf16.mxu0 0
        %2270 = vmatpush1.bf16.msra.mxu0 0
        %2271 = vmatprep.subr.bf16.mxu0 0
        %2272 = vmatpush1.bf16.msra.mxu0 0
        %2273 = vmatprep.mubr.bf16.mxu0 0
        %2274 = vmatmul.mubr.bf16.gmra.mrb[0].mxu0 %v2169
        %v2275 = vpop.f32.mrb[0].mxu0
        %v2276 = vadd.f32 %v2191, %v2275
        %v2277 = vpop.f32.mrb[0].mxu0
        %v2278 = vpop.f32.mrb[0].mxu0
        %v2279 = vadd.f32 %v2191, %v2278
        %v2280 = vpop.f32.mrb[0].mxu0
        %2281 = vdwg.mxu0
        %v2282 = vadd.f32 %v2276, %v2081
        %v2283 = vadd.f32 %v2279, %v2082
        %v2284 = vld [vmem:[%s1050] sm:$0x1]
        %v2285 = vld [vmem:[%s1053] sm:$0x1]
        %v2286 = vsel %vm1449, %v2282, 0.0
        %2287 = vadd.xlane.f32.xlu0 %v2286
        %v2288 = vpop.xlane.xlu0 %2287
        %v2289 = vsel %vm1449, %v2283, 0.0
        %2290 = vadd.xlane.f32.xlu0 %v2289
        %v2291 = vpop.xlane.xlu0 %2290
        %v2292 = vmul.f32 %v2288, %v2046
        %v2293 = vmul.f32 %v2291, %v2046
        %v2294 = vsub.f32 %v2282, %v2292
        %v2295 = vsub.f32 %v2283, %v2293
        %v2296 = vmul.f32 %v2294, %v2294
        %v2297 = vmul.f32 %v2295, %v2295
        %v2298 = vsel %vm1449, %v2296, 0.0
        %2299 = vadd.xlane.f32.xlu0 %v2298
        %v2300 = vpop.xlane.xlu0 %2299
        %v2301 = vsel %vm1449, %v2297, 0.0
        %2302 = vadd.xlane.f32.xlu0 %v2301
        %v2303 = vpop.xlane.xlu0 %2302
        %v2304 = vmul.f32 %v2300, %v2046
        %v2305 = vmul.f32 %v2303, %v2046
        %v2306 = vadd.f32 %v2304, 1e-06
        %v2307 = vadd.f32 %v2305, 1e-06
        %v2308 = vrsqrt.pop %v2306
        %v2309 = vrsqrt.pop %v2307
        %v2310 = vmul.f32 %v2294, %v2308
        %v2311 = vmul.f32 %v2295, %v2309
        %v2313 = vlaneseq
        %v2314 = vshrl.u32 %v2313, 7
        %v2315 = vsub.s32 0, %v2314
        %v2316 = vrot.slane %v2284, %v2315
        %v2318 = vmul.f32 %v2310, %v2316
        %v2319 = vmul.f32 %v2311, %v2316
        %v2321 = vlaneseq
        %v2322 = vshrl.u32 %v2321, 7
        %v2323 = vsub.s32 0, %v2322
        %v2324 = vrot.slane %v2285, %v2323
        %v2326 = vadd.f32 %v2318, %v2324
        %v2327 = vadd.f32 %v2319, %v2324
        %2328 = vst.msk [vmem:[#allocation2] sm:$0xff] %vm1449, %v2326
        %2329 = vst.msk [vmem:[#allocation2 + $0x8] sm:$0xff] %vm1449, %v2327
        %p2330 = scmp.eq.s32.totalorder %s47, 1
        // Predicated region
        $region169: #{tpu_custom_call.1} parent=111 // pred_check
          %p2331 = pneg %p2330
        $region170: #{tpu_custom_call.1} parent=111 // pred_check_branch
          %2333 = sbr.rel (%p2331) target = $region172
        $region171: #{tpu_custom_call.1} parent=111 // pred_region
          %2334 = vst.msk [vmem:[#allocation25] sm:$0xff] %vm1449, %v2326
          %2335 = vst.msk [vmem:[#allocation25 + $0x8] sm:$0xff] %vm1449, %v2327
        $region172: #{tpu_custom_call.1} parent=111 // pred_fallthru
          _
        // Predicated region
        $region173: #{tpu_custom_call.1} parent=111 // pred_check
          %p2336 = pneg %p615
        $region174: #{tpu_custom_call.1} parent=111 // pred_check_branch
          %2338 = sbr.rel (%p2336) target = $region176
        $region175: #{tpu_custom_call.1} parent=111 // pred_region
          %s2339 = smul.u32 2, %s46
          %s2341 = ssub.s32 256, 256
          %2342 = vsyncadd [#allocation6], %s2341
          %s2343 = smul.addr %s2339, 128
          %s2344 = scalar_lea.hbm %s23, %s2343
          %s2345 = sshll.u32 [#allocation25], 4
          %s2346 = int_to_ptr.vmem [resolvable:$true] %s2345
          %2351 = dma.vmem_to_hbm [thread:$0]  %s2346, 256, %s2344, [#allocation6], 128, 128, 8
        $region176: #{tpu_custom_call.1} parent=111 // pred_fallthru
          _
        // Predicated region
        $region177: #{tpu_custom_call.1} parent=111 // pred_check
          %p2352 = pneg %p615
        $region178: #{tpu_custom_call.1} parent=111 // pred_check_branch
          %2354 = sbr.rel (%p2352) target = $region180
        $region179: #{tpu_custom_call.1} parent=111 // pred_region
          %2355 = dma.done [#allocation6], 256
        $region180: #{tpu_custom_call.1} parent=111 // pred_fallthru
          _
      $region112: #{tpu_custom_call.1} parent=5 // pred_fallthru
        _
      %p2356 = scmp.le.s32.totalorder 2, %s37
      // Predicated region
      $region181: #{tpu_custom_call.1} parent=5 // pred_check
        %p2357 = pneg %p2356
      $region182: #{tpu_custom_call.1} parent=5 // pred_check_branch
        %2359 = sbr.rel (%p2357) target = $region184
      $region183: #{tpu_custom_call.1} parent=5 // pred_region
        %s2360 = ssub.s32 %s37, 2
      $region184: #{tpu_custom_call.1} parent=5 // pred_fallthru
        _
    $region6: #{tpu_custom_call.1} parent=1 // loop_footer
      %s41 = sadd.s32 1, %s37
    $region7: #{tpu_custom_call.1} parent=1 // loop_footer_branch
      %36 = sbr.rel target = $region3
    $region8: #{tpu_custom_call.1} parent=1 // loop_exit
      _
    %2361 = vsyncpa [#allocation5], 1
    %s2362 = scalar_lea.sflag [#allocation5], 1
    %2363 = vsyncpa %s2362, 1
    %2364 = vsyncpa [#allocation8], 1
    %2365 = vsyncpa [#allocation11], 1
    %2366 = vsyncpa [#allocation14], 1
    %2367 = vsyncpa [#allocation17], 1
    %2368 = vsyncpa [#allocation20], 1
    %2369 = vsyncpa [#allocation23], 1
    %2370 = vsyncpa [#allocation6], 1
    %s2371 = scalar_lea.sflag [#allocation6], 1
    %2372 = vsyncpa %s2371, 1

</llo_original>
